<compile_context>
chip_gen: v6e
topology: v6e:2x2x1
jax: 0.10.0
libtpu: 0.0.40
codegen_flags: <defaults>
</compile_context>

<pallas_src>
import jax
import jax.numpy as jnp
from jax.experimental import pallas as pl
from jax.experimental.pallas import tpu as pltpu

# ----------------------------- config (small) ------------------------------
HIDDEN = 32           # config.hidden_size
HEADS = 4
HEAD_DIM = HIDDEN // HEADS
INTERMEDIATE = 64
NUM_LAYERS = 2        # config.num_hidden_layers
IMAGE = 16            # config.image_size
PATCH = 8             # patch size (kernel == stride, 'valid' padding)
CHANNELS = 3          # config.num_channels
NUM_PATCHES = (IMAGE // PATCH) ** 2          # 4
PATCH_DIM = CHANNELS * PATCH * PATCH         # 192
EPS = 1e-6            # config.layer_norm_eps


# ----------------------------- kernel helpers ------------------------------
def _layer_norm(x, gamma, beta, eps=EPS):
    mean = jnp.mean(x, axis=-1, keepdims=True)
    var = jnp.mean((x - mean) ** 2, axis=-1, keepdims=True)
    return (x - mean) * jax.lax.rsqrt(var + eps) * gamma + beta


# --------------------------- fused forward kernel ---------------------------
def _fused_vit_kernel(patches_ref, pw_ref, pb_ref, pos_ref,
                      ln1_g_ref, ln1_b_ref, wqkv_ref, bqkv_ref, wo_ref, bo_ref,
                      ln2_g_ref, ln2_b_ref, w1_ref, b1_ref, w2_ref, b2_ref,
                      post_g_ref, post_b_ref, out_ref):
    f32 = jnp.float32
    D, HD, H = HIDDEN, HEAD_DIM, HEADS

    # ---- patch embedding (one image per grid step) ----
    x = jnp.dot(patches_ref[0], pw_ref[...], preferred_element_type=f32)
    x = x + pb_ref[...] + pos_ref[...]                          # (N, D)

    # ---- encoder layers (static unroll over stacked layer weights) ----
    for l in range(NUM_LAYERS):
        # --- attention ---
        h = _layer_norm(x, ln1_g_ref[l], ln1_b_ref[l])
        # fused QKV: one wide MXU matmul; scale already folded into q columns
        qkv = jnp.dot(h, wqkv_ref[l], preferred_element_type=f32) + bqkv_ref[l]  # (N, 3D)
        qh = jnp.stack([qkv[:, i * HD:(i + 1) * HD] for i in range(H)])          # (H,N,hd)
        kh = jnp.stack([qkv[:, D + i * HD:D + (i + 1) * HD] for i in range(H)])
        vh = jnp.stack([qkv[:, 2 * D + i * HD:2 * D + (i + 1) * HD] for i in range(H)])

        s = jnp.einsum("hqe,hke->hqk", qh, kh, preferred_element_type=f32)  # (H,N,N)
        s = s - jnp.max(s, axis=-1, keepdims=True)
        p = jnp.exp(s)
        p = p * pl.reciprocal(jnp.sum(p, axis=-1, keepdims=True), approx=True)
        ctx = jnp.einsum("hqk,hke->hqe", p, vh, preferred_element_type=f32)  # (H,N,hd)

        # merge heads (lane concat) and single full (D, D) output projection
        ctx = jnp.concatenate([ctx[i] for i in range(H)], axis=-1)           # (N, D)
        attn = jnp.dot(ctx, wo_ref[l], preferred_element_type=f32) + bo_ref[l]
        x = x + attn                                                         # residual 1

        # --- MLP ---
        h2 = _layer_norm(x, ln2_g_ref[l], ln2_b_ref[l])
        ff = jnp.dot(h2, w1_ref[l], preferred_element_type=f32) + b1_ref[l]
        ff = jax.nn.gelu(ff, approximate=True)          # gelu_pytorch_tanh
        ff = jnp.dot(ff, w2_ref[l], preferred_element_type=f32) + b2_ref[l]
        x = x + ff                                                           # residual 2

    # ---- post layernorm ----
    out_ref[0] = _layer_norm(x, post_g_ref[...], post_b_ref[...])


# ------------------------------- glue (JAX) ---------------------------------
def extract_patches(pixel_values, patch):
    # NCHW -> (B, num_patches, C*patch*patch), flatten order (C, kh, kw)
    # matching PyTorch Conv2d weight layout (out, in, kh, kw).
    B, C, H, W = pixel_values.shape
    hp, wp = H // patch, W // patch
    x = pixel_values.reshape(B, C, hp, patch, wp, patch)
    x = jnp.transpose(x, (0, 2, 4, 1, 3, 5))          # (B, hp, wp, C, p, p)
    return x.reshape(B, hp * wp, C * patch * patch)


def _full_spec(arr):
    # whole-array block, constant across the batch grid (DMA'd once).
    return pl.BlockSpec(arr.shape, lambda b, n=arr.ndim: (0,) * n)


def siglip_vision_transformer(pixel_values, packed):
    patches = extract_patches(pixel_values, PATCH)
    B = patches.shape[0]

    weight_order = ("patch_w", "patch_b", "pos",
                    "ln1_g", "ln1_b", "wqkv", "bqkv", "wo", "bo",
                    "ln2_g", "ln2_b", "w1", "b1", "w2", "b2",
                    "post_g", "post_b")
    weights = [packed[k] for k in weight_order]

    return pl.pallas_call(
        _fused_vit_kernel,
        out_shape=jax.ShapeDtypeStruct((B, NUM_PATCHES, HIDDEN), jnp.float32),
        grid=(B,),
        in_specs=[pl.BlockSpec((1, NUM_PATCHES, PATCH_DIM), lambda b: (b, 0, 0))]
                 + [_full_spec(w) for w in weights],
        out_specs=pl.BlockSpec((1, NUM_PATCHES, HIDDEN), lambda b: (b, 0, 0)),
        compiler_params=pltpu.CompilerParams(
            dimension_semantics=("parallel",)),
    )(patches, *weights)


# ----------------------------- parameter init --------------------------------
def init_params(key):
    def normal(k, shape, scale=0.02):
        return scale * jax.random.normal(k, shape, dtype=jnp.float32)

    keys = iter(jax.random.split(key, 3 + 6 * NUM_LAYERS))

    params = {
        # Conv2d weight (D, C, P, P) flattened to a (K, D) matmul weight
        "patch_w": normal(next(keys), (HIDDEN, PATCH_DIM)).T,        # (K, D)
        "patch_b": normal(next(keys), (1, HIDDEN)),
        "pos_emb": normal(next(keys), (NUM_PATCHES, HIDDEN)),
        "post_ln_g": jnp.ones((1, HIDDEN), jnp.float32),
        "post_ln_b": jnp.zeros((1, HIDDEN), jnp.float32),
        "layers": [],
    }
    for _ in range(NUM_LAYERS):
        params["layers"].append({
            "ln1_g": jnp.ones((1, HIDDEN), jnp.float32),
            "ln1_b": jnp.zeros((1, HIDDEN), jnp.float32),
            "wq": normal(next(keys), (HIDDEN, HIDDEN)),
            "bq": jnp.zeros((1, HIDDEN), jnp.float32),
            "wk": normal(next(keys), (HIDDEN, HIDDEN)),
            "bk": jnp.zeros((1, HIDDEN), jnp.float32),
            "wv": normal(next(keys), (HIDDEN, HIDDEN)),
            "bv": jnp.zeros((1, HIDDEN), jnp.float32),
            "wo": normal(next(keys), (HIDDEN, HIDDEN)),
            "bo": jnp.zeros((1, HIDDEN), jnp.float32),
            "ln2_g": jnp.ones((1, HIDDEN), jnp.float32),
            "ln2_b": jnp.zeros((1, HIDDEN), jnp.float32),
            "w1": normal(next(keys), (HIDDEN, INTERMEDIATE)),
            "b1": jnp.zeros((1, INTERMEDIATE), jnp.float32),
            "w2": normal(next(keys), (INTERMEDIATE, HIDDEN)),
            "b2": jnp.zeros((1, HIDDEN), jnp.float32),
        })
    return params


def pack_params(params):
    """Stack per-layer weights (leading layer axis), fuse QKV, fold attn scale."""
    scale = 1.0 / (HEAD_DIM ** 0.5)
    layers = params["layers"]
    stk = lambda name: jnp.stack([lp[name] for lp in layers])    # (L, ...)

    wqkv = jnp.stack([jnp.concatenate(
        [lp["wq"] * scale, lp["wk"], lp["wv"]], axis=-1) for lp in layers])   # (L,D,3D)
    bqkv = jnp.stack([jnp.concatenate(
        [lp["bq"] * scale, lp["bk"], lp["bv"]], axis=-1) for lp in layers])   # (L,1,3D)

    return {
        "patch_w": params["patch_w"], "patch_b": params["patch_b"],
        "pos": params["pos_emb"],
        "ln1_g": stk("ln1_g"), "ln1_b": stk("ln1_b"),
        "wqkv": wqkv, "bqkv": bqkv,
        "wo": stk("wo"), "bo": stk("bo"),
        "ln2_g": stk("ln2_g"), "ln2_b": stk("ln2_b"),
        "w1": stk("w1"), "b1": stk("b1"),
        "w2": stk("w2"), "b2": stk("b2"),
        "post_g": params["post_ln_g"], "post_b": params["post_ln_b"],
    }


# ----------------------------------- main ------------------------------------
if __name__ == "__main__":
    root = jax.random.PRNGKey(0)
    kx, kp = jax.random.split(root)
    pixel_values = jax.random.normal(
        kx, (2, CHANNELS, IMAGE, IMAGE), dtype=jnp.float32)
    packed = pack_params(init_params(kp))

    out = siglip_vision_transformer(pixel_values, packed)
    out = jax.block_until_ready(out)

    assert out.shape == (2, NUM_PATCHES, HIDDEN), out.shape
    assert jnp.all(jnp.isfinite(out))
    print("KERNEL_OK")
</pallas_src>

<mosaic_0001>
module attributes {stable_mosaic.version = 11 : i64} {
  func.func @_fused_vit_kernel(%arg0: i32, %arg1: memref<1x4x192xf32, #tpu.memory_space<vmem>>, %arg2: memref<192x32xf32, #tpu.memory_space<vmem>>, %arg3: memref<1x32xf32, #tpu.memory_space<vmem>>, %arg4: memref<4x32xf32, #tpu.memory_space<vmem>>, %arg5: memref<2x1x32xf32, #tpu.memory_space<vmem>>, %arg6: memref<2x1x32xf32, #tpu.memory_space<vmem>>, %arg7: memref<2x32x96xf32, #tpu.memory_space<vmem>>, %arg8: memref<2x1x96xf32, #tpu.memory_space<vmem>>, %arg9: memref<2x32x32xf32, #tpu.memory_space<vmem>>, %arg10: memref<2x1x32xf32, #tpu.memory_space<vmem>>, %arg11: memref<2x1x32xf32, #tpu.memory_space<vmem>>, %arg12: memref<2x1x32xf32, #tpu.memory_space<vmem>>, %arg13: memref<2x32x64xf32, #tpu.memory_space<vmem>>, %arg14: memref<2x1x64xf32, #tpu.memory_space<vmem>>, %arg15: memref<2x64x32xf32, #tpu.memory_space<vmem>>, %arg16: memref<2x1x32xf32, #tpu.memory_space<vmem>>, %arg17: memref<1x32xf32, #tpu.memory_space<vmem>>, %arg18: memref<1x32xf32, #tpu.memory_space<vmem>>, %arg19: memref<1x4x32xf32, #tpu.memory_space<vmem>>) attributes {dimension_semantics = [#tpu.dimension_semantics<parallel>], iteration_bounds = array<i64: 2>, scalar_prefetch = 0 : i64, scratch_operands = 0 : i64, tpu.core_type = #tpu.core_type<tc>, window_params = [{transform_indices = @transform_0, window_bounds = array<i64: 1, 4, 192>}, {pipeline_mode = #tpu.pipeline_mode<synchronous>, transform_indices = @transform_1, window_bounds = array<i64: 192, 32>}, {pipeline_mode = #tpu.pipeline_mode<synchronous>, transform_indices = @transform_2, window_bounds = array<i64: 1, 32>}, {pipeline_mode = #tpu.pipeline_mode<synchronous>, transform_indices = @transform_3, window_bounds = array<i64: 4, 32>}, {pipeline_mode = #tpu.pipeline_mode<synchronous>, transform_indices = @transform_4, window_bounds = array<i64: 2, 1, 32>}, {pipeline_mode = #tpu.pipeline_mode<synchronous>, transform_indices = @transform_5, window_bounds = array<i64: 2, 1, 32>}, {pipeline_mode = #tpu.pipeline_mode<synchronous>, transform_indices = @transform_6, window_bounds = array<i64: 2, 32, 96>}, {pipeline_mode = #tpu.pipeline_mode<synchronous>, transform_indices = @transform_7, window_bounds = array<i64: 2, 1, 96>}, {pipeline_mode = #tpu.pipeline_mode<synchronous>, transform_indices = @transform_8, window_bounds = array<i64: 2, 32, 32>}, {pipeline_mode = #tpu.pipeline_mode<synchronous>, transform_indices = @transform_9, window_bounds = array<i64: 2, 1, 32>}, {pipeline_mode = #tpu.pipeline_mode<synchronous>, transform_indices = @transform_10, window_bounds = array<i64: 2, 1, 32>}, {pipeline_mode = #tpu.pipeline_mode<synchronous>, transform_indices = @transform_11, window_bounds = array<i64: 2, 1, 32>}, {pipeline_mode = #tpu.pipeline_mode<synchronous>, transform_indices = @transform_12, window_bounds = array<i64: 2, 32, 64>}, {pipeline_mode = #tpu.pipeline_mode<synchronous>, transform_indices = @transform_13, window_bounds = array<i64: 2, 1, 64>}, {pipeline_mode = #tpu.pipeline_mode<synchronous>, transform_indices = @transform_14, window_bounds = array<i64: 2, 64, 32>}, {pipeline_mode = #tpu.pipeline_mode<synchronous>, transform_indices = @transform_15, window_bounds = array<i64: 2, 1, 32>}, {pipeline_mode = #tpu.pipeline_mode<synchronous>, transform_indices = @transform_16, window_bounds = array<i64: 1, 32>}, {pipeline_mode = #tpu.pipeline_mode<synchronous>, transform_indices = @transform_17, window_bounds = array<i64: 1, 32>}, {transform_indices = @transform_18, window_bounds = array<i64: 1, 4, 32>}]} {
    %c0 = arith.constant 0 : index
    %c0_0 = arith.constant 0 : index
    %c0_1 = arith.constant 0 : index
    %0 = vector.load %arg1[%c0, %c0_0, %c0_1] : memref<1x4x192xf32, #tpu.memory_space<vmem>>, vector<1x4x192xf32>
    %1 = vector.shape_cast %0 : vector<1x4x192xf32> to vector<4x192xf32>
    %c0_2 = arith.constant 0 : index
    %c0_3 = arith.constant 0 : index
    %2 = vector.load %arg2[%c0_2, %c0_3] : memref<192x32xf32, #tpu.memory_space<vmem>>, vector<192x32xf32>
    %cst = arith.constant dense<0.000000e+00> : vector<4x32xf32>
    %3 = tpu.matmul %1, %2, %cst {dimension_numbers = #tpu.dot_dimension_numbers<[1], [0], [0], [1], [0, 0, 1, 1], [], []>} : vector<4x192xf32>, vector<192x32xf32>, vector<4x32xf32> -> vector<4x32xf32>
    %c0_4 = arith.constant 0 : index
    %c0_5 = arith.constant 0 : index
    %4 = vector.load %arg3[%c0_4, %c0_5] : memref<1x32xf32, #tpu.memory_space<vmem>>, vector<1x32xf32>
    %5 = vector.broadcast %4 : vector<1x32xf32> to vector<4x32xf32>
    %6 = arith.addf %3, %5 : vector<4x32xf32>
    %c0_6 = arith.constant 0 : index
    %c0_7 = arith.constant 0 : index
    %7 = vector.load %arg4[%c0_6, %c0_7] : memref<4x32xf32, #tpu.memory_space<vmem>>, vector<4x32xf32>
    %8 = arith.addf %6, %7 : vector<4x32xf32>
    %c0_8 = arith.constant 0 : index
    %c0_9 = arith.constant 0 : index
    %c0_10 = arith.constant 0 : index
    %9 = vector.load %arg5[%c0_8, %c0_9, %c0_10] : memref<2x1x32xf32, #tpu.memory_space<vmem>>, vector<1x1x32xf32>
    %10 = vector.shape_cast %9 : vector<1x1x32xf32> to vector<1x32xf32>
    %c0_11 = arith.constant 0 : index
    %c0_12 = arith.constant 0 : index
    %c0_13 = arith.constant 0 : index
    %11 = vector.load %arg6[%c0_11, %c0_12, %c0_13] : memref<2x1x32xf32, #tpu.memory_space<vmem>>, vector<1x1x32xf32>
    %12 = vector.shape_cast %11 : vector<1x1x32xf32> to vector<1x32xf32>
    %cst_14 = arith.constant dense<0.000000e+00> : vector<4xf32>
    %13 = vector.multi_reduction <add>, %8, %cst_14 [1] : vector<4x32xf32> to vector<4xf32>
    %14 = vector.shape_cast %13 : vector<4xf32> to vector<4x1xf32>
    %cst_15 = arith.constant 3.200000e+01 : f32
    %15 = vector.broadcast %cst_15 : f32 to vector<4x1xf32>
    %16 = arith.divf %14, %15 : vector<4x1xf32>
    %17 = vector.broadcast %16 : vector<4x1xf32> to vector<4x32xf32>
    %18 = arith.subf %8, %17 : vector<4x32xf32>
    %19 = arith.mulf %18, %18 : vector<4x32xf32>
    %cst_16 = arith.constant dense<0.000000e+00> : vector<4xf32>
    %20 = vector.multi_reduction <add>, %19, %cst_16 [1] : vector<4x32xf32> to vector<4xf32>
    %21 = vector.shape_cast %20 : vector<4xf32> to vector<4x1xf32>
    %cst_17 = arith.constant 3.200000e+01 : f32
    %22 = vector.broadcast %cst_17 : f32 to vector<4x1xf32>
    %23 = arith.divf %21, %22 : vector<4x1xf32>
    %24 = vector.broadcast %16 : vector<4x1xf32> to vector<4x32xf32>
    %25 = arith.subf %8, %24 : vector<4x32xf32>
    %cst_18 = arith.constant 9.99999997E-7 : f32
    %26 = vector.broadcast %cst_18 : f32 to vector<4x1xf32>
    %27 = arith.addf %23, %26 : vector<4x1xf32>
    %28 = math.rsqrt %27 : vector<4x1xf32>
    %29 = vector.broadcast %28 : vector<4x1xf32> to vector<4x32xf32>
    %30 = arith.mulf %25, %29 : vector<4x32xf32>
    %31 = vector.broadcast %10 : vector<1x32xf32> to vector<4x32xf32>
    %32 = arith.mulf %30, %31 : vector<4x32xf32>
    %33 = vector.broadcast %12 : vector<1x32xf32> to vector<4x32xf32>
    %34 = arith.addf %32, %33 : vector<4x32xf32>
    %c0_19 = arith.constant 0 : index
    %c0_20 = arith.constant 0 : index
    %c0_21 = arith.constant 0 : index
    %35 = vector.load %arg7[%c0_19, %c0_20, %c0_21] : memref<2x32x96xf32, #tpu.memory_space<vmem>>, vector<1x32x96xf32>
    %36 = vector.shape_cast %35 : vector<1x32x96xf32> to vector<32x96xf32>
    %cst_22 = arith.constant dense<0.000000e+00> : vector<4x96xf32>
    %37 = tpu.matmul %34, %36, %cst_22 {dimension_numbers = #tpu.dot_dimension_numbers<[1], [0], [0], [1], [0, 0, 1, 1], [], []>} : vector<4x32xf32>, vector<32x96xf32>, vector<4x96xf32> -> vector<4x96xf32>
    %c0_23 = arith.constant 0 : index
    %c0_24 = arith.constant 0 : index
    %c0_25 = arith.constant 0 : index
    %38 = vector.load %arg8[%c0_23, %c0_24, %c0_25] : memref<2x1x96xf32, #tpu.memory_space<vmem>>, vector<1x1x96xf32>
    %39 = vector.shape_cast %38 : vector<1x1x96xf32> to vector<1x96xf32>
    %40 = vector.broadcast %39 : vector<1x96xf32> to vector<4x96xf32>
    %41 = arith.addf %37, %40 : vector<4x96xf32>
    %42 = vector.extract_strided_slice %41 {offsets = [0, 0], sizes = [4, 8], strides = [1, 1]} : vector<4x96xf32> to vector<4x8xf32>
    %43 = vector.extract_strided_slice %41 {offsets = [0, 8], sizes = [4, 8], strides = [1, 1]} : vector<4x96xf32> to vector<4x8xf32>
    %44 = vector.extract_strided_slice %41 {offsets = [0, 16], sizes = [4, 8], strides = [1, 1]} : vector<4x96xf32> to vector<4x8xf32>
    %45 = vector.extract_strided_slice %41 {offsets = [0, 24], sizes = [4, 8], strides = [1, 1]} : vector<4x96xf32> to vector<4x8xf32>
    %46 = vector.shape_cast %42 : vector<4x8xf32> to vector<1x4x8xf32>
    %47 = vector.shape_cast %43 : vector<4x8xf32> to vector<1x4x8xf32>
    %48 = vector.shape_cast %44 : vector<4x8xf32> to vector<1x4x8xf32>
    %49 = vector.shape_cast %45 : vector<4x8xf32> to vector<1x4x8xf32>
    %50 = tpu.concatenate %46, %47, %48, %49 in 0 : vector<1x4x8xf32>, vector<1x4x8xf32>, vector<1x4x8xf32>, vector<1x4x8xf32> -> vector<4x4x8xf32>
    %51 = vector.extract_strided_slice %41 {offsets = [0, 32], sizes = [4, 8], strides = [1, 1]} : vector<4x96xf32> to vector<4x8xf32>
    %52 = vector.extract_strided_slice %41 {offsets = [0, 40], sizes = [4, 8], strides = [1, 1]} : vector<4x96xf32> to vector<4x8xf32>
    %53 = vector.extract_strided_slice %41 {offsets = [0, 48], sizes = [4, 8], strides = [1, 1]} : vector<4x96xf32> to vector<4x8xf32>
    %54 = vector.extract_strided_slice %41 {offsets = [0, 56], sizes = [4, 8], strides = [1, 1]} : vector<4x96xf32> to vector<4x8xf32>
    %55 = vector.shape_cast %51 : vector<4x8xf32> to vector<1x4x8xf32>
    %56 = vector.shape_cast %52 : vector<4x8xf32> to vector<1x4x8xf32>
    %57 = vector.shape_cast %53 : vector<4x8xf32> to vector<1x4x8xf32>
    %58 = vector.shape_cast %54 : vector<4x8xf32> to vector<1x4x8xf32>
    %59 = tpu.concatenate %55, %56, %57, %58 in 0 : vector<1x4x8xf32>, vector<1x4x8xf32>, vector<1x4x8xf32>, vector<1x4x8xf32> -> vector<4x4x8xf32>
    %60 = vector.extract_strided_slice %41 {offsets = [0, 64], sizes = [4, 8], strides = [1, 1]} : vector<4x96xf32> to vector<4x8xf32>
    %61 = vector.extract_strided_slice %41 {offsets = [0, 72], sizes = [4, 8], strides = [1, 1]} : vector<4x96xf32> to vector<4x8xf32>
    %62 = vector.extract_strided_slice %41 {offsets = [0, 80], sizes = [4, 8], strides = [1, 1]} : vector<4x96xf32> to vector<4x8xf32>
    %63 = vector.extract_strided_slice %41 {offsets = [0, 88], sizes = [4, 8], strides = [1, 1]} : vector<4x96xf32> to vector<4x8xf32>
    %64 = vector.shape_cast %60 : vector<4x8xf32> to vector<1x4x8xf32>
    %65 = vector.shape_cast %61 : vector<4x8xf32> to vector<1x4x8xf32>
    %66 = vector.shape_cast %62 : vector<4x8xf32> to vector<1x4x8xf32>
    %67 = vector.shape_cast %63 : vector<4x8xf32> to vector<1x4x8xf32>
    %68 = tpu.concatenate %64, %65, %66, %67 in 0 : vector<1x4x8xf32>, vector<1x4x8xf32>, vector<1x4x8xf32>, vector<1x4x8xf32> -> vector<4x4x8xf32>
    "tpu.trace_start"() <{level = 10 : i32, message = "hqe,hke->hqk"}> : () -> ()
    %cst_26 = arith.constant dense<0.000000e+00> : vector<4x4x4xf32>
    %69 = tpu.matmul %50, %59, %cst_26 {dimension_numbers = #tpu.dot_dimension_numbers<[2], [2], [1], [1], [0, 0, 0, 1, 1, 1], [0], [0]>} : vector<4x4x8xf32>, vector<4x4x8xf32>, vector<4x4x4xf32> -> vector<4x4x4xf32>
    "tpu.trace_stop"() : () -> ()
    %cst_27 = arith.constant dense<0xFF800000> : vector<4x4xf32>
    %70 = vector.multi_reduction <maximumf>, %69, %cst_27 [2] : vector<4x4x4xf32> to vector<4x4xf32>
    %71 = vector.shape_cast %70 : vector<4x4xf32> to vector<4x4x1xf32>
    %72 = vector.broadcast %71 : vector<4x4x1xf32> to vector<4x4x4xf32>
    %73 = arith.subf %69, %72 : vector<4x4x4xf32>
    %74 = math.exp %73 : vector<4x4x4xf32>
    %cst_28 = arith.constant dense<0.000000e+00> : vector<4x4xf32>
    %75 = vector.multi_reduction <add>, %74, %cst_28 [2] : vector<4x4x4xf32> to vector<4x4xf32>
    %76 = vector.shape_cast %75 : vector<4x4xf32> to vector<4x4x1xf32>
    %77 = tpu.reciprocal %76 {approx = true} : vector<4x4x1xf32> -> vector<4x4x1xf32>
    %78 = vector.broadcast %77 : vector<4x4x1xf32> to vector<4x4x4xf32>
    %79 = arith.mulf %74, %78 : vector<4x4x4xf32>
    "tpu.trace_start"() <{level = 10 : i32, message = "hqk,hke->hqe"}> : () -> ()
    %cst_29 = arith.constant dense<0.000000e+00> : vector<4x4x8xf32>
    %80 = tpu.matmul %79, %68, %cst_29 {dimension_numbers = #tpu.dot_dimension_numbers<[2], [1], [1], [2], [0, 0, 0, 1, 1, 2], [0], [0]>} : vector<4x4x4xf32>, vector<4x4x8xf32>, vector<4x4x8xf32> -> vector<4x4x8xf32>
    "tpu.trace_stop"() : () -> ()
    %81 = vector.extract_strided_slice %80 {offsets = [0, 0, 0], sizes = [1, 4, 8], strides = [1, 1, 1]} : vector<4x4x8xf32> to vector<1x4x8xf32>
    %82 = vector.shape_cast %81 : vector<1x4x8xf32> to vector<4x8xf32>
    %83 = vector.extract_strided_slice %80 {offsets = [1, 0, 0], sizes = [1, 4, 8], strides = [1, 1, 1]} : vector<4x4x8xf32> to vector<1x4x8xf32>
    %84 = vector.shape_cast %83 : vector<1x4x8xf32> to vector<4x8xf32>
    %85 = vector.extract_strided_slice %80 {offsets = [2, 0, 0], sizes = [1, 4, 8], strides = [1, 1, 1]} : vector<4x4x8xf32> to vector<1x4x8xf32>
    %86 = vector.shape_cast %85 : vector<1x4x8xf32> to vector<4x8xf32>
    %87 = vector.extract_strided_slice %80 {offsets = [3, 0, 0], sizes = [1, 4, 8], strides = [1, 1, 1]} : vector<4x4x8xf32> to vector<1x4x8xf32>
    %88 = vector.shape_cast %87 : vector<1x4x8xf32> to vector<4x8xf32>
    %89 = tpu.concatenate %82, %84, %86, %88 in 1 : vector<4x8xf32>, vector<4x8xf32>, vector<4x8xf32>, vector<4x8xf32> -> vector<4x32xf32>
    %c0_30 = arith.constant 0 : index
    %c0_31 = arith.constant 0 : index
    %c0_32 = arith.constant 0 : index
    %90 = vector.load %arg9[%c0_30, %c0_31, %c0_32] : memref<2x32x32xf32, #tpu.memory_space<vmem>>, vector<1x32x32xf32>
    %91 = vector.shape_cast %90 : vector<1x32x32xf32> to vector<32x32xf32>
    %cst_33 = arith.constant dense<0.000000e+00> : vector<4x32xf32>
    %92 = tpu.matmul %89, %91, %cst_33 {dimension_numbers = #tpu.dot_dimension_numbers<[1], [0], [0], [1], [0, 0, 1, 1], [], []>} : vector<4x32xf32>, vector<32x32xf32>, vector<4x32xf32> -> vector<4x32xf32>
    %c0_34 = arith.constant 0 : index
    %c0_35 = arith.constant 0 : index
    %c0_36 = arith.constant 0 : index
    %93 = vector.load %arg10[%c0_34, %c0_35, %c0_36] : memref<2x1x32xf32, #tpu.memory_space<vmem>>, vector<1x1x32xf32>
    %94 = vector.shape_cast %93 : vector<1x1x32xf32> to vector<1x32xf32>
    %95 = vector.broadcast %94 : vector<1x32xf32> to vector<4x32xf32>
    %96 = arith.addf %92, %95 : vector<4x32xf32>
    %97 = arith.addf %8, %96 : vector<4x32xf32>
    %c0_37 = arith.constant 0 : index
    %c0_38 = arith.constant 0 : index
    %c0_39 = arith.constant 0 : index
    %98 = vector.load %arg11[%c0_37, %c0_38, %c0_39] : memref<2x1x32xf32, #tpu.memory_space<vmem>>, vector<1x1x32xf32>
    %99 = vector.shape_cast %98 : vector<1x1x32xf32> to vector<1x32xf32>
    %c0_40 = arith.constant 0 : index
    %c0_41 = arith.constant 0 : index
    %c0_42 = arith.constant 0 : index
    %100 = vector.load %arg12[%c0_40, %c0_41, %c0_42] : memref<2x1x32xf32, #tpu.memory_space<vmem>>, vector<1x1x32xf32>
    %101 = vector.shape_cast %100 : vector<1x1x32xf32> to vector<1x32xf32>
    %cst_43 = arith.constant dense<0.000000e+00> : vector<4xf32>
    %102 = vector.multi_reduction <add>, %97, %cst_43 [1] : vector<4x32xf32> to vector<4xf32>
    %103 = vector.shape_cast %102 : vector<4xf32> to vector<4x1xf32>
    %cst_44 = arith.constant 3.200000e+01 : f32
    %104 = vector.broadcast %cst_44 : f32 to vector<4x1xf32>
    %105 = arith.divf %103, %104 : vector<4x1xf32>
    %106 = vector.broadcast %105 : vector<4x1xf32> to vector<4x32xf32>
    %107 = arith.subf %97, %106 : vector<4x32xf32>
    %108 = arith.mulf %107, %107 : vector<4x32xf32>
    %cst_45 = arith.constant dense<0.000000e+00> : vector<4xf32>
    %109 = vector.multi_reduction <add>, %108, %cst_45 [1] : vector<4x32xf32> to vector<4xf32>
    %110 = vector.shape_cast %109 : vector<4xf32> to vector<4x1xf32>
    %cst_46 = arith.constant 3.200000e+01 : f32
    %111 = vector.broadcast %cst_46 : f32 to vector<4x1xf32>
    %112 = arith.divf %110, %111 : vector<4x1xf32>
    %113 = vector.broadcast %105 : vector<4x1xf32> to vector<4x32xf32>
    %114 = arith.subf %97, %113 : vector<4x32xf32>
    %cst_47 = arith.constant 9.99999997E-7 : f32
    %115 = vector.broadcast %cst_47 : f32 to vector<4x1xf32>
    %116 = arith.addf %112, %115 : vector<4x1xf32>
    %117 = math.rsqrt %116 : vector<4x1xf32>
    %118 = vector.broadcast %117 : vector<4x1xf32> to vector<4x32xf32>
    %119 = arith.mulf %114, %118 : vector<4x32xf32>
    %120 = vector.broadcast %99 : vector<1x32xf32> to vector<4x32xf32>
    %121 = arith.mulf %119, %120 : vector<4x32xf32>
    %122 = vector.broadcast %101 : vector<1x32xf32> to vector<4x32xf32>
    %123 = arith.addf %121, %122 : vector<4x32xf32>
    %c0_48 = arith.constant 0 : index
    %c0_49 = arith.constant 0 : index
    %c0_50 = arith.constant 0 : index
    %124 = vector.load %arg13[%c0_48, %c0_49, %c0_50] : memref<2x32x64xf32, #tpu.memory_space<vmem>>, vector<1x32x64xf32>
    %125 = vector.shape_cast %124 : vector<1x32x64xf32> to vector<32x64xf32>
    %cst_51 = arith.constant dense<0.000000e+00> : vector<4x64xf32>
    %126 = tpu.matmul %123, %125, %cst_51 {dimension_numbers = #tpu.dot_dimension_numbers<[1], [0], [0], [1], [0, 0, 1, 1], [], []>} : vector<4x32xf32>, vector<32x64xf32>, vector<4x64xf32> -> vector<4x64xf32>
    %c0_52 = arith.constant 0 : index
    %c0_53 = arith.constant 0 : index
    %c0_54 = arith.constant 0 : index
    %127 = vector.load %arg14[%c0_52, %c0_53, %c0_54] : memref<2x1x64xf32, #tpu.memory_space<vmem>>, vector<1x1x64xf32>
    %128 = vector.shape_cast %127 : vector<1x1x64xf32> to vector<1x64xf32>
    %129 = vector.broadcast %128 : vector<1x64xf32> to vector<4x64xf32>
    %130 = arith.addf %126, %129 : vector<4x64xf32>
    %131 = arith.mulf %130, %130 : vector<4x64xf32>
    %132 = arith.mulf %130, %131 : vector<4x64xf32>
    %cst_55 = arith.constant 4.471500e-02 : f32
    %133 = vector.broadcast %cst_55 : f32 to vector<4x64xf32>
    %134 = arith.mulf %133, %132 : vector<4x64xf32>
    %135 = arith.addf %130, %134 : vector<4x64xf32>
    %cst_56 = arith.constant 0.797884583 : f32
    %136 = vector.broadcast %cst_56 : f32 to vector<4x64xf32>
    %137 = arith.mulf %136, %135 : vector<4x64xf32>
    %138 = math.tanh %137 : vector<4x64xf32>
    %cst_57 = arith.constant 1.000000e+00 : f32
    %139 = vector.broadcast %cst_57 : f32 to vector<4x64xf32>
    %140 = arith.addf %139, %138 : vector<4x64xf32>
    %cst_58 = arith.constant 5.000000e-01 : f32
    %141 = vector.broadcast %cst_58 : f32 to vector<4x64xf32>
    %142 = arith.mulf %141, %140 : vector<4x64xf32>
    %143 = arith.mulf %130, %142 : vector<4x64xf32>
    %c0_59 = arith.constant 0 : index
    %c0_60 = arith.constant 0 : index
    %c0_61 = arith.constant 0 : index
    %144 = vector.load %arg15[%c0_59, %c0_60, %c0_61] : memref<2x64x32xf32, #tpu.memory_space<vmem>>, vector<1x64x32xf32>
    %145 = vector.shape_cast %144 : vector<1x64x32xf32> to vector<64x32xf32>
    %cst_62 = arith.constant dense<0.000000e+00> : vector<4x32xf32>
    %146 = tpu.matmul %143, %145, %cst_62 {dimension_numbers = #tpu.dot_dimension_numbers<[1], [0], [0], [1], [0, 0, 1, 1], [], []>} : vector<4x64xf32>, vector<64x32xf32>, vector<4x32xf32> -> vector<4x32xf32>
    %c0_63 = arith.constant 0 : index
    %c0_64 = arith.constant 0 : index
    %c0_65 = arith.constant 0 : index
    %147 = vector.load %arg16[%c0_63, %c0_64, %c0_65] : memref<2x1x32xf32, #tpu.memory_space<vmem>>, vector<1x1x32xf32>
    %148 = vector.shape_cast %147 : vector<1x1x32xf32> to vector<1x32xf32>
    %149 = vector.broadcast %148 : vector<1x32xf32> to vector<4x32xf32>
    %150 = arith.addf %146, %149 : vector<4x32xf32>
    %151 = arith.addf %97, %150 : vector<4x32xf32>
    %c1 = arith.constant 1 : index
    %c0_66 = arith.constant 0 : index
    %c0_67 = arith.constant 0 : index
    %152 = vector.load %arg5[%c1, %c0_66, %c0_67] : memref<2x1x32xf32, #tpu.memory_space<vmem>>, vector<1x1x32xf32>
    %153 = vector.shape_cast %152 : vector<1x1x32xf32> to vector<1x32xf32>
    %c1_68 = arith.constant 1 : index
    %c0_69 = arith.constant 0 : index
    %c0_70 = arith.constant 0 : index
    %154 = vector.load %arg6[%c1_68, %c0_69, %c0_70] : memref<2x1x32xf32, #tpu.memory_space<vmem>>, vector<1x1x32xf32>
    %155 = vector.shape_cast %154 : vector<1x1x32xf32> to vector<1x32xf32>
    %cst_71 = arith.constant dense<0.000000e+00> : vector<4xf32>
    %156 = vector.multi_reduction <add>, %151, %cst_71 [1] : vector<4x32xf32> to vector<4xf32>
    %157 = vector.shape_cast %156 : vector<4xf32> to vector<4x1xf32>
    %cst_72 = arith.constant 3.200000e+01 : f32
    %158 = vector.broadcast %cst_72 : f32 to vector<4x1xf32>
    %159 = arith.divf %157, %158 : vector<4x1xf32>
    %160 = vector.broadcast %159 : vector<4x1xf32> to vector<4x32xf32>
    %161 = arith.subf %151, %160 : vector<4x32xf32>
    %162 = arith.mulf %161, %161 : vector<4x32xf32>
    %cst_73 = arith.constant dense<0.000000e+00> : vector<4xf32>
    %163 = vector.multi_reduction <add>, %162, %cst_73 [1] : vector<4x32xf32> to vector<4xf32>
    %164 = vector.shape_cast %163 : vector<4xf32> to vector<4x1xf32>
    %cst_74 = arith.constant 3.200000e+01 : f32
    %165 = vector.broadcast %cst_74 : f32 to vector<4x1xf32>
    %166 = arith.divf %164, %165 : vector<4x1xf32>
    %167 = vector.broadcast %159 : vector<4x1xf32> to vector<4x32xf32>
    %168 = arith.subf %151, %167 : vector<4x32xf32>
    %cst_75 = arith.constant 9.99999997E-7 : f32
    %169 = vector.broadcast %cst_75 : f32 to vector<4x1xf32>
    %170 = arith.addf %166, %169 : vector<4x1xf32>
    %171 = math.rsqrt %170 : vector<4x1xf32>
    %172 = vector.broadcast %171 : vector<4x1xf32> to vector<4x32xf32>
    %173 = arith.mulf %168, %172 : vector<4x32xf32>
    %174 = vector.broadcast %153 : vector<1x32xf32> to vector<4x32xf32>
    %175 = arith.mulf %173, %174 : vector<4x32xf32>
    %176 = vector.broadcast %155 : vector<1x32xf32> to vector<4x32xf32>
    %177 = arith.addf %175, %176 : vector<4x32xf32>
    %c1_76 = arith.constant 1 : index
    %c0_77 = arith.constant 0 : index
    %c0_78 = arith.constant 0 : index
    %178 = vector.load %arg7[%c1_76, %c0_77, %c0_78] : memref<2x32x96xf32, #tpu.memory_space<vmem>>, vector<1x32x96xf32>
    %179 = vector.shape_cast %178 : vector<1x32x96xf32> to vector<32x96xf32>
    %cst_79 = arith.constant dense<0.000000e+00> : vector<4x96xf32>
    %180 = tpu.matmul %177, %179, %cst_79 {dimension_numbers = #tpu.dot_dimension_numbers<[1], [0], [0], [1], [0, 0, 1, 1], [], []>} : vector<4x32xf32>, vector<32x96xf32>, vector<4x96xf32> -> vector<4x96xf32>
    %c1_80 = arith.constant 1 : index
    %c0_81 = arith.constant 0 : index
    %c0_82 = arith.constant 0 : index
    %181 = vector.load %arg8[%c1_80, %c0_81, %c0_82] : memref<2x1x96xf32, #tpu.memory_space<vmem>>, vector<1x1x96xf32>
    %182 = vector.shape_cast %181 : vector<1x1x96xf32> to vector<1x96xf32>
    %183 = vector.broadcast %182 : vector<1x96xf32> to vector<4x96xf32>
    %184 = arith.addf %180, %183 : vector<4x96xf32>
    %185 = vector.extract_strided_slice %184 {offsets = [0, 0], sizes = [4, 8], strides = [1, 1]} : vector<4x96xf32> to vector<4x8xf32>
    %186 = vector.extract_strided_slice %184 {offsets = [0, 8], sizes = [4, 8], strides = [1, 1]} : vector<4x96xf32> to vector<4x8xf32>
    %187 = vector.extract_strided_slice %184 {offsets = [0, 16], sizes = [4, 8], strides = [1, 1]} : vector<4x96xf32> to vector<4x8xf32>
    %188 = vector.extract_strided_slice %184 {offsets = [0, 24], sizes = [4, 8], strides = [1, 1]} : vector<4x96xf32> to vector<4x8xf32>
    %189 = vector.shape_cast %185 : vector<4x8xf32> to vector<1x4x8xf32>
    %190 = vector.shape_cast %186 : vector<4x8xf32> to vector<1x4x8xf32>
    %191 = vector.shape_cast %187 : vector<4x8xf32> to vector<1x4x8xf32>
    %192 = vector.shape_cast %188 : vector<4x8xf32> to vector<1x4x8xf32>
    %193 = tpu.concatenate %189, %190, %191, %192 in 0 : vector<1x4x8xf32>, vector<1x4x8xf32>, vector<1x4x8xf32>, vector<1x4x8xf32> -> vector<4x4x8xf32>
    %194 = vector.extract_strided_slice %184 {offsets = [0, 32], sizes = [4, 8], strides = [1, 1]} : vector<4x96xf32> to vector<4x8xf32>
    %195 = vector.extract_strided_slice %184 {offsets = [0, 40], sizes = [4, 8], strides = [1, 1]} : vector<4x96xf32> to vector<4x8xf32>
    %196 = vector.extract_strided_slice %184 {offsets = [0, 48], sizes = [4, 8], strides = [1, 1]} : vector<4x96xf32> to vector<4x8xf32>
    %197 = vector.extract_strided_slice %184 {offsets = [0, 56], sizes = [4, 8], strides = [1, 1]} : vector<4x96xf32> to vector<4x8xf32>
    %198 = vector.shape_cast %194 : vector<4x8xf32> to vector<1x4x8xf32>
    %199 = vector.shape_cast %195 : vector<4x8xf32> to vector<1x4x8xf32>
    %200 = vector.shape_cast %196 : vector<4x8xf32> to vector<1x4x8xf32>
    %201 = vector.shape_cast %197 : vector<4x8xf32> to vector<1x4x8xf32>
    %202 = tpu.concatenate %198, %199, %200, %201 in 0 : vector<1x4x8xf32>, vector<1x4x8xf32>, vector<1x4x8xf32>, vector<1x4x8xf32> -> vector<4x4x8xf32>
    %203 = vector.extract_strided_slice %184 {offsets = [0, 64], sizes = [4, 8], strides = [1, 1]} : vector<4x96xf32> to vector<4x8xf32>
    %204 = vector.extract_strided_slice %184 {offsets = [0, 72], sizes = [4, 8], strides = [1, 1]} : vector<4x96xf32> to vector<4x8xf32>
    %205 = vector.extract_strided_slice %184 {offsets = [0, 80], sizes = [4, 8], strides = [1, 1]} : vector<4x96xf32> to vector<4x8xf32>
    %206 = vector.extract_strided_slice %184 {offsets = [0, 88], sizes = [4, 8], strides = [1, 1]} : vector<4x96xf32> to vector<4x8xf32>
    %207 = vector.shape_cast %203 : vector<4x8xf32> to vector<1x4x8xf32>
    %208 = vector.shape_cast %204 : vector<4x8xf32> to vector<1x4x8xf32>
    %209 = vector.shape_cast %205 : vector<4x8xf32> to vector<1x4x8xf32>
    %210 = vector.shape_cast %206 : vector<4x8xf32> to vector<1x4x8xf32>
    %211 = tpu.concatenate %207, %208, %209, %210 in 0 : vector<1x4x8xf32>, vector<1x4x8xf32>, vector<1x4x8xf32>, vector<1x4x8xf32> -> vector<4x4x8xf32>
    "tpu.trace_start"() <{level = 10 : i32, message = "hqe,hke->hqk"}> : () -> ()
    %cst_83 = arith.constant dense<0.000000e+00> : vector<4x4x4xf32>
    %212 = tpu.matmul %193, %202, %cst_83 {dimension_numbers = #tpu.dot_dimension_numbers<[2], [2], [1], [1], [0, 0, 0, 1, 1, 1], [0], [0]>} : vector<4x4x8xf32>, vector<4x4x8xf32>, vector<4x4x4xf32> -> vector<4x4x4xf32>
    "tpu.trace_stop"() : () -> ()
    %cst_84 = arith.constant dense<0xFF800000> : vector<4x4xf32>
    %213 = vector.multi_reduction <maximumf>, %212, %cst_84 [2] : vector<4x4x4xf32> to vector<4x4xf32>
    %214 = vector.shape_cast %213 : vector<4x4xf32> to vector<4x4x1xf32>
    %215 = vector.broadcast %214 : vector<4x4x1xf32> to vector<4x4x4xf32>
    %216 = arith.subf %212, %215 : vector<4x4x4xf32>
    %217 = math.exp %216 : vector<4x4x4xf32>
    %cst_85 = arith.constant dense<0.000000e+00> : vector<4x4xf32>
    %218 = vector.multi_reduction <add>, %217, %cst_85 [2] : vector<4x4x4xf32> to vector<4x4xf32>
    %219 = vector.shape_cast %218 : vector<4x4xf32> to vector<4x4x1xf32>
    %220 = tpu.reciprocal %219 {approx = true} : vector<4x4x1xf32> -> vector<4x4x1xf32>
    %221 = vector.broadcast %220 : vector<4x4x1xf32> to vector<4x4x4xf32>
    %222 = arith.mulf %217, %221 : vector<4x4x4xf32>
    "tpu.trace_start"() <{level = 10 : i32, message = "hqk,hke->hqe"}> : () -> ()
    %cst_86 = arith.constant dense<0.000000e+00> : vector<4x4x8xf32>
    %223 = tpu.matmul %222, %211, %cst_86 {dimension_numbers = #tpu.dot_dimension_numbers<[2], [1], [1], [2], [0, 0, 0, 1, 1, 2], [0], [0]>} : vector<4x4x4xf32>, vector<4x4x8xf32>, vector<4x4x8xf32> -> vector<4x4x8xf32>
    "tpu.trace_stop"() : () -> ()
    %224 = vector.extract_strided_slice %223 {offsets = [0, 0, 0], sizes = [1, 4, 8], strides = [1, 1, 1]} : vector<4x4x8xf32> to vector<1x4x8xf32>
    %225 = vector.shape_cast %224 : vector<1x4x8xf32> to vector<4x8xf32>
    %226 = vector.extract_strided_slice %223 {offsets = [1, 0, 0], sizes = [1, 4, 8], strides = [1, 1, 1]} : vector<4x4x8xf32> to vector<1x4x8xf32>
    %227 = vector.shape_cast %226 : vector<1x4x8xf32> to vector<4x8xf32>
    %228 = vector.extract_strided_slice %223 {offsets = [2, 0, 0], sizes = [1, 4, 8], strides = [1, 1, 1]} : vector<4x4x8xf32> to vector<1x4x8xf32>
    %229 = vector.shape_cast %228 : vector<1x4x8xf32> to vector<4x8xf32>
    %230 = vector.extract_strided_slice %223 {offsets = [3, 0, 0], sizes = [1, 4, 8], strides = [1, 1, 1]} : vector<4x4x8xf32> to vector<1x4x8xf32>
    %231 = vector.shape_cast %230 : vector<1x4x8xf32> to vector<4x8xf32>
    %232 = tpu.concatenate %225, %227, %229, %231 in 1 : vector<4x8xf32>, vector<4x8xf32>, vector<4x8xf32>, vector<4x8xf32> -> vector<4x32xf32>
    %c1_87 = arith.constant 1 : index
    %c0_88 = arith.constant 0 : index
    %c0_89 = arith.constant 0 : index
    %233 = vector.load %arg9[%c1_87, %c0_88, %c0_89] : memref<2x32x32xf32, #tpu.memory_space<vmem>>, vector<1x32x32xf32>
    %234 = vector.shape_cast %233 : vector<1x32x32xf32> to vector<32x32xf32>
    %cst_90 = arith.constant dense<0.000000e+00> : vector<4x32xf32>
    %235 = tpu.matmul %232, %234, %cst_90 {dimension_numbers = #tpu.dot_dimension_numbers<[1], [0], [0], [1], [0, 0, 1, 1], [], []>} : vector<4x32xf32>, vector<32x32xf32>, vector<4x32xf32> -> vector<4x32xf32>
    %c1_91 = arith.constant 1 : index
    %c0_92 = arith.constant 0 : index
    %c0_93 = arith.constant 0 : index
    %236 = vector.load %arg10[%c1_91, %c0_92, %c0_93] : memref<2x1x32xf32, #tpu.memory_space<vmem>>, vector<1x1x32xf32>
    %237 = vector.shape_cast %236 : vector<1x1x32xf32> to vector<1x32xf32>
    %238 = vector.broadcast %237 : vector<1x32xf32> to vector<4x32xf32>
    %239 = arith.addf %235, %238 : vector<4x32xf32>
    %240 = arith.addf %151, %239 : vector<4x32xf32>
    %c1_94 = arith.constant 1 : index
    %c0_95 = arith.constant 0 : index
    %c0_96 = arith.constant 0 : index
    %241 = vector.load %arg11[%c1_94, %c0_95, %c0_96] : memref<2x1x32xf32, #tpu.memory_space<vmem>>, vector<1x1x32xf32>
    %242 = vector.shape_cast %241 : vector<1x1x32xf32> to vector<1x32xf32>
    %c1_97 = arith.constant 1 : index
    %c0_98 = arith.constant 0 : index
    %c0_99 = arith.constant 0 : index
    %243 = vector.load %arg12[%c1_97, %c0_98, %c0_99] : memref<2x1x32xf32, #tpu.memory_space<vmem>>, vector<1x1x32xf32>
    %244 = vector.shape_cast %243 : vector<1x1x32xf32> to vector<1x32xf32>
    %cst_100 = arith.constant dense<0.000000e+00> : vector<4xf32>
    %245 = vector.multi_reduction <add>, %240, %cst_100 [1] : vector<4x32xf32> to vector<4xf32>
    %246 = vector.shape_cast %245 : vector<4xf32> to vector<4x1xf32>
    %cst_101 = arith.constant 3.200000e+01 : f32
    %247 = vector.broadcast %cst_101 : f32 to vector<4x1xf32>
    %248 = arith.divf %246, %247 : vector<4x1xf32>
    %249 = vector.broadcast %248 : vector<4x1xf32> to vector<4x32xf32>
    %250 = arith.subf %240, %249 : vector<4x32xf32>
    %251 = arith.mulf %250, %250 : vector<4x32xf32>
    %cst_102 = arith.constant dense<0.000000e+00> : vector<4xf32>
    %252 = vector.multi_reduction <add>, %251, %cst_102 [1] : vector<4x32xf32> to vector<4xf32>
    %253 = vector.shape_cast %252 : vector<4xf32> to vector<4x1xf32>
    %cst_103 = arith.constant 3.200000e+01 : f32
    %254 = vector.broadcast %cst_103 : f32 to vector<4x1xf32>
    %255 = arith.divf %253, %254 : vector<4x1xf32>
    %256 = vector.broadcast %248 : vector<4x1xf32> to vector<4x32xf32>
    %257 = arith.subf %240, %256 : vector<4x32xf32>
    %cst_104 = arith.constant 9.99999997E-7 : f32
    %258 = vector.broadcast %cst_104 : f32 to vector<4x1xf32>
    %259 = arith.addf %255, %258 : vector<4x1xf32>
    %260 = math.rsqrt %259 : vector<4x1xf32>
    %261 = vector.broadcast %260 : vector<4x1xf32> to vector<4x32xf32>
    %262 = arith.mulf %257, %261 : vector<4x32xf32>
    %263 = vector.broadcast %242 : vector<1x32xf32> to vector<4x32xf32>
    %264 = arith.mulf %262, %263 : vector<4x32xf32>
    %265 = vector.broadcast %244 : vector<1x32xf32> to vector<4x32xf32>
    %266 = arith.addf %264, %265 : vector<4x32xf32>
    %c1_105 = arith.constant 1 : index
    %c0_106 = arith.constant 0 : index
    %c0_107 = arith.constant 0 : index
    %267 = vector.load %arg13[%c1_105, %c0_106, %c0_107] : memref<2x32x64xf32, #tpu.memory_space<vmem>>, vector<1x32x64xf32>
    %268 = vector.shape_cast %267 : vector<1x32x64xf32> to vector<32x64xf32>
    %cst_108 = arith.constant dense<0.000000e+00> : vector<4x64xf32>
    %269 = tpu.matmul %266, %268, %cst_108 {dimension_numbers = #tpu.dot_dimension_numbers<[1], [0], [0], [1], [0, 0, 1, 1], [], []>} : vector<4x32xf32>, vector<32x64xf32>, vector<4x64xf32> -> vector<4x64xf32>
    %c1_109 = arith.constant 1 : index
    %c0_110 = arith.constant 0 : index
    %c0_111 = arith.constant 0 : index
    %270 = vector.load %arg14[%c1_109, %c0_110, %c0_111] : memref<2x1x64xf32, #tpu.memory_space<vmem>>, vector<1x1x64xf32>
    %271 = vector.shape_cast %270 : vector<1x1x64xf32> to vector<1x64xf32>
    %272 = vector.broadcast %271 : vector<1x64xf32> to vector<4x64xf32>
    %273 = arith.addf %269, %272 : vector<4x64xf32>
    %274 = arith.mulf %273, %273 : vector<4x64xf32>
    %275 = arith.mulf %273, %274 : vector<4x64xf32>
    %cst_112 = arith.constant 4.471500e-02 : f32
    %276 = vector.broadcast %cst_112 : f32 to vector<4x64xf32>
    %277 = arith.mulf %276, %275 : vector<4x64xf32>
    %278 = arith.addf %273, %277 : vector<4x64xf32>
    %cst_113 = arith.constant 0.797884583 : f32
    %279 = vector.broadcast %cst_113 : f32 to vector<4x64xf32>
    %280 = arith.mulf %279, %278 : vector<4x64xf32>
    %281 = math.tanh %280 : vector<4x64xf32>
    %cst_114 = arith.constant 1.000000e+00 : f32
    %282 = vector.broadcast %cst_114 : f32 to vector<4x64xf32>
    %283 = arith.addf %282, %281 : vector<4x64xf32>
    %cst_115 = arith.constant 5.000000e-01 : f32
    %284 = vector.broadcast %cst_115 : f32 to vector<4x64xf32>
    %285 = arith.mulf %284, %283 : vector<4x64xf32>
    %286 = arith.mulf %273, %285 : vector<4x64xf32>
    %c1_116 = arith.constant 1 : index
    %c0_117 = arith.constant 0 : index
    %c0_118 = arith.constant 0 : index
    %287 = vector.load %arg15[%c1_116, %c0_117, %c0_118] : memref<2x64x32xf32, #tpu.memory_space<vmem>>, vector<1x64x32xf32>
    %288 = vector.shape_cast %287 : vector<1x64x32xf32> to vector<64x32xf32>
    %cst_119 = arith.constant dense<0.000000e+00> : vector<4x32xf32>
    %289 = tpu.matmul %286, %288, %cst_119 {dimension_numbers = #tpu.dot_dimension_numbers<[1], [0], [0], [1], [0, 0, 1, 1], [], []>} : vector<4x64xf32>, vector<64x32xf32>, vector<4x32xf32> -> vector<4x32xf32>
    %c1_120 = arith.constant 1 : index
    %c0_121 = arith.constant 0 : index
    %c0_122 = arith.constant 0 : index
    %290 = vector.load %arg16[%c1_120, %c0_121, %c0_122] : memref<2x1x32xf32, #tpu.memory_space<vmem>>, vector<1x1x32xf32>
    %291 = vector.shape_cast %290 : vector<1x1x32xf32> to vector<1x32xf32>
    %292 = vector.broadcast %291 : vector<1x32xf32> to vector<4x32xf32>
    %293 = arith.addf %289, %292 : vector<4x32xf32>
    %294 = arith.addf %240, %293 : vector<4x32xf32>
    %c0_123 = arith.constant 0 : index
    %c0_124 = arith.constant 0 : index
    %295 = vector.load %arg17[%c0_123, %c0_124] : memref<1x32xf32, #tpu.memory_space<vmem>>, vector<1x32xf32>
    %c0_125 = arith.constant 0 : index
    %c0_126 = arith.constant 0 : index
    %296 = vector.load %arg18[%c0_125, %c0_126] : memref<1x32xf32, #tpu.memory_space<vmem>>, vector<1x32xf32>
    %cst_127 = arith.constant dense<0.000000e+00> : vector<4xf32>
    %297 = vector.multi_reduction <add>, %294, %cst_127 [1] : vector<4x32xf32> to vector<4xf32>
    %298 = vector.shape_cast %297 : vector<4xf32> to vector<4x1xf32>
    %cst_128 = arith.constant 3.200000e+01 : f32
    %299 = vector.broadcast %cst_128 : f32 to vector<4x1xf32>
    %300 = arith.divf %298, %299 : vector<4x1xf32>
    %301 = vector.broadcast %300 : vector<4x1xf32> to vector<4x32xf32>
    %302 = arith.subf %294, %301 : vector<4x32xf32>
    %303 = arith.mulf %302, %302 : vector<4x32xf32>
    %cst_129 = arith.constant dense<0.000000e+00> : vector<4xf32>
    %304 = vector.multi_reduction <add>, %303, %cst_129 [1] : vector<4x32xf32> to vector<4xf32>
    %305 = vector.shape_cast %304 : vector<4xf32> to vector<4x1xf32>
    %cst_130 = arith.constant 3.200000e+01 : f32
    %306 = vector.broadcast %cst_130 : f32 to vector<4x1xf32>
    %307 = arith.divf %305, %306 : vector<4x1xf32>
    %308 = vector.broadcast %300 : vector<4x1xf32> to vector<4x32xf32>
    %309 = arith.subf %294, %308 : vector<4x32xf32>
    %cst_131 = arith.constant 9.99999997E-7 : f32
    %310 = vector.broadcast %cst_131 : f32 to vector<4x1xf32>
    %311 = arith.addf %307, %310 : vector<4x1xf32>
    %312 = math.rsqrt %311 : vector<4x1xf32>
    %313 = vector.broadcast %312 : vector<4x1xf32> to vector<4x32xf32>
    %314 = arith.mulf %309, %313 : vector<4x32xf32>
    %315 = vector.broadcast %295 : vector<1x32xf32> to vector<4x32xf32>
    %316 = arith.mulf %314, %315 : vector<4x32xf32>
    %317 = vector.broadcast %296 : vector<1x32xf32> to vector<4x32xf32>
    %318 = arith.addf %316, %317 : vector<4x32xf32>
    %c0_132 = arith.constant 0 : index
    %c0_133 = arith.constant 0 : index
    %c0_134 = arith.constant 0 : index
    %319 = vector.load %arg19[%c0_132, %c0_133, %c0_134] : memref<1x4x32xf32, #tpu.memory_space<vmem>>, vector<1x4x32xf32>
    %320 = vector.shape_cast %319 : vector<1x4x32xf32> to vector<4x32xf32>
    %321 = vector.shape_cast %318 : vector<4x32xf32> to vector<1x4x32xf32>
    tpu.vector_store %arg19[%c0_132, %c0_133, %c0_134], %321 {strides = array<i32>} : memref<1x4x32xf32, #tpu.memory_space<vmem>>, vector<1x4x32xf32>,
    return
  }
  func.func @transform_0(%arg0: i32) -> (i32, i32, i32) {
    %c0_i32 = arith.constant 0 : i32
    %c0_i32_0 = arith.constant 0 : i32
    %c0_i32_1 = arith.constant 0 : i32
    return %arg0, %c0_i32, %c0_i32_0 : i32, i32, i32
  }
  func.func @transform_1(%arg0: i32) -> (i32, i32) {
    %c0_i32 = arith.constant 0 : i32
    %c0_i32_0 = arith.constant 0 : i32
    %c0_i32_1 = arith.constant 0 : i32
    return %c0_i32, %c0_i32_0 : i32, i32
  }
  func.func @transform_2(%arg0: i32) -> (i32, i32) {
    %c0_i32 = arith.constant 0 : i32
    %c0_i32_0 = arith.constant 0 : i32
    %c0_i32_1 = arith.constant 0 : i32
    return %c0_i32, %c0_i32_0 : i32, i32
  }
  func.func @transform_3(%arg0: i32) -> (i32, i32) {
    %c0_i32 = arith.constant 0 : i32
    %c0_i32_0 = arith.constant 0 : i32
    %c0_i32_1 = arith.constant 0 : i32
    return %c0_i32, %c0_i32_0 : i32, i32
  }
  func.func @transform_4(%arg0: i32) -> (i32, i32, i32) {
    %c0_i32 = arith.constant 0 : i32
    %c0_i32_0 = arith.constant 0 : i32
    %c0_i32_1 = arith.constant 0 : i32
    %c0_i32_2 = arith.constant 0 : i32
    return %c0_i32, %c0_i32_0, %c0_i32_1 : i32, i32, i32
  }
  func.func @transform_5(%arg0: i32) -> (i32, i32, i32) {
    %c0_i32 = arith.constant 0 : i32
    %c0_i32_0 = arith.constant 0 : i32
    %c0_i32_1 = arith.constant 0 : i32
    %c0_i32_2 = arith.constant 0 : i32
    return %c0_i32, %c0_i32_0, %c0_i32_1 : i32, i32, i32
  }
  func.func @transform_6(%arg0: i32) -> (i32, i32, i32) {
    %c0_i32 = arith.constant 0 : i32
    %c0_i32_0 = arith.constant 0 : i32
    %c0_i32_1 = arith.constant 0 : i32
    %c0_i32_2 = arith.constant 0 : i32
    return %c0_i32, %c0_i32_0, %c0_i32_1 : i32, i32, i32
  }
  func.func @transform_7(%arg0: i32) -> (i32, i32, i32) {
    %c0_i32 = arith.constant 0 : i32
    %c0_i32_0 = arith.constant 0 : i32
    %c0_i32_1 = arith.constant 0 : i32
    %c0_i32_2 = arith.constant 0 : i32
    return %c0_i32, %c0_i32_0, %c0_i32_1 : i32, i32, i32
  }
  func.func @transform_8(%arg0: i32) -> (i32, i32, i32) {
    %c0_i32 = arith.constant 0 : i32
    %c0_i32_0 = arith.constant 0 : i32
    %c0_i32_1 = arith.constant 0 : i32
    %c0_i32_2 = arith.constant 0 : i32
    return %c0_i32, %c0_i32_0, %c0_i32_1 : i32, i32, i32
  }
  func.func @transform_9(%arg0: i32) -> (i32, i32, i32) {
    %c0_i32 = arith.constant 0 : i32
    %c0_i32_0 = arith.constant 0 : i32
    %c0_i32_1 = arith.constant 0 : i32
    %c0_i32_2 = arith.constant 0 : i32
    return %c0_i32, %c0_i32_0, %c0_i32_1 : i32, i32, i32
  }
  func.func @transform_10(%arg0: i32) -> (i32, i32, i32) {
    %c0_i32 = arith.constant 0 : i32
    %c0_i32_0 = arith.constant 0 : i32
    %c0_i32_1 = arith.constant 0 : i32
    %c0_i32_2 = arith.constant 0 : i32
    return %c0_i32, %c0_i32_0, %c0_i32_1 : i32, i32, i32
  }
  func.func @transform_11(%arg0: i32) -> (i32, i32, i32) {
    %c0_i32 = arith.constant 0 : i32
    %c0_i32_0 = arith.constant 0 : i32
    %c0_i32_1 = arith.constant 0 : i32
    %c0_i32_2 = arith.constant 0 : i32
    return %c0_i32, %c0_i32_0, %c0_i32_1 : i32, i32, i32
  }
  func.func @transform_12(%arg0: i32) -> (i32, i32, i32) {
    %c0_i32 = arith.constant 0 : i32
    %c0_i32_0 = arith.constant 0 : i32
    %c0_i32_1 = arith.constant 0 : i32
    %c0_i32_2 = arith.constant 0 : i32
    return %c0_i32, %c0_i32_0, %c0_i32_1 : i32, i32, i32
  }
  func.func @transform_13(%arg0: i32) -> (i32, i32, i32) {
    %c0_i32 = arith.constant 0 : i32
    %c0_i32_0 = arith.constant 0 : i32
    %c0_i32_1 = arith.constant 0 : i32
    %c0_i32_2 = arith.constant 0 : i32
    return %c0_i32, %c0_i32_0, %c0_i32_1 : i32, i32, i32
  }
  func.func @transform_14(%arg0: i32) -> (i32, i32, i32) {
    %c0_i32 = arith.constant 0 : i32
    %c0_i32_0 = arith.constant 0 : i32
    %c0_i32_1 = arith.constant 0 : i32
    %c0_i32_2 = arith.constant 0 : i32
    return %c0_i32, %c0_i32_0, %c0_i32_1 : i32, i32, i32
  }
  func.func @transform_15(%arg0: i32) -> (i32, i32, i32) {
    %c0_i32 = arith.constant 0 : i32
    %c0_i32_0 = arith.constant 0 : i32
    %c0_i32_1 = arith.constant 0 : i32
    %c0_i32_2 = arith.constant 0 : i32
    return %c0_i32, %c0_i32_0, %c0_i32_1 : i32, i32, i32
  }
  func.func @transform_16(%arg0: i32) -> (i32, i32) {
    %c0_i32 = arith.constant 0 : i32
    %c0_i32_0 = arith.constant 0 : i32
    %c0_i32_1 = arith.constant 0 : i32
    return %c0_i32, %c0_i32_0 : i32, i32
  }
  func.func @transform_17(%arg0: i32) -> (i32, i32) {
    %c0_i32 = arith.constant 0 : i32
    %c0_i32_0 = arith.constant 0 : i32
    %c0_i32_1 = arith.constant 0 : i32
    return %c0_i32, %c0_i32_0 : i32, i32
  }
  func.func @transform_18(%arg0: i32) -> (i32, i32, i32) {
    %c0_i32 = arith.constant 0 : i32
    %c0_i32_0 = arith.constant 0 : i32
    %c0_i32_1 = arith.constant 0 : i32
    return %arg0, %c0_i32, %c0_i32_0 : i32, i32, i32
  }
}

</mosaic_0001>

<llo_original>
// kernel: tpu_custom_call.1
$region0: #{tpu_custom_call.1}
  #allocation0 [shape = 'u32[]', space=smem, size = 0x4, offset = 0x4, fixed_abs, tag = 'smem constant byte address 0x4 - core index']
  #allocation1 [shape = 'u32[144,128]{1,0:T(1,128)}', space=vmem, size = 0x12000, scoped, tag = 'internal scratch']
  %s0 = inlined_call_operand.vmem [shape: f32[2,4,192], index: 0, kind: input, shape index: {}]
  %s1 = inlined_call_operand.vmem [shape: f32[192,32], index: 1, kind: input, shape index: {}]
  %s2 = inlined_call_operand.vmem [shape: f32[1,32], index: 2, kind: input, shape index: {}]
  %s3 = inlined_call_operand.vmem [shape: f32[4,32], index: 3, kind: input, shape index: {}]
  %s4 = inlined_call_operand.vmem [shape: f32[2,1,32], index: 4, kind: input, shape index: {}]
  %s5 = inlined_call_operand.vmem [shape: f32[2,1,32], index: 5, kind: input, shape index: {}]
  %s6 = inlined_call_operand.vmem [shape: f32[2,32,96], index: 6, kind: input, shape index: {}]
  %s7 = inlined_call_operand.vmem [shape: f32[2,1,96], index: 7, kind: input, shape index: {}]
  %s8 = inlined_call_operand.vmem [shape: f32[2,32,32], index: 8, kind: input, shape index: {}]
  %s9 = inlined_call_operand.vmem [shape: f32[2,1,32], index: 9, kind: input, shape index: {}]
  %s10 = inlined_call_operand.vmem [shape: f32[2,1,32], index: 10, kind: input, shape index: {}]
  %s11 = inlined_call_operand.vmem [shape: f32[2,1,32], index: 11, kind: input, shape index: {}]
  %s12 = inlined_call_operand.vmem [shape: f32[2,32,64], index: 12, kind: input, shape index: {}]
  %s13 = inlined_call_operand.vmem [shape: f32[2,1,64], index: 13, kind: input, shape index: {}]
  %s14 = inlined_call_operand.vmem [shape: f32[2,64,32], index: 14, kind: input, shape index: {}]
  %s15 = inlined_call_operand.vmem [shape: f32[2,1,32], index: 15, kind: input, shape index: {}]
  %s16 = inlined_call_operand.vmem [shape: f32[1,32], index: 16, kind: input, shape index: {}]
  %s17 = inlined_call_operand.vmem [shape: f32[1,32], index: 17, kind: input, shape index: {}]
  %s18 = inlined_call_operand.hbm [shape: f32[2,4,32], index: 18, kind: output, shape index: {}]
  %s19 = sld [smem:[#allocation0]]
  $region105: #{tpu_custom_call.1} parent=0
    _
  %s21 = ssub.s32 1, %s19
  %s22 = scalar_select 0, %s21, %s19
  $region1: #{tpu_custom_call.1} parent=0
    #allocation2 [shape = 'u8[4096]{0}', space=vmem, size = 0x1000, scoped, tag = 'output window, operand 0']
    #allocation3 [shape = 's32[2]{0}', space=sflag, size = 0x8, scoped, tag = 'scoped memory for tpu_custom_call.1']
    %23 = vsyncpa [#allocation3], 0
    %s24 = scalar_lea.sflag [#allocation3], 1
    %25 = vsyncpa %s24, 0
    loop: start=0, step=1, limit=4
    $region2: #{tpu_custom_call.1} parent=1 // loop_pre_header
      _
    $region3: #{tpu_custom_call.1} parent=1 // loop_header
      %s27 = sphi 0, %s31
      %p28 = scmp.ge.s32.totalorder %s27, 4
      %s37 = sphi 0, %s39
      %s40 = sphi 0, %s37
      %s41 = sphi 0, %s40
      %s57 = sphi 0, %s41
      %s61 = sphi 0, %s61
      %s63 = sphi 0, %s61
      %s64 = sphi 0, %s63
      %s78 = sphi 0, %s64
      %s82 = sphi 0, %s82
      %s84 = sphi 0, %s82
      %s85 = sphi 0, %s84
      %s99 = sphi 0, %s85
      %s103 = sphi 0, %s103
      %s105 = sphi 0, %s103
      %s106 = sphi 0, %s105
      %s120 = sphi 0, %s106
      %s124 = sphi 0, %s124
      %s126 = sphi 0, %s124
      %s127 = sphi 0, %s126
      %s141 = sphi 0, %s127
      %s145 = sphi 0, %s145
      %s147 = sphi 0, %s145
      %s148 = sphi 0, %s147
      %s162 = sphi 0, %s148
      %s166 = sphi 0, %s166
      %s168 = sphi 0, %s166
      %s169 = sphi 0, %s168
      %s183 = sphi 0, %s169
      %s187 = sphi 0, %s187
      %s189 = sphi 0, %s187
      %s190 = sphi 0, %s189
      %s204 = sphi 0, %s190
      %s208 = sphi 0, %s208
      %s210 = sphi 0, %s208
      %s211 = sphi 0, %s210
      %s225 = sphi 0, %s211
      %s229 = sphi 0, %s229
      %s231 = sphi 0, %s229
      %s232 = sphi 0, %s231
      %s246 = sphi 0, %s232
      %s250 = sphi 0, %s250
      %s252 = sphi 0, %s250
      %s253 = sphi 0, %s252
      %s267 = sphi 0, %s253
      %s271 = sphi 0, %s271
      %s273 = sphi 0, %s271
      %s274 = sphi 0, %s273
      %s288 = sphi 0, %s274
      %s292 = sphi 0, %s292
      %s294 = sphi 0, %s292
      %s295 = sphi 0, %s294
      %s309 = sphi 0, %s295
      %s313 = sphi 0, %s313
      %s315 = sphi 0, %s313
      %s316 = sphi 0, %s315
      %s330 = sphi 0, %s316
      %s334 = sphi 0, %s334
      %s336 = sphi 0, %s334
      %s337 = sphi 0, %s336
      %s351 = sphi 0, %s337
      %s355 = sphi 0, %s355
      %s357 = sphi 0, %s355
      %s358 = sphi 0, %s357
      %s372 = sphi 0, %s358
      %s376 = sphi 0, %s376
      %s378 = sphi 0, %s376
      %s379 = sphi 0, %s378
      %s393 = sphi 0, %s379
      %s397 = sphi 0, %s397
      %s399 = sphi 0, %s397
      %s400 = sphi 0, %s399
      %s414 = sphi 0, %s400
      %s420 = sphi 0, %s422
      %s423 = sphi 0, %s420
      %s424 = sphi 0, %s423
      %s440 = sphi 0, %s424
    $region4: #{tpu_custom_call.1} parent=1 // loop_header_branch
      %30 = sbr.rel (%p28) target = $region8
    $region5: #{tpu_custom_call.1} parent=1 // loop_body
      %s32 = ssub.s32 %s27, 1
      %s33 = ssub.s32 %s27, 2
      %s34 = sadd.s32 %s27, 1
      %s35 = ssub.s32 %s27, %s34
      %p36 = scmp.eq.s32.totalorder %s35, 0
      %s38 = sadd.s32 %s37, 1
      %s39 = scalar_select %p36, %s37, %s38
      %p42 = pneg %p36
      %p43 = scmp.eq.s32.totalorder %s27, 1
      %p44 = por %p42, %p43
      %p45 = scmp.ne.s32.totalorder %s37, %s40
      %p46 = scmp.eq.s32.totalorder %s27, 0
      %p47 = por %p45, %p46
      %p48 = scmp.ne.s32.totalorder %s37, %s40
      %p49 = scmp.eq.s32.totalorder %s32, 1
      %p50 = por %p48, %p49
      %p51 = scmp.ne.s32.totalorder %s40, %s41
      %p52 = scmp.eq.s32.totalorder %s32, 0
      %p53 = por %p51, %p52
      %p54 = scmp.ne.s32.totalorder %s40, %s41
      %p55 = scmp.eq.s32.totalorder %s33, 1
      %p56 = por %p54, %p55
      %p58 = scmp.ne.s32.totalorder %s41, %s57
      %p59 = scmp.eq.s32.totalorder %s33, 0
      %p60 = por %p58, %p59
      %s62 = sadd.s32 %s61, 1
      %p65 = scmp.eq.s32.totalorder %s27, 1
      %p66 = scmp.ne.s32.totalorder %s61, %s63
      %p67 = scmp.eq.s32.totalorder %s27, 0
      %p68 = por %p66, %p67
      %p69 = scmp.ne.s32.totalorder %s61, %s63
      %p70 = scmp.eq.s32.totalorder %s32, 1
      %p71 = por %p69, %p70
      %p72 = scmp.ne.s32.totalorder %s63, %s64
      %p73 = scmp.eq.s32.totalorder %s32, 0
      %p74 = por %p72, %p73
      %p75 = scmp.ne.s32.totalorder %s63, %s64
      %p76 = scmp.eq.s32.totalorder %s33, 1
      %p77 = por %p75, %p76
      %p79 = scmp.ne.s32.totalorder %s64, %s78
      %p80 = scmp.eq.s32.totalorder %s33, 0
      %p81 = por %p79, %p80
      %s83 = sadd.s32 %s82, 1
      %p86 = scmp.eq.s32.totalorder %s27, 1
      %p87 = scmp.ne.s32.totalorder %s82, %s84
      %p88 = scmp.eq.s32.totalorder %s27, 0
      %p89 = por %p87, %p88
      %p90 = scmp.ne.s32.totalorder %s82, %s84
      %p91 = scmp.eq.s32.totalorder %s32, 1
      %p92 = por %p90, %p91
      %p93 = scmp.ne.s32.totalorder %s84, %s85
      %p94 = scmp.eq.s32.totalorder %s32, 0
      %p95 = por %p93, %p94
      %p96 = scmp.ne.s32.totalorder %s84, %s85
      %p97 = scmp.eq.s32.totalorder %s33, 1
      %p98 = por %p96, %p97
      %p100 = scmp.ne.s32.totalorder %s85, %s99
      %p101 = scmp.eq.s32.totalorder %s33, 0
      %p102 = por %p100, %p101
      %s104 = sadd.s32 %s103, 1
      %p107 = scmp.eq.s32.totalorder %s27, 1
      %p108 = scmp.ne.s32.totalorder %s103, %s105
      %p109 = scmp.eq.s32.totalorder %s27, 0
      %p110 = por %p108, %p109
      %p111 = scmp.ne.s32.totalorder %s103, %s105
      %p112 = scmp.eq.s32.totalorder %s32, 1
      %p113 = por %p111, %p112
      %p114 = scmp.ne.s32.totalorder %s105, %s106
      %p115 = scmp.eq.s32.totalorder %s32, 0
      %p116 = por %p114, %p115
      %p117 = scmp.ne.s32.totalorder %s105, %s106
      %p118 = scmp.eq.s32.totalorder %s33, 1
      %p119 = por %p117, %p118
      %p121 = scmp.ne.s32.totalorder %s106, %s120
      %p122 = scmp.eq.s32.totalorder %s33, 0
      %p123 = por %p121, %p122
      %s125 = sadd.s32 %s124, 1
      %p128 = scmp.eq.s32.totalorder %s27, 1
      %p129 = scmp.ne.s32.totalorder %s124, %s126
      %p130 = scmp.eq.s32.totalorder %s27, 0
      %p131 = por %p129, %p130
      %p132 = scmp.ne.s32.totalorder %s124, %s126
      %p133 = scmp.eq.s32.totalorder %s32, 1
      %p134 = por %p132, %p133
      %p135 = scmp.ne.s32.totalorder %s126, %s127
      %p136 = scmp.eq.s32.totalorder %s32, 0
      %p137 = por %p135, %p136
      %p138 = scmp.ne.s32.totalorder %s126, %s127
      %p139 = scmp.eq.s32.totalorder %s33, 1
      %p140 = por %p138, %p139
      %p142 = scmp.ne.s32.totalorder %s127, %s141
      %p143 = scmp.eq.s32.totalorder %s33, 0
      %p144 = por %p142, %p143
      %s146 = sadd.s32 %s145, 1
      %p149 = scmp.eq.s32.totalorder %s27, 1
      %p150 = scmp.ne.s32.totalorder %s145, %s147
      %p151 = scmp.eq.s32.totalorder %s27, 0
      %p152 = por %p150, %p151
      %p153 = scmp.ne.s32.totalorder %s145, %s147
      %p154 = scmp.eq.s32.totalorder %s32, 1
      %p155 = por %p153, %p154
      %p156 = scmp.ne.s32.totalorder %s147, %s148
      %p157 = scmp.eq.s32.totalorder %s32, 0
      %p158 = por %p156, %p157
      %p159 = scmp.ne.s32.totalorder %s147, %s148
      %p160 = scmp.eq.s32.totalorder %s33, 1
      %p161 = por %p159, %p160
      %p163 = scmp.ne.s32.totalorder %s148, %s162
      %p164 = scmp.eq.s32.totalorder %s33, 0
      %p165 = por %p163, %p164
      %s167 = sadd.s32 %s166, 1
      %p170 = scmp.eq.s32.totalorder %s27, 1
      %p171 = scmp.ne.s32.totalorder %s166, %s168
      %p172 = scmp.eq.s32.totalorder %s27, 0
      %p173 = por %p171, %p172
      %p174 = scmp.ne.s32.totalorder %s166, %s168
      %p175 = scmp.eq.s32.totalorder %s32, 1
      %p176 = por %p174, %p175
      %p177 = scmp.ne.s32.totalorder %s168, %s169
      %p178 = scmp.eq.s32.totalorder %s32, 0
      %p179 = por %p177, %p178
      %p180 = scmp.ne.s32.totalorder %s168, %s169
      %p181 = scmp.eq.s32.totalorder %s33, 1
      %p182 = por %p180, %p181
      %p184 = scmp.ne.s32.totalorder %s169, %s183
      %p185 = scmp.eq.s32.totalorder %s33, 0
      %p186 = por %p184, %p185
      %s188 = sadd.s32 %s187, 1
      %p191 = scmp.eq.s32.totalorder %s27, 1
      %p192 = scmp.ne.s32.totalorder %s187, %s189
      %p193 = scmp.eq.s32.totalorder %s27, 0
      %p194 = por %p192, %p193
      %p195 = scmp.ne.s32.totalorder %s187, %s189
      %p196 = scmp.eq.s32.totalorder %s32, 1
      %p197 = por %p195, %p196
      %p198 = scmp.ne.s32.totalorder %s189, %s190
      %p199 = scmp.eq.s32.totalorder %s32, 0
      %p200 = por %p198, %p199
      %p201 = scmp.ne.s32.totalorder %s189, %s190
      %p202 = scmp.eq.s32.totalorder %s33, 1
      %p203 = por %p201, %p202
      %p205 = scmp.ne.s32.totalorder %s190, %s204
      %p206 = scmp.eq.s32.totalorder %s33, 0
      %p207 = por %p205, %p206
      %s209 = sadd.s32 %s208, 1
      %p212 = scmp.eq.s32.totalorder %s27, 1
      %p213 = scmp.ne.s32.totalorder %s208, %s210
      %p214 = scmp.eq.s32.totalorder %s27, 0
      %p215 = por %p213, %p214
      %p216 = scmp.ne.s32.totalorder %s208, %s210
      %p217 = scmp.eq.s32.totalorder %s32, 1
      %p218 = por %p216, %p217
      %p219 = scmp.ne.s32.totalorder %s210, %s211
      %p220 = scmp.eq.s32.totalorder %s32, 0
      %p221 = por %p219, %p220
      %p222 = scmp.ne.s32.totalorder %s210, %s211
      %p223 = scmp.eq.s32.totalorder %s33, 1
      %p224 = por %p222, %p223
      %p226 = scmp.ne.s32.totalorder %s211, %s225
      %p227 = scmp.eq.s32.totalorder %s33, 0
      %p228 = por %p226, %p227
      %s230 = sadd.s32 %s229, 1
      %p233 = scmp.eq.s32.totalorder %s27, 1
      %p234 = scmp.ne.s32.totalorder %s229, %s231
      %p235 = scmp.eq.s32.totalorder %s27, 0
      %p236 = por %p234, %p235
      %p237 = scmp.ne.s32.totalorder %s229, %s231
      %p238 = scmp.eq.s32.totalorder %s32, 1
      %p239 = por %p237, %p238
      %p240 = scmp.ne.s32.totalorder %s231, %s232
      %p241 = scmp.eq.s32.totalorder %s32, 0
      %p242 = por %p240, %p241
      %p243 = scmp.ne.s32.totalorder %s231, %s232
      %p244 = scmp.eq.s32.totalorder %s33, 1
      %p245 = por %p243, %p244
      %p247 = scmp.ne.s32.totalorder %s232, %s246
      %p248 = scmp.eq.s32.totalorder %s33, 0
      %p249 = por %p247, %p248
      %s251 = sadd.s32 %s250, 1
      %p254 = scmp.eq.s32.totalorder %s27, 1
      %p255 = scmp.ne.s32.totalorder %s250, %s252
      %p256 = scmp.eq.s32.totalorder %s27, 0
      %p257 = por %p255, %p256
      %p258 = scmp.ne.s32.totalorder %s250, %s252
      %p259 = scmp.eq.s32.totalorder %s32, 1
      %p260 = por %p258, %p259
      %p261 = scmp.ne.s32.totalorder %s252, %s253
      %p262 = scmp.eq.s32.totalorder %s32, 0
      %p263 = por %p261, %p262
      %p264 = scmp.ne.s32.totalorder %s252, %s253
      %p265 = scmp.eq.s32.totalorder %s33, 1
      %p266 = por %p264, %p265
      %p268 = scmp.ne.s32.totalorder %s253, %s267
      %p269 = scmp.eq.s32.totalorder %s33, 0
      %p270 = por %p268, %p269
      %s272 = sadd.s32 %s271, 1
      %p275 = scmp.eq.s32.totalorder %s27, 1
      %p276 = scmp.ne.s32.totalorder %s271, %s273
      %p277 = scmp.eq.s32.totalorder %s27, 0
      %p278 = por %p276, %p277
      %p279 = scmp.ne.s32.totalorder %s271, %s273
      %p280 = scmp.eq.s32.totalorder %s32, 1
      %p281 = por %p279, %p280
      %p282 = scmp.ne.s32.totalorder %s273, %s274
      %p283 = scmp.eq.s32.totalorder %s32, 0
      %p284 = por %p282, %p283
      %p285 = scmp.ne.s32.totalorder %s273, %s274
      %p286 = scmp.eq.s32.totalorder %s33, 1
      %p287 = por %p285, %p286
      %p289 = scmp.ne.s32.totalorder %s274, %s288
      %p290 = scmp.eq.s32.totalorder %s33, 0
      %p291 = por %p289, %p290
      %s293 = sadd.s32 %s292, 1
      %p296 = scmp.eq.s32.totalorder %s27, 1
      %p297 = scmp.ne.s32.totalorder %s292, %s294
      %p298 = scmp.eq.s32.totalorder %s27, 0
      %p299 = por %p297, %p298
      %p300 = scmp.ne.s32.totalorder %s292, %s294
      %p301 = scmp.eq.s32.totalorder %s32, 1
      %p302 = por %p300, %p301
      %p303 = scmp.ne.s32.totalorder %s294, %s295
      %p304 = scmp.eq.s32.totalorder %s32, 0
      %p305 = por %p303, %p304
      %p306 = scmp.ne.s32.totalorder %s294, %s295
      %p307 = scmp.eq.s32.totalorder %s33, 1
      %p308 = por %p306, %p307
      %p310 = scmp.ne.s32.totalorder %s295, %s309
      %p311 = scmp.eq.s32.totalorder %s33, 0
      %p312 = por %p310, %p311
      %s314 = sadd.s32 %s313, 1
      %p317 = scmp.eq.s32.totalorder %s27, 1
      %p318 = scmp.ne.s32.totalorder %s313, %s315
      %p319 = scmp.eq.s32.totalorder %s27, 0
      %p320 = por %p318, %p319
      %p321 = scmp.ne.s32.totalorder %s313, %s315
      %p322 = scmp.eq.s32.totalorder %s32, 1
      %p323 = por %p321, %p322
      %p324 = scmp.ne.s32.totalorder %s315, %s316
      %p325 = scmp.eq.s32.totalorder %s32, 0
      %p326 = por %p324, %p325
      %p327 = scmp.ne.s32.totalorder %s315, %s316
      %p328 = scmp.eq.s32.totalorder %s33, 1
      %p329 = por %p327, %p328
      %p331 = scmp.ne.s32.totalorder %s316, %s330
      %p332 = scmp.eq.s32.totalorder %s33, 0
      %p333 = por %p331, %p332
      %s335 = sadd.s32 %s334, 1
      %p338 = scmp.eq.s32.totalorder %s27, 1
      %p339 = scmp.ne.s32.totalorder %s334, %s336
      %p340 = scmp.eq.s32.totalorder %s27, 0
      %p341 = por %p339, %p340
      %p342 = scmp.ne.s32.totalorder %s334, %s336
      %p343 = scmp.eq.s32.totalorder %s32, 1
      %p344 = por %p342, %p343
      %p345 = scmp.ne.s32.totalorder %s336, %s337
      %p346 = scmp.eq.s32.totalorder %s32, 0
      %p347 = por %p345, %p346
      %p348 = scmp.ne.s32.totalorder %s336, %s337
      %p349 = scmp.eq.s32.totalorder %s33, 1
      %p350 = por %p348, %p349
      %p352 = scmp.ne.s32.totalorder %s337, %s351
      %p353 = scmp.eq.s32.totalorder %s33, 0
      %p354 = por %p352, %p353
      %s356 = sadd.s32 %s355, 1
      %p359 = scmp.eq.s32.totalorder %s27, 1
      %p360 = scmp.ne.s32.totalorder %s355, %s357
      %p361 = scmp.eq.s32.totalorder %s27, 0
      %p362 = por %p360, %p361
      %p363 = scmp.ne.s32.totalorder %s355, %s357
      %p364 = scmp.eq.s32.totalorder %s32, 1
      %p365 = por %p363, %p364
      %p366 = scmp.ne.s32.totalorder %s357, %s358
      %p367 = scmp.eq.s32.totalorder %s32, 0
      %p368 = por %p366, %p367
      %p369 = scmp.ne.s32.totalorder %s357, %s358
      %p370 = scmp.eq.s32.totalorder %s33, 1
      %p371 = por %p369, %p370
      %p373 = scmp.ne.s32.totalorder %s358, %s372
      %p374 = scmp.eq.s32.totalorder %s33, 0
      %p375 = por %p373, %p374
      %s377 = sadd.s32 %s376, 1
      %p380 = scmp.eq.s32.totalorder %s27, 1
      %p381 = scmp.ne.s32.totalorder %s376, %s378
      %p382 = scmp.eq.s32.totalorder %s27, 0
      %p383 = por %p381, %p382
      %p384 = scmp.ne.s32.totalorder %s376, %s378
      %p385 = scmp.eq.s32.totalorder %s32, 1
      %p386 = por %p384, %p385
      %p387 = scmp.ne.s32.totalorder %s378, %s379
      %p388 = scmp.eq.s32.totalorder %s32, 0
      %p389 = por %p387, %p388
      %p390 = scmp.ne.s32.totalorder %s378, %s379
      %p391 = scmp.eq.s32.totalorder %s33, 1
      %p392 = por %p390, %p391
      %p394 = scmp.ne.s32.totalorder %s379, %s393
      %p395 = scmp.eq.s32.totalorder %s33, 0
      %p396 = por %p394, %p395
      %s398 = sadd.s32 %s397, 1
      %p401 = scmp.eq.s32.totalorder %s27, 1
      %p402 = scmp.ne.s32.totalorder %s397, %s399
      %p403 = scmp.eq.s32.totalorder %s27, 0
      %p404 = por %p402, %p403
      %p405 = scmp.ne.s32.totalorder %s397, %s399
      %p406 = scmp.eq.s32.totalorder %s32, 1
      %p407 = por %p405, %p406
      %p408 = scmp.ne.s32.totalorder %s399, %s400
      %p409 = scmp.eq.s32.totalorder %s32, 0
      %p410 = por %p408, %p409
      %p411 = scmp.ne.s32.totalorder %s399, %s400
      %p412 = scmp.eq.s32.totalorder %s33, 1
      %p413 = por %p411, %p412
      %p415 = scmp.ne.s32.totalorder %s400, %s414
      %p416 = scmp.eq.s32.totalorder %s33, 0
      %p417 = por %p415, %p416
      %s418 = ssub.s32 %s27, %s34
      %p419 = scmp.eq.s32.totalorder %s418, 0
      %s421 = sadd.s32 %s420, 1
      %s422 = scalar_select %p419, %s420, %s421
      %p425 = pneg %p419
      %p426 = scmp.eq.s32.totalorder %s27, 1
      %p427 = por %p425, %p426
      %p428 = scmp.ne.s32.totalorder %s420, %s423
      %p429 = scmp.eq.s32.totalorder %s27, 0
      %p430 = por %p428, %p429
      %p431 = scmp.ne.s32.totalorder %s420, %s423
      %p432 = scmp.eq.s32.totalorder %s32, 1
      %p433 = por %p431, %p432
      %p434 = scmp.ne.s32.totalorder %s423, %s424
      %p435 = scmp.eq.s32.totalorder %s32, 0
      %p436 = por %p434, %p435
      %p437 = scmp.ne.s32.totalorder %s423, %s424
      %p438 = scmp.eq.s32.totalorder %s33, 1
      %p439 = por %p437, %p438
      %p441 = scmp.ne.s32.totalorder %s424, %s440
      %p442 = scmp.eq.s32.totalorder %s33, 0
      %p443 = por %p441, %p442
      %p444 = scmp.le.s32.totalorder 1, %s27
      %p445 = scmp.lt.s32.totalorder %s27, 3
      %p446 = pnand %p444, %p445
      %p447 = pneg %p446
      // Predicated region
      $region9: #{tpu_custom_call.1} parent=5 // pred_check
        _
      $region10: #{tpu_custom_call.1} parent=5 // pred_check_branch
        %449 = sbr.rel (%p446) target = $region12
      $region11: #{tpu_custom_call.1} parent=5 // pred_region
        %s450 = ssub.s32 %s27, 1
        // Predicated region
        $region13: #{tpu_custom_call.1} parent=11 // pred_check
          %p451 = pneg %p74
        $region14: #{tpu_custom_call.1} parent=11 // pred_check_branch
          %453 = sbr.rel (%p451) target = $region16
        $region15: #{tpu_custom_call.1} parent=11 // pred_region
          _
        $region16: #{tpu_custom_call.1} parent=11 // pred_fallthru
          _
        // Predicated region
        $region17: #{tpu_custom_call.1} parent=11 // pred_check
          %p454 = pneg %p95
        $region18: #{tpu_custom_call.1} parent=11 // pred_check_branch
          %456 = sbr.rel (%p454) target = $region20
        $region19: #{tpu_custom_call.1} parent=11 // pred_region
          _
        $region20: #{tpu_custom_call.1} parent=11 // pred_fallthru
          _
        // Predicated region
        $region21: #{tpu_custom_call.1} parent=11 // pred_check
          %p457 = pneg %p116
        $region22: #{tpu_custom_call.1} parent=11 // pred_check_branch
          %459 = sbr.rel (%p457) target = $region24
        $region23: #{tpu_custom_call.1} parent=11 // pred_region
          _
        $region24: #{tpu_custom_call.1} parent=11 // pred_fallthru
          _
        // Predicated region
        $region25: #{tpu_custom_call.1} parent=11 // pred_check
          %p460 = pneg %p137
        $region26: #{tpu_custom_call.1} parent=11 // pred_check_branch
          %462 = sbr.rel (%p460) target = $region28
        $region27: #{tpu_custom_call.1} parent=11 // pred_region
          _
        $region28: #{tpu_custom_call.1} parent=11 // pred_fallthru
          _
        // Predicated region
        $region29: #{tpu_custom_call.1} parent=11 // pred_check
          %p463 = pneg %p158
        $region30: #{tpu_custom_call.1} parent=11 // pred_check_branch
          %465 = sbr.rel (%p463) target = $region32
        $region31: #{tpu_custom_call.1} parent=11 // pred_region
          _
        $region32: #{tpu_custom_call.1} parent=11 // pred_fallthru
          _
        // Predicated region
        $region33: #{tpu_custom_call.1} parent=11 // pred_check
          %p466 = pneg %p179
        $region34: #{tpu_custom_call.1} parent=11 // pred_check_branch
          %468 = sbr.rel (%p466) target = $region36
        $region35: #{tpu_custom_call.1} parent=11 // pred_region
          _
        $region36: #{tpu_custom_call.1} parent=11 // pred_fallthru
          _
        // Predicated region
        $region37: #{tpu_custom_call.1} parent=11 // pred_check
          %p469 = pneg %p200
        $region38: #{tpu_custom_call.1} parent=11 // pred_check_branch
          %471 = sbr.rel (%p469) target = $region40
        $region39: #{tpu_custom_call.1} parent=11 // pred_region
          _
        $region40: #{tpu_custom_call.1} parent=11 // pred_fallthru
          _
        // Predicated region
        $region41: #{tpu_custom_call.1} parent=11 // pred_check
          %p472 = pneg %p221
        $region42: #{tpu_custom_call.1} parent=11 // pred_check_branch
          %474 = sbr.rel (%p472) target = $region44
        $region43: #{tpu_custom_call.1} parent=11 // pred_region
          _
        $region44: #{tpu_custom_call.1} parent=11 // pred_fallthru
          _
        // Predicated region
        $region45: #{tpu_custom_call.1} parent=11 // pred_check
          %p475 = pneg %p242
        $region46: #{tpu_custom_call.1} parent=11 // pred_check_branch
          %477 = sbr.rel (%p475) target = $region48
        $region47: #{tpu_custom_call.1} parent=11 // pred_region
          _
        $region48: #{tpu_custom_call.1} parent=11 // pred_fallthru
          _
        // Predicated region
        $region49: #{tpu_custom_call.1} parent=11 // pred_check
          %p478 = pneg %p263
        $region50: #{tpu_custom_call.1} parent=11 // pred_check_branch
          %480 = sbr.rel (%p478) target = $region52
        $region51: #{tpu_custom_call.1} parent=11 // pred_region
          _
        $region52: #{tpu_custom_call.1} parent=11 // pred_fallthru
          _
        // Predicated region
        $region53: #{tpu_custom_call.1} parent=11 // pred_check
          %p481 = pneg %p284
        $region54: #{tpu_custom_call.1} parent=11 // pred_check_branch
          %483 = sbr.rel (%p481) target = $region56
        $region55: #{tpu_custom_call.1} parent=11 // pred_region
          _
        $region56: #{tpu_custom_call.1} parent=11 // pred_fallthru
          _
        // Predicated region
        $region57: #{tpu_custom_call.1} parent=11 // pred_check
          %p484 = pneg %p305
        $region58: #{tpu_custom_call.1} parent=11 // pred_check_branch
          %486 = sbr.rel (%p484) target = $region60
        $region59: #{tpu_custom_call.1} parent=11 // pred_region
          _
        $region60: #{tpu_custom_call.1} parent=11 // pred_fallthru
          _
        // Predicated region
        $region61: #{tpu_custom_call.1} parent=11 // pred_check
          %p487 = pneg %p326
        $region62: #{tpu_custom_call.1} parent=11 // pred_check_branch
          %489 = sbr.rel (%p487) target = $region64
        $region63: #{tpu_custom_call.1} parent=11 // pred_region
          _
        $region64: #{tpu_custom_call.1} parent=11 // pred_fallthru
          _
        // Predicated region
        $region65: #{tpu_custom_call.1} parent=11 // pred_check
          %p490 = pneg %p347
        $region66: #{tpu_custom_call.1} parent=11 // pred_check_branch
          %492 = sbr.rel (%p490) target = $region68
        $region67: #{tpu_custom_call.1} parent=11 // pred_region
          _
        $region68: #{tpu_custom_call.1} parent=11 // pred_fallthru
          _
        // Predicated region
        $region69: #{tpu_custom_call.1} parent=11 // pred_check
          %p493 = pneg %p368
        $region70: #{tpu_custom_call.1} parent=11 // pred_check_branch
          %495 = sbr.rel (%p493) target = $region72
        $region71: #{tpu_custom_call.1} parent=11 // pred_region
          _
        $region72: #{tpu_custom_call.1} parent=11 // pred_fallthru
          _
        // Predicated region
        $region73: #{tpu_custom_call.1} parent=11 // pred_check
          %p496 = pneg %p389
        $region74: #{tpu_custom_call.1} parent=11 // pred_check_branch
          %498 = sbr.rel (%p496) target = $region76
        $region75: #{tpu_custom_call.1} parent=11 // pred_region
          _
        $region76: #{tpu_custom_call.1} parent=11 // pred_fallthru
          _
        // Predicated region
        $region77: #{tpu_custom_call.1} parent=11 // pred_check
          %p499 = pneg %p410
        $region78: #{tpu_custom_call.1} parent=11 // pred_check_branch
          %501 = sbr.rel (%p499) target = $region80
        $region79: #{tpu_custom_call.1} parent=11 // pred_region
          _
        $region80: #{tpu_custom_call.1} parent=11 // pred_fallthru
          _
      $region12: #{tpu_custom_call.1} parent=5 // pred_fallthru
        _
      %p502 = scmp.lt.s32.totalorder %s27, 2
      // Predicated region
      $region81: #{tpu_custom_call.1} parent=5 // pred_check
        %p503 = pneg %p502
      $region82: #{tpu_custom_call.1} parent=5 // pred_check_branch
        %505 = sbr.rel (%p503) target = $region84
      $region83: #{tpu_custom_call.1} parent=5 // pred_region
        // Predicated region
        $region85: #{tpu_custom_call.1} parent=83 // pred_check
          %p506 = pneg %p47
        $region86: #{tpu_custom_call.1} parent=83 // pred_check_branch
          %508 = sbr.rel (%p506) target = $region88
        $region87: #{tpu_custom_call.1} parent=83 // pred_region
          %p509 = scmp.lt.s32.totalorder %s27, 1
          %s510 = scalar_select %p509, %s27, 1
          %s511 = smul.addr %s510, 2
          %s512 = smul.addr %s511, 4
          %s513 = scalar_lea.vmem %s0, %s512
        $region88: #{tpu_custom_call.1} parent=83 // pred_fallthru
          _
      $region84: #{tpu_custom_call.1} parent=5 // pred_fallthru
        _
      %p514 = scmp.le.s32.totalorder 1, %s27
      %p515 = scmp.lt.s32.totalorder %s27, 3
      %p516 = pnand %p514, %p515
      %p517 = pneg %p516
      // Predicated region
      $region89: #{tpu_custom_call.1} parent=5 // pred_check
        _
      $region90: #{tpu_custom_call.1} parent=5 // pred_check_branch
        %519 = sbr.rel (%p516) target = $region92
      $region91: #{tpu_custom_call.1} parent=5 // pred_region
        %s520 = ssub.s32 %s27, 1
        %p521 = scmp.lt.s32.totalorder %s32, 1
        %s522 = scalar_select %p521, %s32, 1
        %s523 = smul.addr %s522, 2
        %s524 = smul.addr %s523, 4
        %s525 = scalar_lea.vmem %s0, %s524
        %p526 = pneg %p53
        %p527 = pneg %p50
        %p528 = pneg %p74
        %p529 = pneg %p71
        %p530 = pneg %p95
        %p531 = pneg %p92
        %p532 = pneg %p116
        %p533 = pneg %p113
        %p534 = pneg %p137
        %p535 = pneg %p134
        %p536 = pneg %p158
        %p537 = pneg %p155
        %p538 = pneg %p179
        %p539 = pneg %p176
        %p540 = pneg %p200
        %p541 = pneg %p197
        %p542 = pneg %p221
        %p543 = pneg %p218
        %p544 = pneg %p242
        %p545 = pneg %p239
        %p546 = pneg %p263
        %p547 = pneg %p260
        %p548 = pneg %p284
        %p549 = pneg %p281
        %p550 = pneg %p305
        %p551 = pneg %p302
        %p552 = pneg %p326
        %p553 = pneg %p323
        %p554 = pneg %p347
        %p555 = pneg %p344
        %p556 = pneg %p368
        %p557 = pneg %p365
        %p558 = pneg %p389
        %p559 = pneg %p386
        %p560 = pneg %p410
        %p561 = pneg %p407
        %p562 = pneg %p436
        %p563 = pneg %p433
        %s564 = sand.u32 %s423, 1
        %s565 = scalar_lea.sflag [#allocation3], %s564
        %s566 = sand.u32 %s423, 1
        %s567 = smul.addr %s566, 4
        %s568 = scalar_lea.vmem [#allocation2], %s567
        %p569 = scmp.lt.s32.totalorder %s32, 1
        %s570 = scalar_select %p569, %s32, 1
        %s571 = smul.addr %s570, 2
        %s572 = smul.addr %s571, 4
        %s573 = scalar_lea.vmem %s0, %s572
        %v574 = vld [vmem:[%s573] sm:$0xff]
        %v575 = vld [vmem:[%s1] sm:$0xff]
        %v576 = vld [vmem:[%s1 + $0x8] sm:$0xff]
        %v577 = vld [vmem:[%s1 + $0x10] sm:$0xff]
        %v578 = vld [vmem:[%s1 + $0x18] sm:$0xff]
        %v579 = vld [vmem:[%s1 + $0x20] sm:$0xff]
        %v580 = vld [vmem:[%s1 + $0x28] sm:$0xff]
        %v581 = vld [vmem:[%s1 + $0x30] sm:$0xff]
        %v582 = vld [vmem:[%s1 + $0x38] sm:$0xff]
        %v583 = vld [vmem:[%s1 + $0x40] sm:$0xff]
        %v584 = vld [vmem:[%s1 + $0x48] sm:$0xff]
        %v585 = vld [vmem:[%s1 + $0x50] sm:$0xff]
        %v586 = vld [vmem:[%s1 + $0x58] sm:$0xff]
        %v587 = vld [vmem:[%s1 + $0x60] sm:$0xff]
        %v588 = vld [vmem:[%s1 + $0x68] sm:$0xff]
        %v589 = vld [vmem:[%s1 + $0x70] sm:$0xff]
        %v590 = vld [vmem:[%s1 + $0x78] sm:$0xff]
        %v591 = vld [vmem:[%s1 + $0x80] sm:$0xff]
        %v592 = vld [vmem:[%s1 + $0x88] sm:$0xff]
        %v593 = vld [vmem:[%s1 + $0x90] sm:$0xff]
        %v594 = vld [vmem:[%s1 + $0x98] sm:$0xff]
        %v595 = vld [vmem:[%s1 + $0xa0] sm:$0xff]
        %v596 = vld [vmem:[%s1 + $0xa8] sm:$0xff]
        %v597 = vld [vmem:[%s1 + $0xb0] sm:$0xff]
        %v598 = vld [vmem:[%s1 + $0xb8] sm:$0xff]
        %v599 = vld [vmem:[%s2] sm:$0x1]
        %v601 = vlaneseq
        %v602 = vshrl.u32 %v601, 7
        %v603 = vsub.s32 0, %v602
        %v604 = vrot.slane %v599, %v603
        %v607 = vcombine.high %v574, %v574
        %vm608 = vcmask 523264
        %v609 = vsel %vm608, %v607, 0
        %611 = vmatprep.subr.mxu0 0.0
        %612 = vmatpush1.msra.mxu0 %v590
        %613 = vmatprep.subr.mxu0 0.0
        %614 = vmatpush1.msra.mxu0 %v589
        %615 = vmatprep.subr.mxu0 0.0
        %616 = vmatpush1.msra.mxu0 %v588
        %617 = vmatprep.subr.mxu0 0.0
        %618 = vmatpush1.msra.mxu0 %v587
        %619 = vmatprep.subr.mxu0 0.0
        %620 = vmatpush1.msra.mxu0 %v586
        %621 = vmatprep.subr.mxu0 0.0
        %622 = vmatpush1.msra.mxu0 %v585
        %623 = vmatprep.subr.mxu0 0.0
        %624 = vmatpush1.msra.mxu0 %v584
        %625 = vmatprep.subr.mxu0 0.0
        %626 = vmatpush1.msra.mxu0 %v583
        %627 = vmatprep.subr.mxu0 0.0
        %628 = vmatpush1.msra.mxu0 %v582
        %629 = vmatprep.subr.mxu0 0.0
        %630 = vmatpush1.msra.mxu0 %v581
        %631 = vmatprep.subr.mxu0 0.0
        %632 = vmatpush1.msra.mxu0 %v580
        %633 = vmatprep.subr.mxu0 0.0
        %634 = vmatpush1.msra.mxu0 %v579
        %635 = vmatprep.subr.mxu0 0.0
        %636 = vmatpush1.msra.mxu0 %v578
        %637 = vmatprep.subr.mxu0 0.0
        %638 = vmatpush1.msra.mxu0 %v577
        %639 = vmatprep.subr.mxu0 0.0
        %640 = vmatpush1.msra.mxu0 %v576
        %641 = vmatprep.subr.mxu0 0.0
        %642 = vmatpush1.msra.mxu0 %v575
        %643 = vmatprep.subr.mxu0 0.0
        %644 = vmatpush2.msra.mxu0 0.0
        %645 = vmatprep.subr.mxu0 0.0
        %646 = vmatpush2.msra.mxu0 0.0
        %647 = vmatprep.subr.mxu0 0.0
        %648 = vmatpush2.msra.mxu0 0.0
        %649 = vmatprep.subr.mxu0 0.0
        %650 = vmatpush2.msra.mxu0 0.0
        %651 = vmatprep.subr.mxu0 0.0
        %652 = vmatpush2.msra.mxu0 0.0
        %653 = vmatprep.subr.mxu0 0.0
        %654 = vmatpush2.msra.mxu0 0.0
        %655 = vmatprep.subr.mxu0 0.0
        %656 = vmatpush2.msra.mxu0 0.0
        %657 = vmatprep.subr.mxu0 0.0
        %658 = vmatpush2.msra.mxu0 0.0
        %659 = vmatprep.subr.mxu0 0.0
        %660 = vmatpush2.msra.mxu0 %v598
        %661 = vmatprep.subr.mxu0 0.0
        %662 = vmatpush2.msra.mxu0 %v597
        %663 = vmatprep.subr.mxu0 0.0
        %664 = vmatpush2.msra.mxu0 %v596
        %665 = vmatprep.subr.mxu0 0.0
        %666 = vmatpush2.msra.mxu0 %v595
        %667 = vmatprep.subr.mxu0 0.0
        %668 = vmatpush2.msra.mxu0 %v594
        %669 = vmatprep.subr.mxu0 0.0
        %670 = vmatpush2.msra.mxu0 %v593
        %671 = vmatprep.subr.mxu0 0.0
        %672 = vmatpush2.msra.mxu0 %v592
        %673 = vmatprep.subr.mxu0 0.0
        %674 = vmatpush2.msra.mxu0 %v591
        %675 = vmatprep.mubr.f32.mxu0 %v609
        %676 = vmatmul.mubr.f32.gmra.mxu0 %v574
        %v677 = vpop.f32.mrf.mxu0
        %v678 = vadd.f32 %v604, %v677
        %v679 = vpop.f32.mrf.mxu0
        %680 = vdwg.mxu0
        %v681 = vld [vmem:[%s3] sm:$0xf]
        %v682 = vadd.f32 %v678, %v681
        %v683 = vld [vmem:[%s4] sm:$0x1]
        %v684 = vld [vmem:[%s5] sm:$0x1]
        %vm685 = vcmask 257024
        %v686 = vsel %vm685, %v682, 0.0
        %687 = vadd.xlane.f32.xlu0 %v686
        %v688 = vpop.xlane.xlu0 %687
        %v689 = vrcp.pop 32.0
        %v690 = vmul.f32 %v688, %v689
        %v691 = vsub.f32 %v682, %v690
        %v692 = vmul.f32 %v691, %v691
        %v693 = vsel %vm685, %v692, 0.0
        %694 = vadd.xlane.f32.xlu0 %v693
        %v695 = vpop.xlane.xlu0 %694
        %v696 = vmul.f32 %v695, %v689
        %v697 = vadd.f32 %v696, 1e-06
        %v698 = vrsqrt.pop %v697
        %v699 = vmul.f32 %v691, %v698
        %v701 = vlaneseq
        %v702 = vshrl.u32 %v701, 7
        %v703 = vsub.s32 0, %v702
        %v704 = vrot.slane %v683, %v703
        %v706 = vmul.f32 %v699, %v704
        %v708 = vlaneseq
        %v709 = vshrl.u32 %v708, 7
        %v710 = vsub.s32 0, %v709
        %v711 = vrot.slane %v684, %v710
        %v713 = vadd.f32 %v706, %v711
        %v714 = vld [vmem:[%s6] sm:$0xff]
        %v715 = vld [vmem:[%s6 + $0x8] sm:$0xff]
        %v716 = vld [vmem:[%s6 + $0x10] sm:$0xff]
        %v717 = vld [vmem:[%s6 + $0x18] sm:$0xff]
        %v718 = vld [vmem:[%s7] sm:$0x1]
        %v720 = vlaneseq
        %v721 = vshrl.u32 %v720, 7
        %v722 = vsub.s32 0, %v721
        %v723 = vrot.slane %v718, %v722
        %vm725 = vcmask 261120
        %v727 = vsel %vm725, %v713, 0
        %729 = vmatprep.subr.mxu0 0.0
        %730 = vmatpush1.msra.mxu0 0.0
        %731 = vmatprep.subr.mxu0 0.0
        %732 = vmatpush1.msra.mxu0 0.0
        %733 = vmatprep.subr.mxu0 0.0
        %734 = vmatpush1.msra.mxu0 0.0
        %735 = vmatprep.subr.mxu0 0.0
        %736 = vmatpush1.msra.mxu0 0.0
        %737 = vmatprep.subr.mxu0 0.0
        %738 = vmatpush1.msra.mxu0 0.0
        %739 = vmatprep.subr.mxu0 0.0
        %740 = vmatpush1.msra.mxu0 0.0
        %741 = vmatprep.subr.mxu0 0.0
        %742 = vmatpush1.msra.mxu0 0.0
        %743 = vmatprep.subr.mxu0 0.0
        %744 = vmatpush1.msra.mxu0 0.0
        %745 = vmatprep.subr.mxu0 0.0
        %746 = vmatpush1.msra.mxu0 0.0
        %747 = vmatprep.subr.mxu0 0.0
        %748 = vmatpush1.msra.mxu0 0.0
        %749 = vmatprep.subr.mxu0 0.0
        %750 = vmatpush1.msra.mxu0 0.0
        %751 = vmatprep.subr.mxu0 0.0
        %752 = vmatpush1.msra.mxu0 0.0
        %753 = vmatprep.subr.mxu0 0.0
        %754 = vmatpush1.msra.mxu0 %v717
        %755 = vmatprep.subr.mxu0 0.0
        %756 = vmatpush1.msra.mxu0 %v716
        %757 = vmatprep.subr.mxu0 0.0
        %758 = vmatpush1.msra.mxu0 %v715
        %759 = vmatprep.subr.mxu0 0.0
        %760 = vmatpush1.msra.mxu0 %v714
        %761 = vmatprep.subr.mxu0 0.0
        %762 = vmatpush2.msra.mxu0 0.0
        %763 = vmatprep.subr.mxu0 0.0
        %764 = vmatpush2.msra.mxu0 0.0
        %765 = vmatprep.subr.mxu0 0.0
        %766 = vmatpush2.msra.mxu0 0.0
        %767 = vmatprep.subr.mxu0 0.0
        %768 = vmatpush2.msra.mxu0 0.0
        %769 = vmatprep.subr.mxu0 0.0
        %770 = vmatpush2.msra.mxu0 0.0
        %771 = vmatprep.subr.mxu0 0.0
        %772 = vmatpush2.msra.mxu0 0.0
        %773 = vmatprep.subr.mxu0 0.0
        %774 = vmatpush2.msra.mxu0 0.0
        %775 = vmatprep.subr.mxu0 0.0
        %776 = vmatpush2.msra.mxu0 0.0
        %777 = vmatprep.subr.mxu0 0.0
        %778 = vmatpush2.msra.mxu0 0.0
        %779 = vmatprep.subr.mxu0 0.0
        %780 = vmatpush2.msra.mxu0 0.0
        %781 = vmatprep.subr.mxu0 0.0
        %782 = vmatpush2.msra.mxu0 0.0
        %783 = vmatprep.subr.mxu0 0.0
        %784 = vmatpush2.msra.mxu0 0.0
        %785 = vmatprep.subr.mxu0 0.0
        %786 = vmatpush2.msra.mxu0 0.0
        %787 = vmatprep.subr.mxu0 0.0
        %788 = vmatpush2.msra.mxu0 0.0
        %789 = vmatprep.subr.mxu0 0.0
        %790 = vmatpush2.msra.mxu0 0.0
        %791 = vmatprep.subr.mxu0 0.0
        %792 = vmatpush2.msra.mxu0 0.0
        %793 = vmatprep.mubr.f32.mxu0 0.0
        %794 = vmatmul.mubr.f32.gmra.mxu0 %v727
        %v795 = vpop.f32.mrf.mxu0
        %v796 = vadd.f32 %v723, %v795
        %v797 = vpop.f32.mrf.mxu0
        %798 = vdwg.mxu0
        %800 = vrot.lane.b32.xlu0 %v796, 120
        %v801 = vpop.permute.xlu0 %800
        %802 = vrot.lane.b32.xlu0 %v796, 112
        %v803 = vpop.permute.xlu0 %802
        %804 = vrot.lane.b32.xlu0 %v796, 104
        %v805 = vpop.permute.xlu0 %804
        %806 = vrot.lane.b32.xlu0 %v796, 96
        %v807 = vpop.permute.xlu0 %806
        %vm808 = vcmask 64512
        %v809 = vsel %vm808, %v796, 0
        %v811 = vsel %vm808, %v807, 0
        %813 = vmatprep.subr.mxu0 0.0
        %814 = vmatpush1.xpose.msra.mxu0 0.0
        %815 = vmatprep.subr.mxu0 0.0
        %816 = vmatpush1.xpose.msra.mxu0 0.0
        %817 = vmatprep.subr.mxu0 0.0
        %818 = vmatpush1.xpose.msra.mxu0 0.0
        %819 = vmatprep.subr.mxu0 0.0
        %820 = vmatpush1.xpose.msra.mxu0 0.0
        %821 = vmatprep.subr.mxu0 0.0
        %822 = vmatpush1.xpose.msra.mxu0 0.0
        %823 = vmatprep.subr.mxu0 0.0
        %824 = vmatpush1.xpose.msra.mxu0 0.0
        %825 = vmatprep.subr.mxu0 0.0
        %826 = vmatpush1.xpose.msra.mxu0 0.0
        %827 = vmatprep.subr.mxu0 0.0
        %828 = vmatpush1.xpose.msra.mxu0 0.0
        %829 = vmatprep.subr.mxu0 0.0
        %830 = vmatpush1.xpose.msra.mxu0 0.0
        %831 = vmatprep.subr.mxu0 0.0
        %832 = vmatpush1.xpose.msra.mxu0 0.0
        %833 = vmatprep.subr.mxu0 0.0
        %834 = vmatpush1.xpose.msra.mxu0 0.0
        %835 = vmatprep.subr.mxu0 0.0
        %836 = vmatpush1.xpose.msra.mxu0 0.0
        %837 = vmatprep.subr.mxu0 0.0
        %838 = vmatpush1.xpose.msra.mxu0 0.0
        %839 = vmatprep.subr.mxu0 0.0
        %840 = vmatpush1.xpose.msra.mxu0 0.0
        %841 = vmatprep.subr.mxu0 0.0
        %842 = vmatpush1.xpose.msra.mxu0 0.0
        %843 = vmatprep.subr.mxu0 0.0
        %844 = vmatpush1.xpose.msra.mxu0 %v811
        %845 = vmatprep.subr.mxu0 0.0
        %846 = vmatpush2.xpose.msra.mxu0 0.0
        %847 = vmatprep.subr.mxu0 0.0
        %848 = vmatpush2.xpose.msra.mxu0 0.0
        %849 = vmatprep.subr.mxu0 0.0
        %850 = vmatpush2.xpose.msra.mxu0 0.0
        %851 = vmatprep.subr.mxu0 0.0
        %852 = vmatpush2.xpose.msra.mxu0 0.0
        %853 = vmatprep.subr.mxu0 0.0
        %854 = vmatpush2.xpose.msra.mxu0 0.0
        %855 = vmatprep.subr.mxu0 0.0
        %856 = vmatpush2.xpose.msra.mxu0 0.0
        %857 = vmatprep.subr.mxu0 0.0
        %858 = vmatpush2.xpose.msra.mxu0 0.0
        %859 = vmatprep.subr.mxu0 0.0
        %860 = vmatpush2.xpose.msra.mxu0 0.0
        %861 = vmatprep.subr.mxu0 0.0
        %862 = vmatpush2.xpose.msra.mxu0 0.0
        %863 = vmatprep.subr.mxu0 0.0
        %864 = vmatpush2.xpose.msra.mxu0 0.0
        %865 = vmatprep.subr.mxu0 0.0
        %866 = vmatpush2.xpose.msra.mxu0 0.0
        %867 = vmatprep.subr.mxu0 0.0
        %868 = vmatpush2.xpose.msra.mxu0 0.0
        %869 = vmatprep.subr.mxu0 0.0
        %870 = vmatpush2.xpose.msra.mxu0 0.0
        %871 = vmatprep.subr.mxu0 0.0
        %872 = vmatpush2.xpose.msra.mxu0 0.0
        %873 = vmatprep.subr.mxu0 0.0
        %874 = vmatpush2.xpose.msra.mxu0 0.0
        %875 = vmatprep.subr.mxu0 0.0
        %876 = vmatpush2.xpose.msra.mxu0 0.0
        %877 = vmatprep.mubr.f32.mxu0 0.0
        %878 = vmatmul.mubr.f32.gmra.mxu0 %v809
        %v879 = vpop.f32.mrf.mxu0
        %v880 = vadd.f32 0.0, %v879
        %v881 = vpop.f32.mrf.mxu0
        %882 = vdwg.mxu0
        %883 = vrot.lane.b32.xlu0 %v801, 96
        %v884 = vpop.permute.xlu0 %883
        %v885 = vsel %vm808, %v801, 0
        %v887 = vsel %vm808, %v884, 0
        %889 = vmatprep.subr.mxu0 0.0
        %890 = vmatpush1.xpose.msra.mxu0 0.0
        %891 = vmatprep.subr.mxu0 0.0
        %892 = vmatpush1.xpose.msra.mxu0 0.0
        %893 = vmatprep.subr.mxu0 0.0
        %894 = vmatpush1.xpose.msra.mxu0 0.0
        %895 = vmatprep.subr.mxu0 0.0
        %896 = vmatpush1.xpose.msra.mxu0 0.0
        %897 = vmatprep.subr.mxu0 0.0
        %898 = vmatpush1.xpose.msra.mxu0 0.0
        %899 = vmatprep.subr.mxu0 0.0
        %900 = vmatpush1.xpose.msra.mxu0 0.0
        %901 = vmatprep.subr.mxu0 0.0
        %902 = vmatpush1.xpose.msra.mxu0 0.0
        %903 = vmatprep.subr.mxu0 0.0
        %904 = vmatpush1.xpose.msra.mxu0 0.0
        %905 = vmatprep.subr.mxu0 0.0
        %906 = vmatpush1.xpose.msra.mxu0 0.0
        %907 = vmatprep.subr.mxu0 0.0
        %908 = vmatpush1.xpose.msra.mxu0 0.0
        %909 = vmatprep.subr.mxu0 0.0
        %910 = vmatpush1.xpose.msra.mxu0 0.0
        %911 = vmatprep.subr.mxu0 0.0
        %912 = vmatpush1.xpose.msra.mxu0 0.0
        %913 = vmatprep.subr.mxu0 0.0
        %914 = vmatpush1.xpose.msra.mxu0 0.0
        %915 = vmatprep.subr.mxu0 0.0
        %916 = vmatpush1.xpose.msra.mxu0 0.0
        %917 = vmatprep.subr.mxu0 0.0
        %918 = vmatpush1.xpose.msra.mxu0 0.0
        %919 = vmatprep.subr.mxu0 0.0
        %920 = vmatpush1.xpose.msra.mxu0 %v887
        %921 = vmatprep.subr.mxu0 0.0
        %922 = vmatpush2.xpose.msra.mxu0 0.0
        %923 = vmatprep.subr.mxu0 0.0
        %924 = vmatpush2.xpose.msra.mxu0 0.0
        %925 = vmatprep.subr.mxu0 0.0
        %926 = vmatpush2.xpose.msra.mxu0 0.0
        %927 = vmatprep.subr.mxu0 0.0
        %928 = vmatpush2.xpose.msra.mxu0 0.0
        %929 = vmatprep.subr.mxu0 0.0
        %930 = vmatpush2.xpose.msra.mxu0 0.0
        %931 = vmatprep.subr.mxu0 0.0
        %932 = vmatpush2.xpose.msra.mxu0 0.0
        %933 = vmatprep.subr.mxu0 0.0
        %934 = vmatpush2.xpose.msra.mxu0 0.0
        %935 = vmatprep.subr.mxu0 0.0
        %936 = vmatpush2.xpose.msra.mxu0 0.0
        %937 = vmatprep.subr.mxu0 0.0
        %938 = vmatpush2.xpose.msra.mxu0 0.0
        %939 = vmatprep.subr.mxu0 0.0
        %940 = vmatpush2.xpose.msra.mxu0 0.0
        %941 = vmatprep.subr.mxu0 0.0
        %942 = vmatpush2.xpose.msra.mxu0 0.0
        %943 = vmatprep.subr.mxu0 0.0
        %944 = vmatpush2.xpose.msra.mxu0 0.0
        %945 = vmatprep.subr.mxu0 0.0
        %946 = vmatpush2.xpose.msra.mxu0 0.0
        %947 = vmatprep.subr.mxu0 0.0
        %948 = vmatpush2.xpose.msra.mxu0 0.0
        %949 = vmatprep.subr.mxu0 0.0
        %950 = vmatpush2.xpose.msra.mxu0 0.0
        %951 = vmatprep.subr.mxu0 0.0
        %952 = vmatpush2.xpose.msra.mxu0 0.0
        %953 = vmatprep.mubr.f32.mxu0 0.0
        %954 = vmatmul.mubr.f32.gmra.mxu0 %v885
        %v955 = vpop.f32.mrf.mxu0
        %v956 = vadd.f32 0.0, %v955
        %v957 = vpop.f32.mrf.mxu0
        %958 = vdwg.mxu0
        %959 = vrot.lane.b32.xlu0 %v803, 96
        %v960 = vpop.permute.xlu0 %959
        %v961 = vsel %vm808, %v803, 0
        %v963 = vsel %vm808, %v960, 0
        %965 = vmatprep.subr.mxu0 0.0
        %966 = vmatpush1.xpose.msra.mxu0 0.0
        %967 = vmatprep.subr.mxu0 0.0
        %968 = vmatpush1.xpose.msra.mxu0 0.0
        %969 = vmatprep.subr.mxu0 0.0
        %970 = vmatpush1.xpose.msra.mxu0 0.0
        %971 = vmatprep.subr.mxu0 0.0
        %972 = vmatpush1.xpose.msra.mxu0 0.0
        %973 = vmatprep.subr.mxu0 0.0
        %974 = vmatpush1.xpose.msra.mxu0 0.0
        %975 = vmatprep.subr.mxu0 0.0
        %976 = vmatpush1.xpose.msra.mxu0 0.0
        %977 = vmatprep.subr.mxu0 0.0
        %978 = vmatpush1.xpose.msra.mxu0 0.0
        %979 = vmatprep.subr.mxu0 0.0
        %980 = vmatpush1.xpose.msra.mxu0 0.0
        %981 = vmatprep.subr.mxu0 0.0
        %982 = vmatpush1.xpose.msra.mxu0 0.0
        %983 = vmatprep.subr.mxu0 0.0
        %984 = vmatpush1.xpose.msra.mxu0 0.0
        %985 = vmatprep.subr.mxu0 0.0
        %986 = vmatpush1.xpose.msra.mxu0 0.0
        %987 = vmatprep.subr.mxu0 0.0
        %988 = vmatpush1.xpose.msra.mxu0 0.0
        %989 = vmatprep.subr.mxu0 0.0
        %990 = vmatpush1.xpose.msra.mxu0 0.0
        %991 = vmatprep.subr.mxu0 0.0
        %992 = vmatpush1.xpose.msra.mxu0 0.0
        %993 = vmatprep.subr.mxu0 0.0
        %994 = vmatpush1.xpose.msra.mxu0 0.0
        %995 = vmatprep.subr.mxu0 0.0
        %996 = vmatpush1.xpose.msra.mxu0 %v963
        %997 = vmatprep.subr.mxu0 0.0
        %998 = vmatpush2.xpose.msra.mxu0 0.0
        %999 = vmatprep.subr.mxu0 0.0
        %1000 = vmatpush2.xpose.msra.mxu0 0.0
        %1001 = vmatprep.subr.mxu0 0.0
        %1002 = vmatpush2.xpose.msra.mxu0 0.0
        %1003 = vmatprep.subr.mxu0 0.0
        %1004 = vmatpush2.xpose.msra.mxu0 0.0
        %1005 = vmatprep.subr.mxu0 0.0
        %1006 = vmatpush2.xpose.msra.mxu0 0.0
        %1007 = vmatprep.subr.mxu0 0.0
        %1008 = vmatpush2.xpose.msra.mxu0 0.0
        %1009 = vmatprep.subr.mxu0 0.0
        %1010 = vmatpush2.xpose.msra.mxu0 0.0
        %1011 = vmatprep.subr.mxu0 0.0
        %1012 = vmatpush2.xpose.msra.mxu0 0.0
        %1013 = vmatprep.subr.mxu0 0.0
        %1014 = vmatpush2.xpose.msra.mxu0 0.0
        %1015 = vmatprep.subr.mxu0 0.0
        %1016 = vmatpush2.xpose.msra.mxu0 0.0
        %1017 = vmatprep.subr.mxu0 0.0
        %1018 = vmatpush2.xpose.msra.mxu0 0.0
        %1019 = vmatprep.subr.mxu0 0.0
        %1020 = vmatpush2.xpose.msra.mxu0 0.0
        %1021 = vmatprep.subr.mxu0 0.0
        %1022 = vmatpush2.xpose.msra.mxu0 0.0
        %1023 = vmatprep.subr.mxu0 0.0
        %1024 = vmatpush2.xpose.msra.mxu0 0.0
        %1025 = vmatprep.subr.mxu0 0.0
        %1026 = vmatpush2.xpose.msra.mxu0 0.0
        %1027 = vmatprep.subr.mxu0 0.0
        %1028 = vmatpush2.xpose.msra.mxu0 0.0
        %1029 = vmatprep.mubr.f32.mxu0 0.0
        %1030 = vmatmul.mubr.f32.gmra.mxu0 %v961
        %v1031 = vpop.f32.mrf.mxu0
        %v1032 = vadd.f32 0.0, %v1031
        %v1033 = vpop.f32.mrf.mxu0
        %1034 = vdwg.mxu0
        %1035 = vrot.lane.b32.xlu0 %v805, 96
        %v1036 = vpop.permute.xlu0 %1035
        %v1037 = vsel %vm808, %v805, 0
        %v1039 = vsel %vm808, %v1036, 0
        %1041 = vmatprep.subr.mxu0 0.0
        %1042 = vmatpush1.xpose.msra.mxu0 0.0
        %1043 = vmatprep.subr.mxu0 0.0
        %1044 = vmatpush1.xpose.msra.mxu0 0.0
        %1045 = vmatprep.subr.mxu0 0.0
        %1046 = vmatpush1.xpose.msra.mxu0 0.0
        %1047 = vmatprep.subr.mxu0 0.0
        %1048 = vmatpush1.xpose.msra.mxu0 0.0
        %1049 = vmatprep.subr.mxu0 0.0
        %1050 = vmatpush1.xpose.msra.mxu0 0.0
        %1051 = vmatprep.subr.mxu0 0.0
        %1052 = vmatpush1.xpose.msra.mxu0 0.0
        %1053 = vmatprep.subr.mxu0 0.0
        %1054 = vmatpush1.xpose.msra.mxu0 0.0
        %1055 = vmatprep.subr.mxu0 0.0
        %1056 = vmatpush1.xpose.msra.mxu0 0.0
        %1057 = vmatprep.subr.mxu0 0.0
        %1058 = vmatpush1.xpose.msra.mxu0 0.0
        %1059 = vmatprep.subr.mxu0 0.0
        %1060 = vmatpush1.xpose.msra.mxu0 0.0
        %1061 = vmatprep.subr.mxu0 0.0
        %1062 = vmatpush1.xpose.msra.mxu0 0.0
        %1063 = vmatprep.subr.mxu0 0.0
        %1064 = vmatpush1.xpose.msra.mxu0 0.0
        %1065 = vmatprep.subr.mxu0 0.0
        %1066 = vmatpush1.xpose.msra.mxu0 0.0
        %1067 = vmatprep.subr.mxu0 0.0
        %1068 = vmatpush1.xpose.msra.mxu0 0.0
        %1069 = vmatprep.subr.mxu0 0.0
        %1070 = vmatpush1.xpose.msra.mxu0 0.0
        %1071 = vmatprep.subr.mxu0 0.0
        %1072 = vmatpush1.xpose.msra.mxu0 %v1039
        %1073 = vmatprep.subr.mxu0 0.0
        %1074 = vmatpush2.xpose.msra.mxu0 0.0
        %1075 = vmatprep.subr.mxu0 0.0
        %1076 = vmatpush2.xpose.msra.mxu0 0.0
        %1077 = vmatprep.subr.mxu0 0.0
        %1078 = vmatpush2.xpose.msra.mxu0 0.0
        %1079 = vmatprep.subr.mxu0 0.0
        %1080 = vmatpush2.xpose.msra.mxu0 0.0
        %1081 = vmatprep.subr.mxu0 0.0
        %1082 = vmatpush2.xpose.msra.mxu0 0.0
        %1083 = vmatprep.subr.mxu0 0.0
        %1084 = vmatpush2.xpose.msra.mxu0 0.0
        %1085 = vmatprep.subr.mxu0 0.0
        %1086 = vmatpush2.xpose.msra.mxu0 0.0
        %1087 = vmatprep.subr.mxu0 0.0
        %1088 = vmatpush2.xpose.msra.mxu0 0.0
        %1089 = vmatprep.subr.mxu0 0.0
        %1090 = vmatpush2.xpose.msra.mxu0 0.0
        %1091 = vmatprep.subr.mxu0 0.0
        %1092 = vmatpush2.xpose.msra.mxu0 0.0
        %1093 = vmatprep.subr.mxu0 0.0
        %1094 = vmatpush2.xpose.msra.mxu0 0.0
        %1095 = vmatprep.subr.mxu0 0.0
        %1096 = vmatpush2.xpose.msra.mxu0 0.0
        %1097 = vmatprep.subr.mxu0 0.0
        %1098 = vmatpush2.xpose.msra.mxu0 0.0
        %1099 = vmatprep.subr.mxu0 0.0
        %1100 = vmatpush2.xpose.msra.mxu0 0.0
        %1101 = vmatprep.subr.mxu0 0.0
        %1102 = vmatpush2.xpose.msra.mxu0 0.0
        %1103 = vmatprep.subr.mxu0 0.0
        %1104 = vmatpush2.xpose.msra.mxu0 0.0
        %1105 = vmatprep.mubr.f32.mxu0 0.0
        %1106 = vmatmul.mubr.f32.gmra.mxu0 %v1037
        %v1107 = vpop.f32.mrf.mxu0
        %v1108 = vadd.f32 0.0, %v1107
        %v1109 = vpop.f32.mrf.mxu0
        %1110 = vdwg.mxu0
        %vm1111 = vcmask 27648
        %v1112 = vsel %vm1111, %v880, -inf
        %1113 = vmax.xlane.f32.xlu0 %v1112
        %v1114 = vpop.xlane.xlu0 %1113
        %v1115 = vsel %vm1111, %v956, -inf
        %1116 = vmax.xlane.f32.xlu0 %v1115
        %v1117 = vpop.xlane.xlu0 %1116
        %v1118 = vsel %vm1111, %v1032, -inf
        %1119 = vmax.xlane.f32.xlu0 %v1118
        %v1120 = vpop.xlane.xlu0 %1119
        %v1121 = vsel %vm1111, %v1108, -inf
        %1122 = vmax.xlane.f32.xlu0 %v1121
        %v1123 = vpop.xlane.xlu0 %1122
        %v1124 = vsub.f32 %v880, %v1114
        %v1125 = vsub.f32 %v956, %v1117
        %v1126 = vsub.f32 %v1032, %v1120
        %v1127 = vsub.f32 %v1108, %v1123
        %v1128 = vmul.f32 %v1124, 1.442695
        %v1129 = vpow.pop %v1128
        %v1130 = vmul.f32 %v1125, 1.442695
        %v1131 = vpow.pop %v1130
        %v1132 = vmul.f32 %v1126, 1.442695
        %v1133 = vpow.pop %v1132
        %v1134 = vmul.f32 %v1127, 1.442695
        %v1135 = vpow.pop %v1134
        %v1136 = vsel %vm1111, %v1129, 0.0
        %1137 = vadd.xlane.f32.xlu0 %v1136
        %v1138 = vpop.xlane.xlu0 %1137
        %v1139 = vsel %vm1111, %v1131, 0.0
        %1140 = vadd.xlane.f32.xlu0 %v1139
        %v1141 = vpop.xlane.xlu0 %1140
        %v1142 = vsel %vm1111, %v1133, 0.0
        %1143 = vadd.xlane.f32.xlu0 %v1142
        %v1144 = vpop.xlane.xlu0 %1143
        %v1145 = vsel %vm1111, %v1135, 0.0
        %1146 = vadd.xlane.f32.xlu0 %v1145
        %v1147 = vpop.xlane.xlu0 %1146
        %v1148 = vrcp.pop %v1138
        %v1149 = vrcp.pop %v1141
        %v1150 = vrcp.pop %v1144
        %v1151 = vrcp.pop %v1147
        %v1152 = vmul.f32 %v1129, %v1148
        %v1153 = vmul.f32 %v1131, %v1149
        %v1154 = vmul.f32 %v1133, %v1150
        %v1155 = vmul.f32 %v1135, %v1151
        %1156 = vrot.lane.b32.xlu0 %v796, 64
        %v1157 = vpop.permute.xlu0 %1156
        %vm1158 = vcmask 31744
        %v1160 = vsel %vm1158, %v1152, 0
        %vm1162 = vcmask 1043456
        %v1163 = vsel %vm1162, %v1157, 0
        %1165 = vmatprep.subr.mxu0 0.0
        %1166 = vmatpush1.msra.mxu0 0.0
        %1167 = vmatprep.subr.mxu0 0.0
        %1168 = vmatpush1.msra.mxu0 0.0
        %1169 = vmatprep.subr.mxu0 0.0
        %1170 = vmatpush1.msra.mxu0 0.0
        %1171 = vmatprep.subr.mxu0 0.0
        %1172 = vmatpush1.msra.mxu0 0.0
        %1173 = vmatprep.subr.mxu0 0.0
        %1174 = vmatpush1.msra.mxu0 0.0
        %1175 = vmatprep.subr.mxu0 0.0
        %1176 = vmatpush1.msra.mxu0 0.0
        %1177 = vmatprep.subr.mxu0 0.0
        %1178 = vmatpush1.msra.mxu0 0.0
        %1179 = vmatprep.subr.mxu0 0.0
        %1180 = vmatpush1.msra.mxu0 0.0
        %1181 = vmatprep.subr.mxu0 0.0
        %1182 = vmatpush1.msra.mxu0 0.0
        %1183 = vmatprep.subr.mxu0 0.0
        %1184 = vmatpush1.msra.mxu0 0.0
        %1185 = vmatprep.subr.mxu0 0.0
        %1186 = vmatpush1.msra.mxu0 0.0
        %1187 = vmatprep.subr.mxu0 0.0
        %1188 = vmatpush1.msra.mxu0 0.0
        %1189 = vmatprep.subr.mxu0 0.0
        %1190 = vmatpush1.msra.mxu0 0.0
        %1191 = vmatprep.subr.mxu0 0.0
        %1192 = vmatpush1.msra.mxu0 0.0
        %1193 = vmatprep.subr.mxu0 0.0
        %1194 = vmatpush1.msra.mxu0 0.0
        %1195 = vmatprep.subr.mxu0 0.0
        %1196 = vmatpush1.msra.mxu0 %v1163
        %1197 = vmatprep.subr.mxu0 0.0
        %1198 = vmatpush2.msra.mxu0 0.0
        %1199 = vmatprep.subr.mxu0 0.0
        %1200 = vmatpush2.msra.mxu0 0.0
        %1201 = vmatprep.subr.mxu0 0.0
        %1202 = vmatpush2.msra.mxu0 0.0
        %1203 = vmatprep.subr.mxu0 0.0
        %1204 = vmatpush2.msra.mxu0 0.0
        %1205 = vmatprep.subr.mxu0 0.0
        %1206 = vmatpush2.msra.mxu0 0.0
        %1207 = vmatprep.subr.mxu0 0.0
        %1208 = vmatpush2.msra.mxu0 0.0
        %1209 = vmatprep.subr.mxu0 0.0
        %1210 = vmatpush2.msra.mxu0 0.0
        %1211 = vmatprep.subr.mxu0 0.0
        %1212 = vmatpush2.msra.mxu0 0.0
        %1213 = vmatprep.subr.mxu0 0.0
        %1214 = vmatpush2.msra.mxu0 0.0
        %1215 = vmatprep.subr.mxu0 0.0
        %1216 = vmatpush2.msra.mxu0 0.0
        %1217 = vmatprep.subr.mxu0 0.0
        %1218 = vmatpush2.msra.mxu0 0.0
        %1219 = vmatprep.subr.mxu0 0.0
        %1220 = vmatpush2.msra.mxu0 0.0
        %1221 = vmatprep.subr.mxu0 0.0
        %1222 = vmatpush2.msra.mxu0 0.0
        %1223 = vmatprep.subr.mxu0 0.0
        %1224 = vmatpush2.msra.mxu0 0.0
        %1225 = vmatprep.subr.mxu0 0.0
        %1226 = vmatpush2.msra.mxu0 0.0
        %1227 = vmatprep.subr.mxu0 0.0
        %1228 = vmatpush2.msra.mxu0 0.0
        %1229 = vmatprep.mubr.f32.mxu0 0.0
        %1230 = vmatmul.mubr.f32.gmra.mxu0 %v1160
        %v1231 = vpop.f32.mrf.mxu0
        %v1232 = vadd.f32 0.0, %v1231
        %v1233 = vpop.f32.mrf.mxu0
        %1234 = vdwg.mxu0
        %1235 = vrot.lane.b32.xlu0 %v801, 64
        %v1236 = vpop.permute.xlu0 %1235
        %v1238 = vsel %vm1158, %v1153, 0
        %v1240 = vsel %vm1162, %v1236, 0
        %1242 = vmatprep.subr.mxu0 0.0
        %1243 = vmatpush1.msra.mxu0 0.0
        %1244 = vmatprep.subr.mxu0 0.0
        %1245 = vmatpush1.msra.mxu0 0.0
        %1246 = vmatprep.subr.mxu0 0.0
        %1247 = vmatpush1.msra.mxu0 0.0
        %1248 = vmatprep.subr.mxu0 0.0
        %1249 = vmatpush1.msra.mxu0 0.0
        %1250 = vmatprep.subr.mxu0 0.0
        %1251 = vmatpush1.msra.mxu0 0.0
        %1252 = vmatprep.subr.mxu0 0.0
        %1253 = vmatpush1.msra.mxu0 0.0
        %1254 = vmatprep.subr.mxu0 0.0
        %1255 = vmatpush1.msra.mxu0 0.0
        %1256 = vmatprep.subr.mxu0 0.0
        %1257 = vmatpush1.msra.mxu0 0.0
        %1258 = vmatprep.subr.mxu0 0.0
        %1259 = vmatpush1.msra.mxu0 0.0
        %1260 = vmatprep.subr.mxu0 0.0
        %1261 = vmatpush1.msra.mxu0 0.0
        %1262 = vmatprep.subr.mxu0 0.0
        %1263 = vmatpush1.msra.mxu0 0.0
        %1264 = vmatprep.subr.mxu0 0.0
        %1265 = vmatpush1.msra.mxu0 0.0
        %1266 = vmatprep.subr.mxu0 0.0
        %1267 = vmatpush1.msra.mxu0 0.0
        %1268 = vmatprep.subr.mxu0 0.0
        %1269 = vmatpush1.msra.mxu0 0.0
        %1270 = vmatprep.subr.mxu0 0.0
        %1271 = vmatpush1.msra.mxu0 0.0
        %1272 = vmatprep.subr.mxu0 0.0
        %1273 = vmatpush1.msra.mxu0 %v1240
        %1274 = vmatprep.subr.mxu0 0.0
        %1275 = vmatpush2.msra.mxu0 0.0
        %1276 = vmatprep.subr.mxu0 0.0
        %1277 = vmatpush2.msra.mxu0 0.0
        %1278 = vmatprep.subr.mxu0 0.0
        %1279 = vmatpush2.msra.mxu0 0.0
        %1280 = vmatprep.subr.mxu0 0.0
        %1281 = vmatpush2.msra.mxu0 0.0
        %1282 = vmatprep.subr.mxu0 0.0
        %1283 = vmatpush2.msra.mxu0 0.0
        %1284 = vmatprep.subr.mxu0 0.0
        %1285 = vmatpush2.msra.mxu0 0.0
        %1286 = vmatprep.subr.mxu0 0.0
        %1287 = vmatpush2.msra.mxu0 0.0
        %1288 = vmatprep.subr.mxu0 0.0
        %1289 = vmatpush2.msra.mxu0 0.0
        %1290 = vmatprep.subr.mxu0 0.0
        %1291 = vmatpush2.msra.mxu0 0.0
        %1292 = vmatprep.subr.mxu0 0.0
        %1293 = vmatpush2.msra.mxu0 0.0
        %1294 = vmatprep.subr.mxu0 0.0
        %1295 = vmatpush2.msra.mxu0 0.0
        %1296 = vmatprep.subr.mxu0 0.0
        %1297 = vmatpush2.msra.mxu0 0.0
        %1298 = vmatprep.subr.mxu0 0.0
        %1299 = vmatpush2.msra.mxu0 0.0
        %1300 = vmatprep.subr.mxu0 0.0
        %1301 = vmatpush2.msra.mxu0 0.0
        %1302 = vmatprep.subr.mxu0 0.0
        %1303 = vmatpush2.msra.mxu0 0.0
        %1304 = vmatprep.subr.mxu0 0.0
        %1305 = vmatpush2.msra.mxu0 0.0
        %1306 = vmatprep.mubr.f32.mxu0 0.0
        %1307 = vmatmul.mubr.f32.gmra.mxu0 %v1238
        %v1308 = vpop.f32.mrf.mxu0
        %v1309 = vadd.f32 0.0, %v1308
        %v1310 = vpop.f32.mrf.mxu0
        %1311 = vdwg.mxu0
        %1312 = vrot.lane.b32.xlu0 %v803, 64
        %v1313 = vpop.permute.xlu0 %1312
        %v1315 = vsel %vm1158, %v1154, 0
        %v1317 = vsel %vm1162, %v1313, 0
        %1319 = vmatprep.subr.mxu0 0.0
        %1320 = vmatpush1.msra.mxu0 0.0
        %1321 = vmatprep.subr.mxu0 0.0
        %1322 = vmatpush1.msra.mxu0 0.0
        %1323 = vmatprep.subr.mxu0 0.0
        %1324 = vmatpush1.msra.mxu0 0.0
        %1325 = vmatprep.subr.mxu0 0.0
        %1326 = vmatpush1.msra.mxu0 0.0
        %1327 = vmatprep.subr.mxu0 0.0
        %1328 = vmatpush1.msra.mxu0 0.0
        %1329 = vmatprep.subr.mxu0 0.0
        %1330 = vmatpush1.msra.mxu0 0.0
        %1331 = vmatprep.subr.mxu0 0.0
        %1332 = vmatpush1.msra.mxu0 0.0
        %1333 = vmatprep.subr.mxu0 0.0
        %1334 = vmatpush1.msra.mxu0 0.0
        %1335 = vmatprep.subr.mxu0 0.0
        %1336 = vmatpush1.msra.mxu0 0.0
        %1337 = vmatprep.subr.mxu0 0.0
        %1338 = vmatpush1.msra.mxu0 0.0
        %1339 = vmatprep.subr.mxu0 0.0
        %1340 = vmatpush1.msra.mxu0 0.0
        %1341 = vmatprep.subr.mxu0 0.0
        %1342 = vmatpush1.msra.mxu0 0.0
        %1343 = vmatprep.subr.mxu0 0.0
        %1344 = vmatpush1.msra.mxu0 0.0
        %1345 = vmatprep.subr.mxu0 0.0
        %1346 = vmatpush1.msra.mxu0 0.0
        %1347 = vmatprep.subr.mxu0 0.0
        %1348 = vmatpush1.msra.mxu0 0.0
        %1349 = vmatprep.subr.mxu0 0.0
        %1350 = vmatpush1.msra.mxu0 %v1317
        %1351 = vmatprep.subr.mxu0 0.0
        %1352 = vmatpush2.msra.mxu0 0.0
        %1353 = vmatprep.subr.mxu0 0.0
        %1354 = vmatpush2.msra.mxu0 0.0
        %1355 = vmatprep.subr.mxu0 0.0
        %1356 = vmatpush2.msra.mxu0 0.0
        %1357 = vmatprep.subr.mxu0 0.0
        %1358 = vmatpush2.msra.mxu0 0.0
        %1359 = vmatprep.subr.mxu0 0.0
        %1360 = vmatpush2.msra.mxu0 0.0
        %1361 = vmatprep.subr.mxu0 0.0
        %1362 = vmatpush2.msra.mxu0 0.0
        %1363 = vmatprep.subr.mxu0 0.0
        %1364 = vmatpush2.msra.mxu0 0.0
        %1365 = vmatprep.subr.mxu0 0.0
        %1366 = vmatpush2.msra.mxu0 0.0
        %1367 = vmatprep.subr.mxu0 0.0
        %1368 = vmatpush2.msra.mxu0 0.0
        %1369 = vmatprep.subr.mxu0 0.0
        %1370 = vmatpush2.msra.mxu0 0.0
        %1371 = vmatprep.subr.mxu0 0.0
        %1372 = vmatpush2.msra.mxu0 0.0
        %1373 = vmatprep.subr.mxu0 0.0
        %1374 = vmatpush2.msra.mxu0 0.0
        %1375 = vmatprep.subr.mxu0 0.0
        %1376 = vmatpush2.msra.mxu0 0.0
        %1377 = vmatprep.subr.mxu0 0.0
        %1378 = vmatpush2.msra.mxu0 0.0
        %1379 = vmatprep.subr.mxu0 0.0
        %1380 = vmatpush2.msra.mxu0 0.0
        %1381 = vmatprep.subr.mxu0 0.0
        %1382 = vmatpush2.msra.mxu0 0.0
        %1383 = vmatprep.mubr.f32.mxu0 0.0
        %1384 = vmatmul.mubr.f32.gmra.mxu0 %v1315
        %v1385 = vpop.f32.mrf.mxu0
        %v1386 = vadd.f32 0.0, %v1385
        %v1387 = vpop.f32.mrf.mxu0
        %1388 = vdwg.mxu0
        %1389 = vrot.lane.b32.xlu0 %v805, 64
        %v1390 = vpop.permute.xlu0 %1389
        %v1392 = vsel %vm1158, %v1155, 0
        %v1394 = vsel %vm1162, %v1390, 0
        %1396 = vmatprep.subr.mxu0 0.0
        %1397 = vmatpush1.msra.mxu0 0.0
        %1398 = vmatprep.subr.mxu0 0.0
        %1399 = vmatpush1.msra.mxu0 0.0
        %1400 = vmatprep.subr.mxu0 0.0
        %1401 = vmatpush1.msra.mxu0 0.0
        %1402 = vmatprep.subr.mxu0 0.0
        %1403 = vmatpush1.msra.mxu0 0.0
        %1404 = vmatprep.subr.mxu0 0.0
        %1405 = vmatpush1.msra.mxu0 0.0
        %1406 = vmatprep.subr.mxu0 0.0
        %1407 = vmatpush1.msra.mxu0 0.0
        %1408 = vmatprep.subr.mxu0 0.0
        %1409 = vmatpush1.msra.mxu0 0.0
        %1410 = vmatprep.subr.mxu0 0.0
        %1411 = vmatpush1.msra.mxu0 0.0
        %1412 = vmatprep.subr.mxu0 0.0
        %1413 = vmatpush1.msra.mxu0 0.0
        %1414 = vmatprep.subr.mxu0 0.0
        %1415 = vmatpush1.msra.mxu0 0.0
        %1416 = vmatprep.subr.mxu0 0.0
        %1417 = vmatpush1.msra.mxu0 0.0
        %1418 = vmatprep.subr.mxu0 0.0
        %1419 = vmatpush1.msra.mxu0 0.0
        %1420 = vmatprep.subr.mxu0 0.0
        %1421 = vmatpush1.msra.mxu0 0.0
        %1422 = vmatprep.subr.mxu0 0.0
        %1423 = vmatpush1.msra.mxu0 0.0
        %1424 = vmatprep.subr.mxu0 0.0
        %1425 = vmatpush1.msra.mxu0 0.0
        %1426 = vmatprep.subr.mxu0 0.0
        %1427 = vmatpush1.msra.mxu0 %v1394
        %1428 = vmatprep.subr.mxu0 0.0
        %1429 = vmatpush2.msra.mxu0 0.0
        %1430 = vmatprep.subr.mxu0 0.0
        %1431 = vmatpush2.msra.mxu0 0.0
        %1432 = vmatprep.subr.mxu0 0.0
        %1433 = vmatpush2.msra.mxu0 0.0
        %1434 = vmatprep.subr.mxu0 0.0
        %1435 = vmatpush2.msra.mxu0 0.0
        %1436 = vmatprep.subr.mxu0 0.0
        %1437 = vmatpush2.msra.mxu0 0.0
        %1438 = vmatprep.subr.mxu0 0.0
        %1439 = vmatpush2.msra.mxu0 0.0
        %1440 = vmatprep.subr.mxu0 0.0
        %1441 = vmatpush2.msra.mxu0 0.0
        %1442 = vmatprep.subr.mxu0 0.0
        %1443 = vmatpush2.msra.mxu0 0.0
        %1444 = vmatprep.subr.mxu0 0.0
        %1445 = vmatpush2.msra.mxu0 0.0
        %1446 = vmatprep.subr.mxu0 0.0
        %1447 = vmatpush2.msra.mxu0 0.0
        %1448 = vmatprep.subr.mxu0 0.0
        %1449 = vmatpush2.msra.mxu0 0.0
        %1450 = vmatprep.subr.mxu0 0.0
        %1451 = vmatpush2.msra.mxu0 0.0
        %1452 = vmatprep.subr.mxu0 0.0
        %1453 = vmatpush2.msra.mxu0 0.0
        %1454 = vmatprep.subr.mxu0 0.0
        %1455 = vmatpush2.msra.mxu0 0.0
        %1456 = vmatprep.subr.mxu0 0.0
        %1457 = vmatpush2.msra.mxu0 0.0
        %1458 = vmatprep.subr.mxu0 0.0
        %1459 = vmatpush2.msra.mxu0 0.0
        %1460 = vmatprep.mubr.f32.mxu0 0.0
        %1461 = vmatmul.mubr.f32.gmra.mxu0 %v1392
        %v1462 = vpop.f32.mrf.mxu0
        %v1463 = vadd.f32 0.0, %v1462
        %v1464 = vpop.f32.mrf.mxu0
        %1465 = vdwg.mxu0
        %1467 = vrot.lane.b32.xlu0 %v1309, 8
        %v1468 = vpop.permute.xlu0 %1467
        %1471 = vrot.lane.b32.xlu0 %v1386, 16
        %v1472 = vpop.permute.xlu0 %1471
        %1475 = vrot.lane.b32.xlu0 %v1463, 24
        %v1476 = vpop.permute.xlu0 %1475
        %v1478 = vsel %vm808, %v1232, %v1468
        %vm1479 = vcmask 130048
        %v1480 = vsel %vm1479, %v1478, %v1472
        %vm1481 = vcmask 195584
        %v1482 = vsel %vm1481, %v1480, %v1476
        %v1483 = vld [vmem:[%s8] sm:$0xff]
        %v1484 = vld [vmem:[%s8 + $0x8] sm:$0xff]
        %v1485 = vld [vmem:[%s8 + $0x10] sm:$0xff]
        %v1486 = vld [vmem:[%s8 + $0x18] sm:$0xff]
        %v1487 = vld [vmem:[%s9] sm:$0x1]
        %v1489 = vlaneseq
        %v1490 = vshrl.u32 %v1489, 7
        %v1491 = vsub.s32 0, %v1490
        %v1492 = vrot.slane %v1487, %v1491
        %v1495 = vsel %vm725, %v1482, 0
        %1497 = vmatprep.subr.mxu0 0.0
        %1498 = vmatpush1.msra.mxu0 0.0
        %1499 = vmatprep.subr.mxu0 0.0
        %1500 = vmatpush1.msra.mxu0 0.0
        %1501 = vmatprep.subr.mxu0 0.0
        %1502 = vmatpush1.msra.mxu0 0.0
        %1503 = vmatprep.subr.mxu0 0.0
        %1504 = vmatpush1.msra.mxu0 0.0
        %1505 = vmatprep.subr.mxu0 0.0
        %1506 = vmatpush1.msra.mxu0 0.0
        %1507 = vmatprep.subr.mxu0 0.0
        %1508 = vmatpush1.msra.mxu0 0.0
        %1509 = vmatprep.subr.mxu0 0.0
        %1510 = vmatpush1.msra.mxu0 0.0
        %1511 = vmatprep.subr.mxu0 0.0
        %1512 = vmatpush1.msra.mxu0 0.0
        %1513 = vmatprep.subr.mxu0 0.0
        %1514 = vmatpush1.msra.mxu0 0.0
        %1515 = vmatprep.subr.mxu0 0.0
        %1516 = vmatpush1.msra.mxu0 0.0
        %1517 = vmatprep.subr.mxu0 0.0
        %1518 = vmatpush1.msra.mxu0 0.0
        %1519 = vmatprep.subr.mxu0 0.0
        %1520 = vmatpush1.msra.mxu0 0.0
        %1521 = vmatprep.subr.mxu0 0.0
        %1522 = vmatpush1.msra.mxu0 %v1486
        %1523 = vmatprep.subr.mxu0 0.0
        %1524 = vmatpush1.msra.mxu0 %v1485
        %1525 = vmatprep.subr.mxu0 0.0
        %1526 = vmatpush1.msra.mxu0 %v1484
        %1527 = vmatprep.subr.mxu0 0.0
        %1528 = vmatpush1.msra.mxu0 %v1483
        %1529 = vmatprep.subr.mxu0 0.0
        %1530 = vmatpush2.msra.mxu0 0.0
        %1531 = vmatprep.subr.mxu0 0.0
        %1532 = vmatpush2.msra.mxu0 0.0
        %1533 = vmatprep.subr.mxu0 0.0
        %1534 = vmatpush2.msra.mxu0 0.0
        %1535 = vmatprep.subr.mxu0 0.0
        %1536 = vmatpush2.msra.mxu0 0.0
        %1537 = vmatprep.subr.mxu0 0.0
        %1538 = vmatpush2.msra.mxu0 0.0
        %1539 = vmatprep.subr.mxu0 0.0
        %1540 = vmatpush2.msra.mxu0 0.0
        %1541 = vmatprep.subr.mxu0 0.0
        %1542 = vmatpush2.msra.mxu0 0.0
        %1543 = vmatprep.subr.mxu0 0.0
        %1544 = vmatpush2.msra.mxu0 0.0
        %1545 = vmatprep.subr.mxu0 0.0
        %1546 = vmatpush2.msra.mxu0 0.0
        %1547 = vmatprep.subr.mxu0 0.0
        %1548 = vmatpush2.msra.mxu0 0.0
        %1549 = vmatprep.subr.mxu0 0.0
        %1550 = vmatpush2.msra.mxu0 0.0
        %1551 = vmatprep.subr.mxu0 0.0
        %1552 = vmatpush2.msra.mxu0 0.0
        %1553 = vmatprep.subr.mxu0 0.0
        %1554 = vmatpush2.msra.mxu0 0.0
        %1555 = vmatprep.subr.mxu0 0.0
        %1556 = vmatpush2.msra.mxu0 0.0
        %1557 = vmatprep.subr.mxu0 0.0
        %1558 = vmatpush2.msra.mxu0 0.0
        %1559 = vmatprep.subr.mxu0 0.0
        %1560 = vmatpush2.msra.mxu0 0.0
        %1561 = vmatprep.mubr.f32.mxu0 0.0
        %1562 = vmatmul.mubr.f32.gmra.mxu0 %v1495
        %v1563 = vpop.f32.mrf.mxu0
        %v1564 = vadd.f32 %v1492, %v1563
        %v1565 = vpop.f32.mrf.mxu0
        %1566 = vdwg.mxu0
        %v1567 = vadd.f32 %v682, %v1564
        %v1568 = vld [vmem:[%s10] sm:$0x1]
        %v1569 = vld [vmem:[%s11] sm:$0x1]
        %v1570 = vsel %vm685, %v1567, 0.0
        %1571 = vadd.xlane.f32.xlu0 %v1570
        %v1572 = vpop.xlane.xlu0 %1571
        %v1573 = vmul.f32 %v1572, %v689
        %v1574 = vsub.f32 %v1567, %v1573
        %v1575 = vmul.f32 %v1574, %v1574
        %v1576 = vsel %vm685, %v1575, 0.0
        %1577 = vadd.xlane.f32.xlu0 %v1576
        %v1578 = vpop.xlane.xlu0 %1577
        %v1579 = vmul.f32 %v1578, %v689
        %v1580 = vadd.f32 %v1579, 1e-06
        %v1581 = vrsqrt.pop %v1580
        %v1582 = vmul.f32 %v1574, %v1581
        %v1584 = vlaneseq
        %v1585 = vshrl.u32 %v1584, 7
        %v1586 = vsub.s32 0, %v1585
        %v1587 = vrot.slane %v1568, %v1586
        %v1589 = vmul.f32 %v1582, %v1587
        %v1591 = vlaneseq
        %v1592 = vshrl.u32 %v1591, 7
        %v1593 = vsub.s32 0, %v1592
        %v1594 = vrot.slane %v1569, %v1593
        %v1596 = vadd.f32 %v1589, %v1594
        %v1597 = vld [vmem:[%s12] sm:$0xff]
        %v1598 = vld [vmem:[%s12 + $0x8] sm:$0xff]
        %v1599 = vld [vmem:[%s12 + $0x10] sm:$0xff]
        %v1600 = vld [vmem:[%s12 + $0x18] sm:$0xff]
        %v1601 = vld [vmem:[%s13] sm:$0x1]
        %v1603 = vlaneseq
        %v1604 = vshrl.u32 %v1603, 7
        %v1605 = vsub.s32 0, %v1604
        %v1606 = vrot.slane %v1601, %v1605
        %v1609 = vsel %vm725, %v1596, 0
        %1611 = vmatprep.subr.mxu0 0.0
        %1612 = vmatpush1.msra.mxu0 0.0
        %1613 = vmatprep.subr.mxu0 0.0
        %1614 = vmatpush1.msra.mxu0 0.0
        %1615 = vmatprep.subr.mxu0 0.0
        %1616 = vmatpush1.msra.mxu0 0.0
        %1617 = vmatprep.subr.mxu0 0.0
        %1618 = vmatpush1.msra.mxu0 0.0
        %1619 = vmatprep.subr.mxu0 0.0
        %1620 = vmatpush1.msra.mxu0 0.0
        %1621 = vmatprep.subr.mxu0 0.0
        %1622 = vmatpush1.msra.mxu0 0.0
        %1623 = vmatprep.subr.mxu0 0.0
        %1624 = vmatpush1.msra.mxu0 0.0
        %1625 = vmatprep.subr.mxu0 0.0
        %1626 = vmatpush1.msra.mxu0 0.0
        %1627 = vmatprep.subr.mxu0 0.0
        %1628 = vmatpush1.msra.mxu0 0.0
        %1629 = vmatprep.subr.mxu0 0.0
        %1630 = vmatpush1.msra.mxu0 0.0
        %1631 = vmatprep.subr.mxu0 0.0
        %1632 = vmatpush1.msra.mxu0 0.0
        %1633 = vmatprep.subr.mxu0 0.0
        %1634 = vmatpush1.msra.mxu0 0.0
        %1635 = vmatprep.subr.mxu0 0.0
        %1636 = vmatpush1.msra.mxu0 %v1600
        %1637 = vmatprep.subr.mxu0 0.0
        %1638 = vmatpush1.msra.mxu0 %v1599
        %1639 = vmatprep.subr.mxu0 0.0
        %1640 = vmatpush1.msra.mxu0 %v1598
        %1641 = vmatprep.subr.mxu0 0.0
        %1642 = vmatpush1.msra.mxu0 %v1597
        %1643 = vmatprep.subr.mxu0 0.0
        %1644 = vmatpush2.msra.mxu0 0.0
        %1645 = vmatprep.subr.mxu0 0.0
        %1646 = vmatpush2.msra.mxu0 0.0
        %1647 = vmatprep.subr.mxu0 0.0
        %1648 = vmatpush2.msra.mxu0 0.0
        %1649 = vmatprep.subr.mxu0 0.0
        %1650 = vmatpush2.msra.mxu0 0.0
        %1651 = vmatprep.subr.mxu0 0.0
        %1652 = vmatpush2.msra.mxu0 0.0
        %1653 = vmatprep.subr.mxu0 0.0
        %1654 = vmatpush2.msra.mxu0 0.0
        %1655 = vmatprep.subr.mxu0 0.0
        %1656 = vmatpush2.msra.mxu0 0.0
        %1657 = vmatprep.subr.mxu0 0.0
        %1658 = vmatpush2.msra.mxu0 0.0
        %1659 = vmatprep.subr.mxu0 0.0
        %1660 = vmatpush2.msra.mxu0 0.0
        %1661 = vmatprep.subr.mxu0 0.0
        %1662 = vmatpush2.msra.mxu0 0.0
        %1663 = vmatprep.subr.mxu0 0.0
        %1664 = vmatpush2.msra.mxu0 0.0
        %1665 = vmatprep.subr.mxu0 0.0
        %1666 = vmatpush2.msra.mxu0 0.0
        %1667 = vmatprep.subr.mxu0 0.0
        %1668 = vmatpush2.msra.mxu0 0.0
        %1669 = vmatprep.subr.mxu0 0.0
        %1670 = vmatpush2.msra.mxu0 0.0
        %1671 = vmatprep.subr.mxu0 0.0
        %1672 = vmatpush2.msra.mxu0 0.0
        %1673 = vmatprep.subr.mxu0 0.0
        %1674 = vmatpush2.msra.mxu0 0.0
        %1675 = vmatprep.mubr.f32.mxu0 0.0
        %1676 = vmatmul.mubr.f32.gmra.mxu0 %v1609
        %v1677 = vpop.f32.mrf.mxu0
        %v1678 = vadd.f32 %v1606, %v1677
        %v1679 = vpop.f32.mrf.mxu0
        %1680 = vdwg.mxu0
        %v1681 = vmul.f32 %v1678, %v1678
        %v1682 = vmul.f32 %v1678, %v1681
        %v1683 = vmul.f32 %v1682, 0.044715
        %v1684 = vadd.f32 %v1678, %v1683
        %v1685 = vmul.f32 %v1684, 0.7978846
        %v1686 = vtanh.pop %v1685
        %v1687 = vadd.f32 %v1686, 1.0
        %v1688 = vmul.f32 %v1687, 0.5
        %v1689 = vmul.f32 %v1678, %v1688
        %v1690 = vld [vmem:[%s14] sm:$0xff]
        %v1691 = vld [vmem:[%s14 + $0x8] sm:$0xff]
        %v1692 = vld [vmem:[%s14 + $0x10] sm:$0xff]
        %v1693 = vld [vmem:[%s14 + $0x18] sm:$0xff]
        %v1694 = vld [vmem:[%s14 + $0x20] sm:$0xff]
        %v1695 = vld [vmem:[%s14 + $0x28] sm:$0xff]
        %v1696 = vld [vmem:[%s14 + $0x30] sm:$0xff]
        %v1697 = vld [vmem:[%s14 + $0x38] sm:$0xff]
        %v1698 = vld [vmem:[%s15] sm:$0x1]
        %v1700 = vlaneseq
        %v1701 = vshrl.u32 %v1700, 7
        %v1702 = vsub.s32 0, %v1701
        %v1703 = vrot.slane %v1698, %v1702
        %v1706 = vsel %vm608, %v1689, 0
        %1708 = vmatprep.subr.mxu0 0.0
        %1709 = vmatpush1.msra.mxu0 0.0
        %1710 = vmatprep.subr.mxu0 0.0
        %1711 = vmatpush1.msra.mxu0 0.0
        %1712 = vmatprep.subr.mxu0 0.0
        %1713 = vmatpush1.msra.mxu0 0.0
        %1714 = vmatprep.subr.mxu0 0.0
        %1715 = vmatpush1.msra.mxu0 0.0
        %1716 = vmatprep.subr.mxu0 0.0
        %1717 = vmatpush1.msra.mxu0 0.0
        %1718 = vmatprep.subr.mxu0 0.0
        %1719 = vmatpush1.msra.mxu0 0.0
        %1720 = vmatprep.subr.mxu0 0.0
        %1721 = vmatpush1.msra.mxu0 0.0
        %1722 = vmatprep.subr.mxu0 0.0
        %1723 = vmatpush1.msra.mxu0 0.0
        %1724 = vmatprep.subr.mxu0 0.0
        %1725 = vmatpush1.msra.mxu0 %v1697
        %1726 = vmatprep.subr.mxu0 0.0
        %1727 = vmatpush1.msra.mxu0 %v1696
        %1728 = vmatprep.subr.mxu0 0.0
        %1729 = vmatpush1.msra.mxu0 %v1695
        %1730 = vmatprep.subr.mxu0 0.0
        %1731 = vmatpush1.msra.mxu0 %v1694
        %1732 = vmatprep.subr.mxu0 0.0
        %1733 = vmatpush1.msra.mxu0 %v1693
        %1734 = vmatprep.subr.mxu0 0.0
        %1735 = vmatpush1.msra.mxu0 %v1692
        %1736 = vmatprep.subr.mxu0 0.0
        %1737 = vmatpush1.msra.mxu0 %v1691
        %1738 = vmatprep.subr.mxu0 0.0
        %1739 = vmatpush1.msra.mxu0 %v1690
        %1740 = vmatprep.subr.mxu0 0.0
        %1741 = vmatpush2.msra.mxu0 0.0
        %1742 = vmatprep.subr.mxu0 0.0
        %1743 = vmatpush2.msra.mxu0 0.0
        %1744 = vmatprep.subr.mxu0 0.0
        %1745 = vmatpush2.msra.mxu0 0.0
        %1746 = vmatprep.subr.mxu0 0.0
        %1747 = vmatpush2.msra.mxu0 0.0
        %1748 = vmatprep.subr.mxu0 0.0
        %1749 = vmatpush2.msra.mxu0 0.0
        %1750 = vmatprep.subr.mxu0 0.0
        %1751 = vmatpush2.msra.mxu0 0.0
        %1752 = vmatprep.subr.mxu0 0.0
        %1753 = vmatpush2.msra.mxu0 0.0
        %1754 = vmatprep.subr.mxu0 0.0
        %1755 = vmatpush2.msra.mxu0 0.0
        %1756 = vmatprep.subr.mxu0 0.0
        %1757 = vmatpush2.msra.mxu0 0.0
        %1758 = vmatprep.subr.mxu0 0.0
        %1759 = vmatpush2.msra.mxu0 0.0
        %1760 = vmatprep.subr.mxu0 0.0
        %1761 = vmatpush2.msra.mxu0 0.0
        %1762 = vmatprep.subr.mxu0 0.0
        %1763 = vmatpush2.msra.mxu0 0.0
        %1764 = vmatprep.subr.mxu0 0.0
        %1765 = vmatpush2.msra.mxu0 0.0
        %1766 = vmatprep.subr.mxu0 0.0
        %1767 = vmatpush2.msra.mxu0 0.0
        %1768 = vmatprep.subr.mxu0 0.0
        %1769 = vmatpush2.msra.mxu0 0.0
        %1770 = vmatprep.subr.mxu0 0.0
        %1771 = vmatpush2.msra.mxu0 0.0
        %1772 = vmatprep.mubr.f32.mxu0 0.0
        %1773 = vmatmul.mubr.f32.gmra.mxu0 %v1706
        %v1774 = vpop.f32.mrf.mxu0
        %v1775 = vadd.f32 %v1703, %v1774
        %v1776 = vpop.f32.mrf.mxu0
        %1777 = vdwg.mxu0
        %v1778 = vadd.f32 %v1567, %v1775
        %s1779 = scalar_lea.vmem %s4, 1
        %v1780 = vld [vmem:[%s1779] sm:$0x1]
        %s1781 = scalar_lea.vmem %s5, 1
        %v1782 = vld [vmem:[%s1781] sm:$0x1]
        %v1783 = vsel %vm685, %v1778, 0.0
        %1784 = vadd.xlane.f32.xlu0 %v1783
        %v1785 = vpop.xlane.xlu0 %1784
        %v1786 = vmul.f32 %v1785, %v689
        %v1787 = vsub.f32 %v1778, %v1786
        %v1788 = vmul.f32 %v1787, %v1787
        %v1789 = vsel %vm685, %v1788, 0.0
        %1790 = vadd.xlane.f32.xlu0 %v1789
        %v1791 = vpop.xlane.xlu0 %1790
        %v1792 = vmul.f32 %v1791, %v689
        %v1793 = vadd.f32 %v1792, 1e-06
        %v1794 = vrsqrt.pop %v1793
        %v1795 = vmul.f32 %v1787, %v1794
        %v1797 = vlaneseq
        %v1798 = vshrl.u32 %v1797, 7
        %v1799 = vsub.s32 0, %v1798
        %v1800 = vrot.slane %v1780, %v1799
        %v1802 = vmul.f32 %v1795, %v1800
        %v1804 = vlaneseq
        %v1805 = vshrl.u32 %v1804, 7
        %v1806 = vsub.s32 0, %v1805
        %v1807 = vrot.slane %v1782, %v1806
        %v1809 = vadd.f32 %v1802, %v1807
        %s1810 = scalar_lea.vmem %s6, 32
        %v1811 = vld [vmem:[%s1810] sm:$0xff]
        %v1812 = vld [vmem:[%s1810 + $0x8] sm:$0xff]
        %v1813 = vld [vmem:[%s1810 + $0x10] sm:$0xff]
        %v1814 = vld [vmem:[%s1810 + $0x18] sm:$0xff]
        %s1815 = scalar_lea.vmem %s7, 1
        %v1816 = vld [vmem:[%s1815] sm:$0x1]
        %v1818 = vlaneseq
        %v1819 = vshrl.u32 %v1818, 7
        %v1820 = vsub.s32 0, %v1819
        %v1821 = vrot.slane %v1816, %v1820
        %v1824 = vsel %vm725, %v1809, 0
        %1826 = vmatprep.subr.mxu0 0.0
        %1827 = vmatpush1.msra.mxu0 0.0
        %1828 = vmatprep.subr.mxu0 0.0
        %1829 = vmatpush1.msra.mxu0 0.0
        %1830 = vmatprep.subr.mxu0 0.0
        %1831 = vmatpush1.msra.mxu0 0.0
        %1832 = vmatprep.subr.mxu0 0.0
        %1833 = vmatpush1.msra.mxu0 0.0
        %1834 = vmatprep.subr.mxu0 0.0
        %1835 = vmatpush1.msra.mxu0 0.0
        %1836 = vmatprep.subr.mxu0 0.0
        %1837 = vmatpush1.msra.mxu0 0.0
        %1838 = vmatprep.subr.mxu0 0.0
        %1839 = vmatpush1.msra.mxu0 0.0
        %1840 = vmatprep.subr.mxu0 0.0
        %1841 = vmatpush1.msra.mxu0 0.0
        %1842 = vmatprep.subr.mxu0 0.0
        %1843 = vmatpush1.msra.mxu0 0.0
        %1844 = vmatprep.subr.mxu0 0.0
        %1845 = vmatpush1.msra.mxu0 0.0
        %1846 = vmatprep.subr.mxu0 0.0
        %1847 = vmatpush1.msra.mxu0 0.0
        %1848 = vmatprep.subr.mxu0 0.0
        %1849 = vmatpush1.msra.mxu0 0.0
        %1850 = vmatprep.subr.mxu0 0.0
        %1851 = vmatpush1.msra.mxu0 %v1814
        %1852 = vmatprep.subr.mxu0 0.0
        %1853 = vmatpush1.msra.mxu0 %v1813
        %1854 = vmatprep.subr.mxu0 0.0
        %1855 = vmatpush1.msra.mxu0 %v1812
        %1856 = vmatprep.subr.mxu0 0.0
        %1857 = vmatpush1.msra.mxu0 %v1811
        %1858 = vmatprep.subr.mxu0 0.0
        %1859 = vmatpush2.msra.mxu0 0.0
        %1860 = vmatprep.subr.mxu0 0.0
        %1861 = vmatpush2.msra.mxu0 0.0
        %1862 = vmatprep.subr.mxu0 0.0
        %1863 = vmatpush2.msra.mxu0 0.0
        %1864 = vmatprep.subr.mxu0 0.0
        %1865 = vmatpush2.msra.mxu0 0.0
        %1866 = vmatprep.subr.mxu0 0.0
        %1867 = vmatpush2.msra.mxu0 0.0
        %1868 = vmatprep.subr.mxu0 0.0
        %1869 = vmatpush2.msra.mxu0 0.0
        %1870 = vmatprep.subr.mxu0 0.0
        %1871 = vmatpush2.msra.mxu0 0.0
        %1872 = vmatprep.subr.mxu0 0.0
        %1873 = vmatpush2.msra.mxu0 0.0
        %1874 = vmatprep.subr.mxu0 0.0
        %1875 = vmatpush2.msra.mxu0 0.0
        %1876 = vmatprep.subr.mxu0 0.0
        %1877 = vmatpush2.msra.mxu0 0.0
        %1878 = vmatprep.subr.mxu0 0.0
        %1879 = vmatpush2.msra.mxu0 0.0
        %1880 = vmatprep.subr.mxu0 0.0
        %1881 = vmatpush2.msra.mxu0 0.0
        %1882 = vmatprep.subr.mxu0 0.0
        %1883 = vmatpush2.msra.mxu0 0.0
        %1884 = vmatprep.subr.mxu0 0.0
        %1885 = vmatpush2.msra.mxu0 0.0
        %1886 = vmatprep.subr.mxu0 0.0
        %1887 = vmatpush2.msra.mxu0 0.0
        %1888 = vmatprep.subr.mxu0 0.0
        %1889 = vmatpush2.msra.mxu0 0.0
        %1890 = vmatprep.mubr.f32.mxu0 0.0
        %1891 = vmatmul.mubr.f32.gmra.mxu0 %v1824
        %v1892 = vpop.f32.mrf.mxu0
        %v1893 = vadd.f32 %v1821, %v1892
        %v1894 = vpop.f32.mrf.mxu0
        %1895 = vdwg.mxu0
        %1897 = vrot.lane.b32.xlu0 %v1893, 120
        %v1898 = vpop.permute.xlu0 %1897
        %1899 = vrot.lane.b32.xlu0 %v1893, 112
        %v1900 = vpop.permute.xlu0 %1899
        %1901 = vrot.lane.b32.xlu0 %v1893, 104
        %v1902 = vpop.permute.xlu0 %1901
        %1903 = vrot.lane.b32.xlu0 %v1893, 96
        %v1904 = vpop.permute.xlu0 %1903
        %v1905 = vsel %vm808, %v1893, 0
        %v1907 = vsel %vm808, %v1904, 0
        %1909 = vmatprep.subr.mxu0 0.0
        %1910 = vmatpush1.xpose.msra.mxu0 0.0
        %1911 = vmatprep.subr.mxu0 0.0
        %1912 = vmatpush1.xpose.msra.mxu0 0.0
        %1913 = vmatprep.subr.mxu0 0.0
        %1914 = vmatpush1.xpose.msra.mxu0 0.0
        %1915 = vmatprep.subr.mxu0 0.0
        %1916 = vmatpush1.xpose.msra.mxu0 0.0
        %1917 = vmatprep.subr.mxu0 0.0
        %1918 = vmatpush1.xpose.msra.mxu0 0.0
        %1919 = vmatprep.subr.mxu0 0.0
        %1920 = vmatpush1.xpose.msra.mxu0 0.0
        %1921 = vmatprep.subr.mxu0 0.0
        %1922 = vmatpush1.xpose.msra.mxu0 0.0
        %1923 = vmatprep.subr.mxu0 0.0
        %1924 = vmatpush1.xpose.msra.mxu0 0.0
        %1925 = vmatprep.subr.mxu0 0.0
        %1926 = vmatpush1.xpose.msra.mxu0 0.0
        %1927 = vmatprep.subr.mxu0 0.0
        %1928 = vmatpush1.xpose.msra.mxu0 0.0
        %1929 = vmatprep.subr.mxu0 0.0
        %1930 = vmatpush1.xpose.msra.mxu0 0.0
        %1931 = vmatprep.subr.mxu0 0.0
        %1932 = vmatpush1.xpose.msra.mxu0 0.0
        %1933 = vmatprep.subr.mxu0 0.0
        %1934 = vmatpush1.xpose.msra.mxu0 0.0
        %1935 = vmatprep.subr.mxu0 0.0
        %1936 = vmatpush1.xpose.msra.mxu0 0.0
        %1937 = vmatprep.subr.mxu0 0.0
        %1938 = vmatpush1.xpose.msra.mxu0 0.0
        %1939 = vmatprep.subr.mxu0 0.0
        %1940 = vmatpush1.xpose.msra.mxu0 %v1907
        %1941 = vmatprep.subr.mxu0 0.0
        %1942 = vmatpush2.xpose.msra.mxu0 0.0
        %1943 = vmatprep.subr.mxu0 0.0
        %1944 = vmatpush2.xpose.msra.mxu0 0.0
        %1945 = vmatprep.subr.mxu0 0.0
        %1946 = vmatpush2.xpose.msra.mxu0 0.0
        %1947 = vmatprep.subr.mxu0 0.0
        %1948 = vmatpush2.xpose.msra.mxu0 0.0
        %1949 = vmatprep.subr.mxu0 0.0
        %1950 = vmatpush2.xpose.msra.mxu0 0.0
        %1951 = vmatprep.subr.mxu0 0.0
        %1952 = vmatpush2.xpose.msra.mxu0 0.0
        %1953 = vmatprep.subr.mxu0 0.0
        %1954 = vmatpush2.xpose.msra.mxu0 0.0
        %1955 = vmatprep.subr.mxu0 0.0
        %1956 = vmatpush2.xpose.msra.mxu0 0.0
        %1957 = vmatprep.subr.mxu0 0.0
        %1958 = vmatpush2.xpose.msra.mxu0 0.0
        %1959 = vmatprep.subr.mxu0 0.0
        %1960 = vmatpush2.xpose.msra.mxu0 0.0
        %1961 = vmatprep.subr.mxu0 0.0
        %1962 = vmatpush2.xpose.msra.mxu0 0.0
        %1963 = vmatprep.subr.mxu0 0.0
        %1964 = vmatpush2.xpose.msra.mxu0 0.0
        %1965 = vmatprep.subr.mxu0 0.0
        %1966 = vmatpush2.xpose.msra.mxu0 0.0
        %1967 = vmatprep.subr.mxu0 0.0
        %1968 = vmatpush2.xpose.msra.mxu0 0.0
        %1969 = vmatprep.subr.mxu0 0.0
        %1970 = vmatpush2.xpose.msra.mxu0 0.0
        %1971 = vmatprep.subr.mxu0 0.0
        %1972 = vmatpush2.xpose.msra.mxu0 0.0
        %1973 = vmatprep.mubr.f32.mxu0 0.0
        %1974 = vmatmul.mubr.f32.gmra.mxu0 %v1905
        %v1975 = vpop.f32.mrf.mxu0
        %v1976 = vadd.f32 0.0, %v1975
        %v1977 = vpop.f32.mrf.mxu0
        %1978 = vdwg.mxu0
        %1979 = vrot.lane.b32.xlu0 %v1898, 96
        %v1980 = vpop.permute.xlu0 %1979
        %v1981 = vsel %vm808, %v1898, 0
        %v1983 = vsel %vm808, %v1980, 0
        %1985 = vmatprep.subr.mxu0 0.0
        %1986 = vmatpush1.xpose.msra.mxu0 0.0
        %1987 = vmatprep.subr.mxu0 0.0
        %1988 = vmatpush1.xpose.msra.mxu0 0.0
        %1989 = vmatprep.subr.mxu0 0.0
        %1990 = vmatpush1.xpose.msra.mxu0 0.0
        %1991 = vmatprep.subr.mxu0 0.0
        %1992 = vmatpush1.xpose.msra.mxu0 0.0
        %1993 = vmatprep.subr.mxu0 0.0
        %1994 = vmatpush1.xpose.msra.mxu0 0.0
        %1995 = vmatprep.subr.mxu0 0.0
        %1996 = vmatpush1.xpose.msra.mxu0 0.0
        %1997 = vmatprep.subr.mxu0 0.0
        %1998 = vmatpush1.xpose.msra.mxu0 0.0
        %1999 = vmatprep.subr.mxu0 0.0
        %2000 = vmatpush1.xpose.msra.mxu0 0.0
        %2001 = vmatprep.subr.mxu0 0.0
        %2002 = vmatpush1.xpose.msra.mxu0 0.0
        %2003 = vmatprep.subr.mxu0 0.0
        %2004 = vmatpush1.xpose.msra.mxu0 0.0
        %2005 = vmatprep.subr.mxu0 0.0
        %2006 = vmatpush1.xpose.msra.mxu0 0.0
        %2007 = vmatprep.subr.mxu0 0.0
        %2008 = vmatpush1.xpose.msra.mxu0 0.0
        %2009 = vmatprep.subr.mxu0 0.0
        %2010 = vmatpush1.xpose.msra.mxu0 0.0
        %2011 = vmatprep.subr.mxu0 0.0
        %2012 = vmatpush1.xpose.msra.mxu0 0.0
        %2013 = vmatprep.subr.mxu0 0.0
        %2014 = vmatpush1.xpose.msra.mxu0 0.0
        %2015 = vmatprep.subr.mxu0 0.0
        %2016 = vmatpush1.xpose.msra.mxu0 %v1983
        %2017 = vmatprep.subr.mxu0 0.0
        %2018 = vmatpush2.xpose.msra.mxu0 0.0
        %2019 = vmatprep.subr.mxu0 0.0
        %2020 = vmatpush2.xpose.msra.mxu0 0.0
        %2021 = vmatprep.subr.mxu0 0.0
        %2022 = vmatpush2.xpose.msra.mxu0 0.0
        %2023 = vmatprep.subr.mxu0 0.0
        %2024 = vmatpush2.xpose.msra.mxu0 0.0
        %2025 = vmatprep.subr.mxu0 0.0
        %2026 = vmatpush2.xpose.msra.mxu0 0.0
        %2027 = vmatprep.subr.mxu0 0.0
        %2028 = vmatpush2.xpose.msra.mxu0 0.0
        %2029 = vmatprep.subr.mxu0 0.0
        %2030 = vmatpush2.xpose.msra.mxu0 0.0
        %2031 = vmatprep.subr.mxu0 0.0
        %2032 = vmatpush2.xpose.msra.mxu0 0.0
        %2033 = vmatprep.subr.mxu0 0.0
        %2034 = vmatpush2.xpose.msra.mxu0 0.0
        %2035 = vmatprep.subr.mxu0 0.0
        %2036 = vmatpush2.xpose.msra.mxu0 0.0
        %2037 = vmatprep.subr.mxu0 0.0
        %2038 = vmatpush2.xpose.msra.mxu0 0.0
        %2039 = vmatprep.subr.mxu0 0.0
        %2040 = vmatpush2.xpose.msra.mxu0 0.0
        %2041 = vmatprep.subr.mxu0 0.0
        %2042 = vmatpush2.xpose.msra.mxu0 0.0
        %2043 = vmatprep.subr.mxu0 0.0
        %2044 = vmatpush2.xpose.msra.mxu0 0.0
        %2045 = vmatprep.subr.mxu0 0.0
        %2046 = vmatpush2.xpose.msra.mxu0 0.0
        %2047 = vmatprep.subr.mxu0 0.0
        %2048 = vmatpush2.xpose.msra.mxu0 0.0
        %2049 = vmatprep.mubr.f32.mxu0 0.0
        %2050 = vmatmul.mubr.f32.gmra.mxu0 %v1981
        %v2051 = vpop.f32.mrf.mxu0
        %v2052 = vadd.f32 0.0, %v2051
        %v2053 = vpop.f32.mrf.mxu0
        %2054 = vdwg.mxu0
        %2055 = vrot.lane.b32.xlu0 %v1900, 96
        %v2056 = vpop.permute.xlu0 %2055
        %v2057 = vsel %vm808, %v1900, 0
        %v2059 = vsel %vm808, %v2056, 0
        %2061 = vmatprep.subr.mxu0 0.0
        %2062 = vmatpush1.xpose.msra.mxu0 0.0
        %2063 = vmatprep.subr.mxu0 0.0
        %2064 = vmatpush1.xpose.msra.mxu0 0.0
        %2065 = vmatprep.subr.mxu0 0.0
        %2066 = vmatpush1.xpose.msra.mxu0 0.0
        %2067 = vmatprep.subr.mxu0 0.0
        %2068 = vmatpush1.xpose.msra.mxu0 0.0
        %2069 = vmatprep.subr.mxu0 0.0
        %2070 = vmatpush1.xpose.msra.mxu0 0.0
        %2071 = vmatprep.subr.mxu0 0.0
        %2072 = vmatpush1.xpose.msra.mxu0 0.0
        %2073 = vmatprep.subr.mxu0 0.0
        %2074 = vmatpush1.xpose.msra.mxu0 0.0
        %2075 = vmatprep.subr.mxu0 0.0
        %2076 = vmatpush1.xpose.msra.mxu0 0.0
        %2077 = vmatprep.subr.mxu0 0.0
        %2078 = vmatpush1.xpose.msra.mxu0 0.0
        %2079 = vmatprep.subr.mxu0 0.0
        %2080 = vmatpush1.xpose.msra.mxu0 0.0
        %2081 = vmatprep.subr.mxu0 0.0
        %2082 = vmatpush1.xpose.msra.mxu0 0.0
        %2083 = vmatprep.subr.mxu0 0.0
        %2084 = vmatpush1.xpose.msra.mxu0 0.0
        %2085 = vmatprep.subr.mxu0 0.0
        %2086 = vmatpush1.xpose.msra.mxu0 0.0
        %2087 = vmatprep.subr.mxu0 0.0
        %2088 = vmatpush1.xpose.msra.mxu0 0.0
        %2089 = vmatprep.subr.mxu0 0.0
        %2090 = vmatpush1.xpose.msra.mxu0 0.0
        %2091 = vmatprep.subr.mxu0 0.0
        %2092 = vmatpush1.xpose.msra.mxu0 %v2059
        %2093 = vmatprep.subr.mxu0 0.0
        %2094 = vmatpush2.xpose.msra.mxu0 0.0
        %2095 = vmatprep.subr.mxu0 0.0
        %2096 = vmatpush2.xpose.msra.mxu0 0.0
        %2097 = vmatprep.subr.mxu0 0.0
        %2098 = vmatpush2.xpose.msra.mxu0 0.0
        %2099 = vmatprep.subr.mxu0 0.0
        %2100 = vmatpush2.xpose.msra.mxu0 0.0
        %2101 = vmatprep.subr.mxu0 0.0
        %2102 = vmatpush2.xpose.msra.mxu0 0.0
        %2103 = vmatprep.subr.mxu0 0.0
        %2104 = vmatpush2.xpose.msra.mxu0 0.0
        %2105 = vmatprep.subr.mxu0 0.0
        %2106 = vmatpush2.xpose.msra.mxu0 0.0
        %2107 = vmatprep.subr.mxu0 0.0
        %2108 = vmatpush2.xpose.msra.mxu0 0.0
        %2109 = vmatprep.subr.mxu0 0.0
        %2110 = vmatpush2.xpose.msra.mxu0 0.0
        %2111 = vmatprep.subr.mxu0 0.0
        %2112 = vmatpush2.xpose.msra.mxu0 0.0
        %2113 = vmatprep.subr.mxu0 0.0
        %2114 = vmatpush2.xpose.msra.mxu0 0.0
        %2115 = vmatprep.subr.mxu0 0.0
        %2116 = vmatpush2.xpose.msra.mxu0 0.0
        %2117 = vmatprep.subr.mxu0 0.0
        %2118 = vmatpush2.xpose.msra.mxu0 0.0
        %2119 = vmatprep.subr.mxu0 0.0
        %2120 = vmatpush2.xpose.msra.mxu0 0.0
        %2121 = vmatprep.subr.mxu0 0.0
        %2122 = vmatpush2.xpose.msra.mxu0 0.0
        %2123 = vmatprep.subr.mxu0 0.0
        %2124 = vmatpush2.xpose.msra.mxu0 0.0
        %2125 = vmatprep.mubr.f32.mxu0 0.0
        %2126 = vmatmul.mubr.f32.gmra.mxu0 %v2057
        %v2127 = vpop.f32.mrf.mxu0
        %v2128 = vadd.f32 0.0, %v2127
        %v2129 = vpop.f32.mrf.mxu0
        %2130 = vdwg.mxu0
        %2131 = vrot.lane.b32.xlu0 %v1902, 96
        %v2132 = vpop.permute.xlu0 %2131
        %v2133 = vsel %vm808, %v1902, 0
        %v2135 = vsel %vm808, %v2132, 0
        %2137 = vmatprep.subr.mxu0 0.0
        %2138 = vmatpush1.xpose.msra.mxu0 0.0
        %2139 = vmatprep.subr.mxu0 0.0
        %2140 = vmatpush1.xpose.msra.mxu0 0.0
        %2141 = vmatprep.subr.mxu0 0.0
        %2142 = vmatpush1.xpose.msra.mxu0 0.0
        %2143 = vmatprep.subr.mxu0 0.0
        %2144 = vmatpush1.xpose.msra.mxu0 0.0
        %2145 = vmatprep.subr.mxu0 0.0
        %2146 = vmatpush1.xpose.msra.mxu0 0.0
        %2147 = vmatprep.subr.mxu0 0.0
        %2148 = vmatpush1.xpose.msra.mxu0 0.0
        %2149 = vmatprep.subr.mxu0 0.0
        %2150 = vmatpush1.xpose.msra.mxu0 0.0
        %2151 = vmatprep.subr.mxu0 0.0
        %2152 = vmatpush1.xpose.msra.mxu0 0.0
        %2153 = vmatprep.subr.mxu0 0.0
        %2154 = vmatpush1.xpose.msra.mxu0 0.0
        %2155 = vmatprep.subr.mxu0 0.0
        %2156 = vmatpush1.xpose.msra.mxu0 0.0
        %2157 = vmatprep.subr.mxu0 0.0
        %2158 = vmatpush1.xpose.msra.mxu0 0.0
        %2159 = vmatprep.subr.mxu0 0.0
        %2160 = vmatpush1.xpose.msra.mxu0 0.0
        %2161 = vmatprep.subr.mxu0 0.0
        %2162 = vmatpush1.xpose.msra.mxu0 0.0
        %2163 = vmatprep.subr.mxu0 0.0
        %2164 = vmatpush1.xpose.msra.mxu0 0.0
        %2165 = vmatprep.subr.mxu0 0.0
        %2166 = vmatpush1.xpose.msra.mxu0 0.0
        %2167 = vmatprep.subr.mxu0 0.0
        %2168 = vmatpush1.xpose.msra.mxu0 %v2135
        %2169 = vmatprep.subr.mxu0 0.0
        %2170 = vmatpush2.xpose.msra.mxu0 0.0
        %2171 = vmatprep.subr.mxu0 0.0
        %2172 = vmatpush2.xpose.msra.mxu0 0.0
        %2173 = vmatprep.subr.mxu0 0.0
        %2174 = vmatpush2.xpose.msra.mxu0 0.0
        %2175 = vmatprep.subr.mxu0 0.0
        %2176 = vmatpush2.xpose.msra.mxu0 0.0
        %2177 = vmatprep.subr.mxu0 0.0
        %2178 = vmatpush2.xpose.msra.mxu0 0.0
        %2179 = vmatprep.subr.mxu0 0.0
        %2180 = vmatpush2.xpose.msra.mxu0 0.0
        %2181 = vmatprep.subr.mxu0 0.0
        %2182 = vmatpush2.xpose.msra.mxu0 0.0
        %2183 = vmatprep.subr.mxu0 0.0
        %2184 = vmatpush2.xpose.msra.mxu0 0.0
        %2185 = vmatprep.subr.mxu0 0.0
        %2186 = vmatpush2.xpose.msra.mxu0 0.0
        %2187 = vmatprep.subr.mxu0 0.0
        %2188 = vmatpush2.xpose.msra.mxu0 0.0
        %2189 = vmatprep.subr.mxu0 0.0
        %2190 = vmatpush2.xpose.msra.mxu0 0.0
        %2191 = vmatprep.subr.mxu0 0.0
        %2192 = vmatpush2.xpose.msra.mxu0 0.0
        %2193 = vmatprep.subr.mxu0 0.0
        %2194 = vmatpush2.xpose.msra.mxu0 0.0
        %2195 = vmatprep.subr.mxu0 0.0
        %2196 = vmatpush2.xpose.msra.mxu0 0.0
        %2197 = vmatprep.subr.mxu0 0.0
        %2198 = vmatpush2.xpose.msra.mxu0 0.0
        %2199 = vmatprep.subr.mxu0 0.0
        %2200 = vmatpush2.xpose.msra.mxu0 0.0
        %2201 = vmatprep.mubr.f32.mxu0 0.0
        %2202 = vmatmul.mubr.f32.gmra.mxu0 %v2133
        %v2203 = vpop.f32.mrf.mxu0
        %v2204 = vadd.f32 0.0, %v2203
        %v2205 = vpop.f32.mrf.mxu0
        %2206 = vdwg.mxu0
        %v2207 = vsel %vm1111, %v1976, -inf
        %2208 = vmax.xlane.f32.xlu0 %v2207
        %v2209 = vpop.xlane.xlu0 %2208
        %v2210 = vsel %vm1111, %v2052, -inf
        %2211 = vmax.xlane.f32.xlu0 %v2210
        %v2212 = vpop.xlane.xlu0 %2211
        %v2213 = vsel %vm1111, %v2128, -inf
        %2214 = vmax.xlane.f32.xlu0 %v2213
        %v2215 = vpop.xlane.xlu0 %2214
        %v2216 = vsel %vm1111, %v2204, -inf
        %2217 = vmax.xlane.f32.xlu0 %v2216
        %v2218 = vpop.xlane.xlu0 %2217
        %v2219 = vsub.f32 %v1976, %v2209
        %v2220 = vsub.f32 %v2052, %v2212
        %v2221 = vsub.f32 %v2128, %v2215
        %v2222 = vsub.f32 %v2204, %v2218
        %v2223 = vmul.f32 %v2219, 1.442695
        %v2224 = vpow.pop %v2223
        %v2225 = vmul.f32 %v2220, 1.442695
        %v2226 = vpow.pop %v2225
        %v2227 = vmul.f32 %v2221, 1.442695
        %v2228 = vpow.pop %v2227
        %v2229 = vmul.f32 %v2222, 1.442695
        %v2230 = vpow.pop %v2229
        %v2231 = vsel %vm1111, %v2224, 0.0
        %2232 = vadd.xlane.f32.xlu0 %v2231
        %v2233 = vpop.xlane.xlu0 %2232
        %v2234 = vsel %vm1111, %v2226, 0.0
        %2235 = vadd.xlane.f32.xlu0 %v2234
        %v2236 = vpop.xlane.xlu0 %2235
        %v2237 = vsel %vm1111, %v2228, 0.0
        %2238 = vadd.xlane.f32.xlu0 %v2237
        %v2239 = vpop.xlane.xlu0 %2238
        %v2240 = vsel %vm1111, %v2230, 0.0
        %2241 = vadd.xlane.f32.xlu0 %v2240
        %v2242 = vpop.xlane.xlu0 %2241
        %v2243 = vrcp.pop %v2233
        %v2244 = vrcp.pop %v2236
        %v2245 = vrcp.pop %v2239
        %v2246 = vrcp.pop %v2242
        %v2247 = vmul.f32 %v2224, %v2243
        %v2248 = vmul.f32 %v2226, %v2244
        %v2249 = vmul.f32 %v2228, %v2245
        %v2250 = vmul.f32 %v2230, %v2246
        %2251 = vrot.lane.b32.xlu0 %v1893, 64
        %v2252 = vpop.permute.xlu0 %2251
        %v2254 = vsel %vm1158, %v2247, 0
        %v2256 = vsel %vm1162, %v2252, 0
        %2258 = vmatprep.subr.mxu0 0.0
        %2259 = vmatpush1.msra.mxu0 0.0
        %2260 = vmatprep.subr.mxu0 0.0
        %2261 = vmatpush1.msra.mxu0 0.0
        %2262 = vmatprep.subr.mxu0 0.0
        %2263 = vmatpush1.msra.mxu0 0.0
        %2264 = vmatprep.subr.mxu0 0.0
        %2265 = vmatpush1.msra.mxu0 0.0
        %2266 = vmatprep.subr.mxu0 0.0
        %2267 = vmatpush1.msra.mxu0 0.0
        %2268 = vmatprep.subr.mxu0 0.0
        %2269 = vmatpush1.msra.mxu0 0.0
        %2270 = vmatprep.subr.mxu0 0.0
        %2271 = vmatpush1.msra.mxu0 0.0
        %2272 = vmatprep.subr.mxu0 0.0
        %2273 = vmatpush1.msra.mxu0 0.0
        %2274 = vmatprep.subr.mxu0 0.0
        %2275 = vmatpush1.msra.mxu0 0.0
        %2276 = vmatprep.subr.mxu0 0.0
        %2277 = vmatpush1.msra.mxu0 0.0
        %2278 = vmatprep.subr.mxu0 0.0
        %2279 = vmatpush1.msra.mxu0 0.0
        %2280 = vmatprep.subr.mxu0 0.0
        %2281 = vmatpush1.msra.mxu0 0.0
        %2282 = vmatprep.subr.mxu0 0.0
        %2283 = vmatpush1.msra.mxu0 0.0
        %2284 = vmatprep.subr.mxu0 0.0
        %2285 = vmatpush1.msra.mxu0 0.0
        %2286 = vmatprep.subr.mxu0 0.0
        %2287 = vmatpush1.msra.mxu0 0.0
        %2288 = vmatprep.subr.mxu0 0.0
        %2289 = vmatpush1.msra.mxu0 %v2256
        %2290 = vmatprep.subr.mxu0 0.0
        %2291 = vmatpush2.msra.mxu0 0.0
        %2292 = vmatprep.subr.mxu0 0.0
        %2293 = vmatpush2.msra.mxu0 0.0
        %2294 = vmatprep.subr.mxu0 0.0
        %2295 = vmatpush2.msra.mxu0 0.0
        %2296 = vmatprep.subr.mxu0 0.0
        %2297 = vmatpush2.msra.mxu0 0.0
        %2298 = vmatprep.subr.mxu0 0.0
        %2299 = vmatpush2.msra.mxu0 0.0
        %2300 = vmatprep.subr.mxu0 0.0
        %2301 = vmatpush2.msra.mxu0 0.0
        %2302 = vmatprep.subr.mxu0 0.0
        %2303 = vmatpush2.msra.mxu0 0.0
        %2304 = vmatprep.subr.mxu0 0.0
        %2305 = vmatpush2.msra.mxu0 0.0
        %2306 = vmatprep.subr.mxu0 0.0
        %2307 = vmatpush2.msra.mxu0 0.0
        %2308 = vmatprep.subr.mxu0 0.0
        %2309 = vmatpush2.msra.mxu0 0.0
        %2310 = vmatprep.subr.mxu0 0.0
        %2311 = vmatpush2.msra.mxu0 0.0
        %2312 = vmatprep.subr.mxu0 0.0
        %2313 = vmatpush2.msra.mxu0 0.0
        %2314 = vmatprep.subr.mxu0 0.0
        %2315 = vmatpush2.msra.mxu0 0.0
        %2316 = vmatprep.subr.mxu0 0.0
        %2317 = vmatpush2.msra.mxu0 0.0
        %2318 = vmatprep.subr.mxu0 0.0
        %2319 = vmatpush2.msra.mxu0 0.0
        %2320 = vmatprep.subr.mxu0 0.0
        %2321 = vmatpush2.msra.mxu0 0.0
        %2322 = vmatprep.mubr.f32.mxu0 0.0
        %2323 = vmatmul.mubr.f32.gmra.mxu0 %v2254
        %v2324 = vpop.f32.mrf.mxu0
        %v2325 = vadd.f32 0.0, %v2324
        %v2326 = vpop.f32.mrf.mxu0
        %2327 = vdwg.mxu0
        %2328 = vrot.lane.b32.xlu0 %v1898, 64
        %v2329 = vpop.permute.xlu0 %2328
        %v2331 = vsel %vm1158, %v2248, 0
        %v2333 = vsel %vm1162, %v2329, 0
        %2335 = vmatprep.subr.mxu0 0.0
        %2336 = vmatpush1.msra.mxu0 0.0
        %2337 = vmatprep.subr.mxu0 0.0
        %2338 = vmatpush1.msra.mxu0 0.0
        %2339 = vmatprep.subr.mxu0 0.0
        %2340 = vmatpush1.msra.mxu0 0.0
        %2341 = vmatprep.subr.mxu0 0.0
        %2342 = vmatpush1.msra.mxu0 0.0
        %2343 = vmatprep.subr.mxu0 0.0
        %2344 = vmatpush1.msra.mxu0 0.0
        %2345 = vmatprep.subr.mxu0 0.0
        %2346 = vmatpush1.msra.mxu0 0.0
        %2347 = vmatprep.subr.mxu0 0.0
        %2348 = vmatpush1.msra.mxu0 0.0
        %2349 = vmatprep.subr.mxu0 0.0
        %2350 = vmatpush1.msra.mxu0 0.0
        %2351 = vmatprep.subr.mxu0 0.0
        %2352 = vmatpush1.msra.mxu0 0.0
        %2353 = vmatprep.subr.mxu0 0.0
        %2354 = vmatpush1.msra.mxu0 0.0
        %2355 = vmatprep.subr.mxu0 0.0
        %2356 = vmatpush1.msra.mxu0 0.0
        %2357 = vmatprep.subr.mxu0 0.0
        %2358 = vmatpush1.msra.mxu0 0.0
        %2359 = vmatprep.subr.mxu0 0.0
        %2360 = vmatpush1.msra.mxu0 0.0
        %2361 = vmatprep.subr.mxu0 0.0
        %2362 = vmatpush1.msra.mxu0 0.0
        %2363 = vmatprep.subr.mxu0 0.0
        %2364 = vmatpush1.msra.mxu0 0.0
        %2365 = vmatprep.subr.mxu0 0.0
        %2366 = vmatpush1.msra.mxu0 %v2333
        %2367 = vmatprep.subr.mxu0 0.0
        %2368 = vmatpush2.msra.mxu0 0.0
        %2369 = vmatprep.subr.mxu0 0.0
        %2370 = vmatpush2.msra.mxu0 0.0
        %2371 = vmatprep.subr.mxu0 0.0
        %2372 = vmatpush2.msra.mxu0 0.0
        %2373 = vmatprep.subr.mxu0 0.0
        %2374 = vmatpush2.msra.mxu0 0.0
        %2375 = vmatprep.subr.mxu0 0.0
        %2376 = vmatpush2.msra.mxu0 0.0
        %2377 = vmatprep.subr.mxu0 0.0
        %2378 = vmatpush2.msra.mxu0 0.0
        %2379 = vmatprep.subr.mxu0 0.0
        %2380 = vmatpush2.msra.mxu0 0.0
        %2381 = vmatprep.subr.mxu0 0.0
        %2382 = vmatpush2.msra.mxu0 0.0
        %2383 = vmatprep.subr.mxu0 0.0
        %2384 = vmatpush2.msra.mxu0 0.0
        %2385 = vmatprep.subr.mxu0 0.0
        %2386 = vmatpush2.msra.mxu0 0.0
        %2387 = vmatprep.subr.mxu0 0.0
        %2388 = vmatpush2.msra.mxu0 0.0
        %2389 = vmatprep.subr.mxu0 0.0
        %2390 = vmatpush2.msra.mxu0 0.0
        %2391 = vmatprep.subr.mxu0 0.0
        %2392 = vmatpush2.msra.mxu0 0.0
        %2393 = vmatprep.subr.mxu0 0.0
        %2394 = vmatpush2.msra.mxu0 0.0
        %2395 = vmatprep.subr.mxu0 0.0
        %2396 = vmatpush2.msra.mxu0 0.0
        %2397 = vmatprep.subr.mxu0 0.0
        %2398 = vmatpush2.msra.mxu0 0.0
        %2399 = vmatprep.mubr.f32.mxu0 0.0
        %2400 = vmatmul.mubr.f32.gmra.mxu0 %v2331
        %v2401 = vpop.f32.mrf.mxu0
        %v2402 = vadd.f32 0.0, %v2401
        %v2403 = vpop.f32.mrf.mxu0
        %2404 = vdwg.mxu0
        %2405 = vrot.lane.b32.xlu0 %v1900, 64
        %v2406 = vpop.permute.xlu0 %2405
        %v2408 = vsel %vm1158, %v2249, 0
        %v2410 = vsel %vm1162, %v2406, 0
        %2412 = vmatprep.subr.mxu0 0.0
        %2413 = vmatpush1.msra.mxu0 0.0
        %2414 = vmatprep.subr.mxu0 0.0
        %2415 = vmatpush1.msra.mxu0 0.0
        %2416 = vmatprep.subr.mxu0 0.0
        %2417 = vmatpush1.msra.mxu0 0.0
        %2418 = vmatprep.subr.mxu0 0.0
        %2419 = vmatpush1.msra.mxu0 0.0
        %2420 = vmatprep.subr.mxu0 0.0
        %2421 = vmatpush1.msra.mxu0 0.0
        %2422 = vmatprep.subr.mxu0 0.0
        %2423 = vmatpush1.msra.mxu0 0.0
        %2424 = vmatprep.subr.mxu0 0.0
        %2425 = vmatpush1.msra.mxu0 0.0
        %2426 = vmatprep.subr.mxu0 0.0
        %2427 = vmatpush1.msra.mxu0 0.0
        %2428 = vmatprep.subr.mxu0 0.0
        %2429 = vmatpush1.msra.mxu0 0.0
        %2430 = vmatprep.subr.mxu0 0.0
        %2431 = vmatpush1.msra.mxu0 0.0
        %2432 = vmatprep.subr.mxu0 0.0
        %2433 = vmatpush1.msra.mxu0 0.0
        %2434 = vmatprep.subr.mxu0 0.0
        %2435 = vmatpush1.msra.mxu0 0.0
        %2436 = vmatprep.subr.mxu0 0.0
        %2437 = vmatpush1.msra.mxu0 0.0
        %2438 = vmatprep.subr.mxu0 0.0
        %2439 = vmatpush1.msra.mxu0 0.0
        %2440 = vmatprep.subr.mxu0 0.0
        %2441 = vmatpush1.msra.mxu0 0.0
        %2442 = vmatprep.subr.mxu0 0.0
        %2443 = vmatpush1.msra.mxu0 %v2410
        %2444 = vmatprep.subr.mxu0 0.0
        %2445 = vmatpush2.msra.mxu0 0.0
        %2446 = vmatprep.subr.mxu0 0.0
        %2447 = vmatpush2.msra.mxu0 0.0
        %2448 = vmatprep.subr.mxu0 0.0
        %2449 = vmatpush2.msra.mxu0 0.0
        %2450 = vmatprep.subr.mxu0 0.0
        %2451 = vmatpush2.msra.mxu0 0.0
        %2452 = vmatprep.subr.mxu0 0.0
        %2453 = vmatpush2.msra.mxu0 0.0
        %2454 = vmatprep.subr.mxu0 0.0
        %2455 = vmatpush2.msra.mxu0 0.0
        %2456 = vmatprep.subr.mxu0 0.0
        %2457 = vmatpush2.msra.mxu0 0.0
        %2458 = vmatprep.subr.mxu0 0.0
        %2459 = vmatpush2.msra.mxu0 0.0
        %2460 = vmatprep.subr.mxu0 0.0
        %2461 = vmatpush2.msra.mxu0 0.0
        %2462 = vmatprep.subr.mxu0 0.0
        %2463 = vmatpush2.msra.mxu0 0.0
        %2464 = vmatprep.subr.mxu0 0.0
        %2465 = vmatpush2.msra.mxu0 0.0
        %2466 = vmatprep.subr.mxu0 0.0
        %2467 = vmatpush2.msra.mxu0 0.0
        %2468 = vmatprep.subr.mxu0 0.0
        %2469 = vmatpush2.msra.mxu0 0.0
        %2470 = vmatprep.subr.mxu0 0.0
        %2471 = vmatpush2.msra.mxu0 0.0
        %2472 = vmatprep.subr.mxu0 0.0
        %2473 = vmatpush2.msra.mxu0 0.0
        %2474 = vmatprep.subr.mxu0 0.0
        %2475 = vmatpush2.msra.mxu0 0.0
        %2476 = vmatprep.mubr.f32.mxu0 0.0
        %2477 = vmatmul.mubr.f32.gmra.mxu0 %v2408
        %v2478 = vpop.f32.mrf.mxu0
        %v2479 = vadd.f32 0.0, %v2478
        %v2480 = vpop.f32.mrf.mxu0
        %2481 = vdwg.mxu0
        %2482 = vrot.lane.b32.xlu0 %v1902, 64
        %v2483 = vpop.permute.xlu0 %2482
        %v2485 = vsel %vm1158, %v2250, 0
        %v2487 = vsel %vm1162, %v2483, 0
        %2489 = vmatprep.subr.mxu0 0.0
        %2490 = vmatpush1.msra.mxu0 0.0
        %2491 = vmatprep.subr.mxu0 0.0
        %2492 = vmatpush1.msra.mxu0 0.0
        %2493 = vmatprep.subr.mxu0 0.0
        %2494 = vmatpush1.msra.mxu0 0.0
        %2495 = vmatprep.subr.mxu0 0.0
        %2496 = vmatpush1.msra.mxu0 0.0
        %2497 = vmatprep.subr.mxu0 0.0
        %2498 = vmatpush1.msra.mxu0 0.0
        %2499 = vmatprep.subr.mxu0 0.0
        %2500 = vmatpush1.msra.mxu0 0.0
        %2501 = vmatprep.subr.mxu0 0.0
        %2502 = vmatpush1.msra.mxu0 0.0
        %2503 = vmatprep.subr.mxu0 0.0
        %2504 = vmatpush1.msra.mxu0 0.0
        %2505 = vmatprep.subr.mxu0 0.0
        %2506 = vmatpush1.msra.mxu0 0.0
        %2507 = vmatprep.subr.mxu0 0.0
        %2508 = vmatpush1.msra.mxu0 0.0
        %2509 = vmatprep.subr.mxu0 0.0
        %2510 = vmatpush1.msra.mxu0 0.0
        %2511 = vmatprep.subr.mxu0 0.0
        %2512 = vmatpush1.msra.mxu0 0.0
        %2513 = vmatprep.subr.mxu0 0.0
        %2514 = vmatpush1.msra.mxu0 0.0
        %2515 = vmatprep.subr.mxu0 0.0
        %2516 = vmatpush1.msra.mxu0 0.0
        %2517 = vmatprep.subr.mxu0 0.0
        %2518 = vmatpush1.msra.mxu0 0.0
        %2519 = vmatprep.subr.mxu0 0.0
        %2520 = vmatpush1.msra.mxu0 %v2487
        %2521 = vmatprep.subr.mxu0 0.0
        %2522 = vmatpush2.msra.mxu0 0.0
        %2523 = vmatprep.subr.mxu0 0.0
        %2524 = vmatpush2.msra.mxu0 0.0
        %2525 = vmatprep.subr.mxu0 0.0
        %2526 = vmatpush2.msra.mxu0 0.0
        %2527 = vmatprep.subr.mxu0 0.0
        %2528 = vmatpush2.msra.mxu0 0.0
        %2529 = vmatprep.subr.mxu0 0.0
        %2530 = vmatpush2.msra.mxu0 0.0
        %2531 = vmatprep.subr.mxu0 0.0
        %2532 = vmatpush2.msra.mxu0 0.0
        %2533 = vmatprep.subr.mxu0 0.0
        %2534 = vmatpush2.msra.mxu0 0.0
        %2535 = vmatprep.subr.mxu0 0.0
        %2536 = vmatpush2.msra.mxu0 0.0
        %2537 = vmatprep.subr.mxu0 0.0
        %2538 = vmatpush2.msra.mxu0 0.0
        %2539 = vmatprep.subr.mxu0 0.0
        %2540 = vmatpush2.msra.mxu0 0.0
        %2541 = vmatprep.subr.mxu0 0.0
        %2542 = vmatpush2.msra.mxu0 0.0
        %2543 = vmatprep.subr.mxu0 0.0
        %2544 = vmatpush2.msra.mxu0 0.0
        %2545 = vmatprep.subr.mxu0 0.0
        %2546 = vmatpush2.msra.mxu0 0.0
        %2547 = vmatprep.subr.mxu0 0.0
        %2548 = vmatpush2.msra.mxu0 0.0
        %2549 = vmatprep.subr.mxu0 0.0
        %2550 = vmatpush2.msra.mxu0 0.0
        %2551 = vmatprep.subr.mxu0 0.0
        %2552 = vmatpush2.msra.mxu0 0.0
        %2553 = vmatprep.mubr.f32.mxu0 0.0
        %2554 = vmatmul.mubr.f32.gmra.mxu0 %v2485
        %v2555 = vpop.f32.mrf.mxu0
        %v2556 = vadd.f32 0.0, %v2555
        %v2557 = vpop.f32.mrf.mxu0
        %2558 = vdwg.mxu0
        %2560 = vrot.lane.b32.xlu0 %v2402, 8
        %v2561 = vpop.permute.xlu0 %2560
        %2564 = vrot.lane.b32.xlu0 %v2479, 16
        %v2565 = vpop.permute.xlu0 %2564
        %2568 = vrot.lane.b32.xlu0 %v2556, 24
        %v2569 = vpop.permute.xlu0 %2568
        %v2571 = vsel %vm808, %v2325, %v2561
        %v2572 = vsel %vm1479, %v2571, %v2565
        %v2573 = vsel %vm1481, %v2572, %v2569
        %s2574 = scalar_lea.vmem %s8, 32
        %v2575 = vld [vmem:[%s2574] sm:$0xff]
        %v2576 = vld [vmem:[%s2574 + $0x8] sm:$0xff]
        %v2577 = vld [vmem:[%s2574 + $0x10] sm:$0xff]
        %v2578 = vld [vmem:[%s2574 + $0x18] sm:$0xff]
        %s2579 = scalar_lea.vmem %s9, 1
        %v2580 = vld [vmem:[%s2579] sm:$0x1]
        %v2582 = vlaneseq
        %v2583 = vshrl.u32 %v2582, 7
        %v2584 = vsub.s32 0, %v2583
        %v2585 = vrot.slane %v2580, %v2584
        %v2588 = vsel %vm725, %v2573, 0
        %2590 = vmatprep.subr.mxu0 0.0
        %2591 = vmatpush1.msra.mxu0 0.0
        %2592 = vmatprep.subr.mxu0 0.0
        %2593 = vmatpush1.msra.mxu0 0.0
        %2594 = vmatprep.subr.mxu0 0.0
        %2595 = vmatpush1.msra.mxu0 0.0
        %2596 = vmatprep.subr.mxu0 0.0
        %2597 = vmatpush1.msra.mxu0 0.0
        %2598 = vmatprep.subr.mxu0 0.0
        %2599 = vmatpush1.msra.mxu0 0.0
        %2600 = vmatprep.subr.mxu0 0.0
        %2601 = vmatpush1.msra.mxu0 0.0
        %2602 = vmatprep.subr.mxu0 0.0
        %2603 = vmatpush1.msra.mxu0 0.0
        %2604 = vmatprep.subr.mxu0 0.0
        %2605 = vmatpush1.msra.mxu0 0.0
        %2606 = vmatprep.subr.mxu0 0.0
        %2607 = vmatpush1.msra.mxu0 0.0
        %2608 = vmatprep.subr.mxu0 0.0
        %2609 = vmatpush1.msra.mxu0 0.0
        %2610 = vmatprep.subr.mxu0 0.0
        %2611 = vmatpush1.msra.mxu0 0.0
        %2612 = vmatprep.subr.mxu0 0.0
        %2613 = vmatpush1.msra.mxu0 0.0
        %2614 = vmatprep.subr.mxu0 0.0
        %2615 = vmatpush1.msra.mxu0 %v2578
        %2616 = vmatprep.subr.mxu0 0.0
        %2617 = vmatpush1.msra.mxu0 %v2577
        %2618 = vmatprep.subr.mxu0 0.0
        %2619 = vmatpush1.msra.mxu0 %v2576
        %2620 = vmatprep.subr.mxu0 0.0
        %2621 = vmatpush1.msra.mxu0 %v2575
        %2622 = vmatprep.subr.mxu0 0.0
        %2623 = vmatpush2.msra.mxu0 0.0
        %2624 = vmatprep.subr.mxu0 0.0
        %2625 = vmatpush2.msra.mxu0 0.0
        %2626 = vmatprep.subr.mxu0 0.0
        %2627 = vmatpush2.msra.mxu0 0.0
        %2628 = vmatprep.subr.mxu0 0.0
        %2629 = vmatpush2.msra.mxu0 0.0
        %2630 = vmatprep.subr.mxu0 0.0
        %2631 = vmatpush2.msra.mxu0 0.0
        %2632 = vmatprep.subr.mxu0 0.0
        %2633 = vmatpush2.msra.mxu0 0.0
        %2634 = vmatprep.subr.mxu0 0.0
        %2635 = vmatpush2.msra.mxu0 0.0
        %2636 = vmatprep.subr.mxu0 0.0
        %2637 = vmatpush2.msra.mxu0 0.0
        %2638 = vmatprep.subr.mxu0 0.0
        %2639 = vmatpush2.msra.mxu0 0.0
        %2640 = vmatprep.subr.mxu0 0.0
        %2641 = vmatpush2.msra.mxu0 0.0
        %2642 = vmatprep.subr.mxu0 0.0
        %2643 = vmatpush2.msra.mxu0 0.0
        %2644 = vmatprep.subr.mxu0 0.0
        %2645 = vmatpush2.msra.mxu0 0.0
        %2646 = vmatprep.subr.mxu0 0.0
        %2647 = vmatpush2.msra.mxu0 0.0
        %2648 = vmatprep.subr.mxu0 0.0
        %2649 = vmatpush2.msra.mxu0 0.0
        %2650 = vmatprep.subr.mxu0 0.0
        %2651 = vmatpush2.msra.mxu0 0.0
        %2652 = vmatprep.subr.mxu0 0.0
        %2653 = vmatpush2.msra.mxu0 0.0
        %2654 = vmatprep.mubr.f32.mxu0 0.0
        %2655 = vmatmul.mubr.f32.gmra.mxu0 %v2588
        %v2656 = vpop.f32.mrf.mxu0
        %v2657 = vadd.f32 %v2585, %v2656
        %v2658 = vpop.f32.mrf.mxu0
        %2659 = vdwg.mxu0
        %v2660 = vadd.f32 %v1778, %v2657
        %s2661 = scalar_lea.vmem %s10, 1
        %v2662 = vld [vmem:[%s2661] sm:$0x1]
        %s2663 = scalar_lea.vmem %s11, 1
        %v2664 = vld [vmem:[%s2663] sm:$0x1]
        %v2665 = vsel %vm685, %v2660, 0.0
        %2666 = vadd.xlane.f32.xlu0 %v2665
        %v2667 = vpop.xlane.xlu0 %2666
        %v2668 = vmul.f32 %v2667, %v689
        %v2669 = vsub.f32 %v2660, %v2668
        %v2670 = vmul.f32 %v2669, %v2669
        %v2671 = vsel %vm685, %v2670, 0.0
        %2672 = vadd.xlane.f32.xlu0 %v2671
        %v2673 = vpop.xlane.xlu0 %2672
        %v2674 = vmul.f32 %v2673, %v689
        %v2675 = vadd.f32 %v2674, 1e-06
        %v2676 = vrsqrt.pop %v2675
        %v2677 = vmul.f32 %v2669, %v2676
        %v2679 = vlaneseq
        %v2680 = vshrl.u32 %v2679, 7
        %v2681 = vsub.s32 0, %v2680
        %v2682 = vrot.slane %v2662, %v2681
        %v2684 = vmul.f32 %v2677, %v2682
        %v2686 = vlaneseq
        %v2687 = vshrl.u32 %v2686, 7
        %v2688 = vsub.s32 0, %v2687
        %v2689 = vrot.slane %v2664, %v2688
        %v2691 = vadd.f32 %v2684, %v2689
        %s2692 = scalar_lea.vmem %s12, 32
        %v2693 = vld [vmem:[%s2692] sm:$0xff]
        %v2694 = vld [vmem:[%s2692 + $0x8] sm:$0xff]
        %v2695 = vld [vmem:[%s2692 + $0x10] sm:$0xff]
        %v2696 = vld [vmem:[%s2692 + $0x18] sm:$0xff]
        %s2697 = scalar_lea.vmem %s13, 1
        %v2698 = vld [vmem:[%s2697] sm:$0x1]
        %v2700 = vlaneseq
        %v2701 = vshrl.u32 %v2700, 7
        %v2702 = vsub.s32 0, %v2701
        %v2703 = vrot.slane %v2698, %v2702
        %v2706 = vsel %vm725, %v2691, 0
        %2708 = vmatprep.subr.mxu0 0.0
        %2709 = vmatpush1.msra.mxu0 0.0
        %2710 = vmatprep.subr.mxu0 0.0
        %2711 = vmatpush1.msra.mxu0 0.0
        %2712 = vmatprep.subr.mxu0 0.0
        %2713 = vmatpush1.msra.mxu0 0.0
        %2714 = vmatprep.subr.mxu0 0.0
        %2715 = vmatpush1.msra.mxu0 0.0
        %2716 = vmatprep.subr.mxu0 0.0
        %2717 = vmatpush1.msra.mxu0 0.0
        %2718 = vmatprep.subr.mxu0 0.0
        %2719 = vmatpush1.msra.mxu0 0.0
        %2720 = vmatprep.subr.mxu0 0.0
        %2721 = vmatpush1.msra.mxu0 0.0
        %2722 = vmatprep.subr.mxu0 0.0
        %2723 = vmatpush1.msra.mxu0 0.0
        %2724 = vmatprep.subr.mxu0 0.0
        %2725 = vmatpush1.msra.mxu0 0.0
        %2726 = vmatprep.subr.mxu0 0.0
        %2727 = vmatpush1.msra.mxu0 0.0
        %2728 = vmatprep.subr.mxu0 0.0
        %2729 = vmatpush1.msra.mxu0 0.0
        %2730 = vmatprep.subr.mxu0 0.0
        %2731 = vmatpush1.msra.mxu0 0.0
        %2732 = vmatprep.subr.mxu0 0.0
        %2733 = vmatpush1.msra.mxu0 %v2696
        %2734 = vmatprep.subr.mxu0 0.0
        %2735 = vmatpush1.msra.mxu0 %v2695
        %2736 = vmatprep.subr.mxu0 0.0
        %2737 = vmatpush1.msra.mxu0 %v2694
        %2738 = vmatprep.subr.mxu0 0.0
        %2739 = vmatpush1.msra.mxu0 %v2693
        %2740 = vmatprep.subr.mxu0 0.0
        %2741 = vmatpush2.msra.mxu0 0.0
        %2742 = vmatprep.subr.mxu0 0.0
        %2743 = vmatpush2.msra.mxu0 0.0
        %2744 = vmatprep.subr.mxu0 0.0
        %2745 = vmatpush2.msra.mxu0 0.0
        %2746 = vmatprep.subr.mxu0 0.0
        %2747 = vmatpush2.msra.mxu0 0.0
        %2748 = vmatprep.subr.mxu0 0.0
        %2749 = vmatpush2.msra.mxu0 0.0
        %2750 = vmatprep.subr.mxu0 0.0
        %2751 = vmatpush2.msra.mxu0 0.0
        %2752 = vmatprep.subr.mxu0 0.0
        %2753 = vmatpush2.msra.mxu0 0.0
        %2754 = vmatprep.subr.mxu0 0.0
        %2755 = vmatpush2.msra.mxu0 0.0
        %2756 = vmatprep.subr.mxu0 0.0
        %2757 = vmatpush2.msra.mxu0 0.0
        %2758 = vmatprep.subr.mxu0 0.0
        %2759 = vmatpush2.msra.mxu0 0.0
        %2760 = vmatprep.subr.mxu0 0.0
        %2761 = vmatpush2.msra.mxu0 0.0
        %2762 = vmatprep.subr.mxu0 0.0
        %2763 = vmatpush2.msra.mxu0 0.0
        %2764 = vmatprep.subr.mxu0 0.0
        %2765 = vmatpush2.msra.mxu0 0.0
        %2766 = vmatprep.subr.mxu0 0.0
        %2767 = vmatpush2.msra.mxu0 0.0
        %2768 = vmatprep.subr.mxu0 0.0
        %2769 = vmatpush2.msra.mxu0 0.0
        %2770 = vmatprep.subr.mxu0 0.0
        %2771 = vmatpush2.msra.mxu0 0.0
        %2772 = vmatprep.mubr.f32.mxu0 0.0
        %2773 = vmatmul.mubr.f32.gmra.mxu0 %v2706
        %v2774 = vpop.f32.mrf.mxu0
        %v2775 = vadd.f32 %v2703, %v2774
        %v2776 = vpop.f32.mrf.mxu0
        %2777 = vdwg.mxu0
        %v2778 = vmul.f32 %v2775, %v2775
        %v2779 = vmul.f32 %v2775, %v2778
        %v2780 = vmul.f32 %v2779, 0.044715
        %v2781 = vadd.f32 %v2775, %v2780
        %v2782 = vmul.f32 %v2781, 0.7978846
        %v2783 = vtanh.pop %v2782
        %v2784 = vadd.f32 %v2783, 1.0
        %v2785 = vmul.f32 %v2784, 0.5
        %v2786 = vmul.f32 %v2775, %v2785
        %s2787 = scalar_lea.vmem %s14, 64
        %v2788 = vld [vmem:[%s2787] sm:$0xff]
        %v2789 = vld [vmem:[%s2787 + $0x8] sm:$0xff]
        %v2790 = vld [vmem:[%s2787 + $0x10] sm:$0xff]
        %v2791 = vld [vmem:[%s2787 + $0x18] sm:$0xff]
        %v2792 = vld [vmem:[%s2787 + $0x20] sm:$0xff]
        %v2793 = vld [vmem:[%s2787 + $0x28] sm:$0xff]
        %v2794 = vld [vmem:[%s2787 + $0x30] sm:$0xff]
        %v2795 = vld [vmem:[%s2787 + $0x38] sm:$0xff]
        %s2796 = scalar_lea.vmem %s15, 1
        %v2797 = vld [vmem:[%s2796] sm:$0x1]
        %v2799 = vlaneseq
        %v2800 = vshrl.u32 %v2799, 7
        %v2801 = vsub.s32 0, %v2800
        %v2802 = vrot.slane %v2797, %v2801
        %v2805 = vsel %vm608, %v2786, 0
        %2807 = vmatprep.subr.mxu0 0.0
        %2808 = vmatpush1.msra.mxu0 0.0
        %2809 = vmatprep.subr.mxu0 0.0
        %2810 = vmatpush1.msra.mxu0 0.0
        %2811 = vmatprep.subr.mxu0 0.0
        %2812 = vmatpush1.msra.mxu0 0.0
        %2813 = vmatprep.subr.mxu0 0.0
        %2814 = vmatpush1.msra.mxu0 0.0
        %2815 = vmatprep.subr.mxu0 0.0
        %2816 = vmatpush1.msra.mxu0 0.0
        %2817 = vmatprep.subr.mxu0 0.0
        %2818 = vmatpush1.msra.mxu0 0.0
        %2819 = vmatprep.subr.mxu0 0.0
        %2820 = vmatpush1.msra.mxu0 0.0
        %2821 = vmatprep.subr.mxu0 0.0
        %2822 = vmatpush1.msra.mxu0 0.0
        %2823 = vmatprep.subr.mxu0 0.0
        %2824 = vmatpush1.msra.mxu0 %v2795
        %2825 = vmatprep.subr.mxu0 0.0
        %2826 = vmatpush1.msra.mxu0 %v2794
        %2827 = vmatprep.subr.mxu0 0.0
        %2828 = vmatpush1.msra.mxu0 %v2793
        %2829 = vmatprep.subr.mxu0 0.0
        %2830 = vmatpush1.msra.mxu0 %v2792
        %2831 = vmatprep.subr.mxu0 0.0
        %2832 = vmatpush1.msra.mxu0 %v2791
        %2833 = vmatprep.subr.mxu0 0.0
        %2834 = vmatpush1.msra.mxu0 %v2790
        %2835 = vmatprep.subr.mxu0 0.0
        %2836 = vmatpush1.msra.mxu0 %v2789
        %2837 = vmatprep.subr.mxu0 0.0
        %2838 = vmatpush1.msra.mxu0 %v2788
        %2839 = vmatprep.subr.mxu0 0.0
        %2840 = vmatpush2.msra.mxu0 0.0
        %2841 = vmatprep.subr.mxu0 0.0
        %2842 = vmatpush2.msra.mxu0 0.0
        %2843 = vmatprep.subr.mxu0 0.0
        %2844 = vmatpush2.msra.mxu0 0.0
        %2845 = vmatprep.subr.mxu0 0.0
        %2846 = vmatpush2.msra.mxu0 0.0
        %2847 = vmatprep.subr.mxu0 0.0
        %2848 = vmatpush2.msra.mxu0 0.0
        %2849 = vmatprep.subr.mxu0 0.0
        %2850 = vmatpush2.msra.mxu0 0.0
        %2851 = vmatprep.subr.mxu0 0.0
        %2852 = vmatpush2.msra.mxu0 0.0
        %2853 = vmatprep.subr.mxu0 0.0
        %2854 = vmatpush2.msra.mxu0 0.0
        %2855 = vmatprep.subr.mxu0 0.0
        %2856 = vmatpush2.msra.mxu0 0.0
        %2857 = vmatprep.subr.mxu0 0.0
        %2858 = vmatpush2.msra.mxu0 0.0
        %2859 = vmatprep.subr.mxu0 0.0
        %2860 = vmatpush2.msra.mxu0 0.0
        %2861 = vmatprep.subr.mxu0 0.0
        %2862 = vmatpush2.msra.mxu0 0.0
        %2863 = vmatprep.subr.mxu0 0.0
        %2864 = vmatpush2.msra.mxu0 0.0
        %2865 = vmatprep.subr.mxu0 0.0
        %2866 = vmatpush2.msra.mxu0 0.0
        %2867 = vmatprep.subr.mxu0 0.0
        %2868 = vmatpush2.msra.mxu0 0.0
        %2869 = vmatprep.subr.mxu0 0.0
        %2870 = vmatpush2.msra.mxu0 0.0
        %2871 = vmatprep.mubr.f32.mxu0 0.0
        %2872 = vmatmul.mubr.f32.gmra.mxu0 %v2805
        %v2873 = vpop.f32.mrf.mxu0
        %v2874 = vadd.f32 %v2802, %v2873
        %v2875 = vpop.f32.mrf.mxu0
        %2876 = vdwg.mxu0
        %v2877 = vadd.f32 %v2660, %v2874
        %v2878 = vld [vmem:[%s16] sm:$0x1]
        %v2879 = vld [vmem:[%s17] sm:$0x1]
        %v2880 = vsel %vm685, %v2877, 0.0
        %2881 = vadd.xlane.f32.xlu0 %v2880
        %v2882 = vpop.xlane.xlu0 %2881
        %v2883 = vmul.f32 %v2882, %v689
        %v2884 = vsub.f32 %v2877, %v2883
        %v2885 = vmul.f32 %v2884, %v2884
        %v2886 = vsel %vm685, %v2885, 0.0
        %2887 = vadd.xlane.f32.xlu0 %v2886
        %v2888 = vpop.xlane.xlu0 %2887
        %v2889 = vmul.f32 %v2888, %v689
        %v2890 = vadd.f32 %v2889, 1e-06
        %v2891 = vrsqrt.pop %v2890
        %v2892 = vmul.f32 %v2884, %v2891
        %v2894 = vlaneseq
        %v2895 = vshrl.u32 %v2894, 7
        %v2896 = vsub.s32 0, %v2895
        %v2897 = vrot.slane %v2878, %v2896
        %v2899 = vmul.f32 %v2892, %v2897
        %v2901 = vlaneseq
        %v2902 = vshrl.u32 %v2901, 7
        %v2903 = vsub.s32 0, %v2902
        %v2904 = vrot.slane %v2879, %v2903
        %v2906 = vadd.f32 %v2899, %v2904
        %2907 = vst.msk [vmem:[%s568] sm:$0xf] %vm685, %v2906
        %s2908 = sand.u32 %s423, 1
        %s2909 = scalar_lea.sflag [#allocation3], %s2908
        %s2910 = sand.u32 %s423, 1
        %s2911 = smul.addr %s2910, 4
        %s2912 = scalar_lea.vmem [#allocation2], %s2911
        // Predicated region
        $region93: #{tpu_custom_call.1} parent=91 // pred_check
          %p2913 = pneg %p433
        $region94: #{tpu_custom_call.1} parent=91 // pred_check_branch
          %2915 = sbr.rel (%p2913) target = $region96
        $region95: #{tpu_custom_call.1} parent=91 // pred_region
          %s2917 = ssub.s32 64, 64
          %2918 = vsyncadd %s2909, %s2917
          %s2919 = smul.addr %s32, 64
          %s2920 = scalar_lea.hbm %s18, %s2919
          %s2922 = sshll.u32 %s2912, 4
          %s2923 = int_to_ptr.vmem [resolvable:$true] %s2922
          %2925 = dma.vmem_to_hbm [thread:$0]  %s2923, 64, %s2920, %s2909
        $region96: #{tpu_custom_call.1} parent=91 // pred_fallthru
          _
      $region92: #{tpu_custom_call.1} parent=5 // pred_fallthru
        _
      %p2926 = scmp.le.s32.totalorder 2, %s27
      // Predicated region
      $region97: #{tpu_custom_call.1} parent=5 // pred_check
        %p2927 = pneg %p2926
      $region98: #{tpu_custom_call.1} parent=5 // pred_check_branch
        %2929 = sbr.rel (%p2927) target = $region100
      $region99: #{tpu_custom_call.1} parent=5 // pred_region
        %s2930 = ssub.s32 %s27, 2
        // Predicated region
        $region101: #{tpu_custom_call.1} parent=99 // pred_check
          %p2931 = pneg %p439
        $region102: #{tpu_custom_call.1} parent=99 // pred_check_branch
          %2933 = sbr.rel (%p2931) target = $region104
        $region103: #{tpu_custom_call.1} parent=99 // pred_region
          %s2934 = sand.u32 %s424, 1
          %s2935 = scalar_lea.sflag [#allocation3], %s2934
          %s2936 = sand.u32 %s424, 1
          %s2937 = smul.addr %s2936, 4
          %s2938 = scalar_lea.vmem [#allocation2], %s2937
          %2939 = dma.done %s2935, 64
        $region104: #{tpu_custom_call.1} parent=99 // pred_fallthru
          _
      $region100: #{tpu_custom_call.1} parent=5 // pred_fallthru
        _
    $region6: #{tpu_custom_call.1} parent=1 // loop_footer
      %s31 = sadd.s32 1, %s27
    $region7: #{tpu_custom_call.1} parent=1 // loop_footer_branch
      %26 = sbr.rel target = $region3
    $region8: #{tpu_custom_call.1} parent=1 // loop_exit
      _
    %2940 = vsyncpa [#allocation3], 1
    %s2941 = scalar_lea.sflag [#allocation3], 1
    %2942 = vsyncpa %s2941, 1

</llo_original>
